<compile_context>
chip_gen: v7x
topology: tpu7x:2x2x1
jax: 0.10.0
libtpu: 0.0.40
codegen_flags: <defaults>
</compile_context>

<pallas_src>
from functools import partial

import jax
import jax.numpy as jnp
from jax import lax
from jax.experimental import pallas as pl
from jax.experimental.pallas import tpu as pltpu


# ---------------------------------------------------------------------------
# Hardware-derived VMEM limit (cached)
# ---------------------------------------------------------------------------
_VMEM_LIMIT = None


def _vmem_limit_bytes():
    global _VMEM_LIMIT
    if _VMEM_LIMIT is None:
        try:
            cap = int(pltpu.get_tpu_info().vmem_capacity_bytes)
            _VMEM_LIMIT = int(min(cap * 3 // 4, 100 * 1024 * 1024))
        except Exception:  # pragma: no cover - conservative fallback
            _VMEM_LIMIT = 48 * 1024 * 1024
    return _VMEM_LIMIT


# ---------------------------------------------------------------------------
# Feature probe: pipeline_mode=pl.Buffered(1) on constant-index weight blocks
# ---------------------------------------------------------------------------
_SINGLE_BUF_OK = None


def _single_buffer_ok():
    global _SINGLE_BUF_OK
    if _SINGLE_BUF_OK is None:
        try:
            def k(a_ref, w_ref, o_ref):
                o_ref[...] = a_ref[...] + w_ref[...]

            a = jnp.arange(16 * 128, dtype=jnp.float32).reshape(16, 128)
            w = jnp.ones((8, 128), jnp.float32)
            out = pl.pallas_call(
                k,
                out_shape=jax.ShapeDtypeStruct((16, 128), jnp.float32),
                grid=(2,),
                in_specs=[
                    pl.BlockSpec((8, 128), lambda i: (i, 0)),
                    pl.BlockSpec((8, 128), lambda i: (0, 0),
                                 pipeline_mode=pl.Buffered(1)),
                ],
                out_specs=pl.BlockSpec((8, 128), lambda i: (i, 0)),
            )(a, w)
            jax.block_until_ready(out)
            _SINGLE_BUF_OK = bool(jnp.allclose(out, a + 1.0))
        except Exception:
            _SINGLE_BUF_OK = False
    return _SINGLE_BUF_OK


def _resident_spec(shape):
    """BlockSpec for a weight/bias that stays resident across the grid."""
    index_map = lambda *_: (0,) * len(shape)
    if _single_buffer_ok():
        return pl.BlockSpec(shape, index_map, pipeline_mode=pl.Buffered(1))
    return pl.BlockSpec(shape, index_map)


def _pick_tile(n, pref):
    for cand in (pref, 256, 128, 64, 32, 16, 8):
        if cand <= n and n % cand == 0:
            return cand
    return n


# ---------------------------------------------------------------------------
# Kernel (a): fused QKV projection, row-tiled:  qkv = x @ Wqkv + bqkv
# ---------------------------------------------------------------------------
def _qkv_proj_kernel(x_ref, w_ref, b_ref, o_ref):
    # x already bf16 (produced by the previous layer's kernel (c)).
    acc = jnp.dot(x_ref[...], w_ref[...], preferred_element_type=jnp.float32)
    o_ref[...] = (acc + b_ref[...]).astype(o_ref.dtype)


# ---------------------------------------------------------------------------
# Kernel (b): flash attention, online softmax over KV tiles.
#   Grid = (B, H, nq, nkv).  q/k/v blocks are (t, hd) column slices taken
#   straight out of the (rows, 3C) qkv buffer; q is pre-scaled (scale folded
#   into wqkv).  Output block (tq, hd) lands directly in a (rows, C) array.
# ---------------------------------------------------------------------------
def _flash_attn_kernel(q_ref, k_ref, v_ref, o_ref, m_sc, l_sc, acc_sc):
    kv = pl.program_id(3)

    @pl.when(kv == 0)
    def _():
        m_sc[...] = jnp.full_like(m_sc, -jnp.inf)
        l_sc[...] = jnp.zeros_like(l_sc)
        acc_sc[...] = jnp.zeros_like(acc_sc)

    q = q_ref[...]                                           # (tq, hd) bf16
    k = k_ref[...]                                           # (tk, hd) bf16
    v = v_ref[...]                                           # (tk, hd) bf16

    # scores: contract head_dim of q and k (no explicit transpose needed).
    s = lax.dot_general(q, k, (((1,), (1,)), ((), ())),
                        preferred_element_type=jnp.float32)  # (tq, tk) f32

    m_prev = m_sc[...]
    m_new = jnp.maximum(m_prev, jnp.max(s, axis=-1, keepdims=True))
    alpha = jnp.exp(m_prev - m_new)
    p = jnp.exp(s - m_new)
    l_sc[...] = alpha * l_sc[...] + jnp.sum(p, axis=-1, keepdims=True)
    acc_sc[...] = alpha * acc_sc[...] + jnp.dot(
        p.astype(jnp.bfloat16), v, preferred_element_type=jnp.float32)
    m_sc[...] = m_new

    @pl.when(kv == pl.num_programs(3) - 1)
    def _():
        inv_l = pl.reciprocal(l_sc[...], approx=True)        # EUP, ~free slot
        o_ref[...] = (acc_sc[...] * inv_l).astype(o_ref.dtype)


# ---------------------------------------------------------------------------
# Kernel (c): x1 = x + attn @ Wproj + bproj ;  x2 = x1 + relu(x1@W1+b1)@W2+b2
#   Emits x2 both as f32 (residual chain) and bf16 (next layer's QKV input).
# ---------------------------------------------------------------------------
def _proj_mlp_kernel(x_ref, a_ref, wp_ref, bp_ref, w1_ref, b1_ref,
                     w2_ref, b2_ref, o32_ref, o16_ref):
    x = x_ref[...]                                           # (tm, C) f32
    a = a_ref[...]                                           # (tm, C) bf16
    x1 = x + jnp.dot(a, wp_ref[...],
                     preferred_element_type=jnp.float32) + bp_ref[...]
    h = jnp.dot(x1.astype(jnp.bfloat16), w1_ref[...],
                preferred_element_type=jnp.float32) + b1_ref[...]
    h = jnp.maximum(h, 0.0)                                  # ReLU in f32
    x2 = x1 + jnp.dot(h.astype(jnp.bfloat16), w2_ref[...],
                      preferred_element_type=jnp.float32) + b2_ref[...]
    o32_ref[...] = x2
    o16_ref[...] = x2.astype(jnp.bfloat16)
    # TODO(synk): for very large C / Hm on v7x (64 MiB VMEM), add an
    # 'arbitrary' trailing grid axis tiling the MLP hidden dim (accumulate
    # relu(x1@W1_j)@W2_j into a (tm, C) scratch, finalize on the last j).


# ---------------------------------------------------------------------------
# Per-Block wrapper: three pallas_calls, zero inter-kernel layout ops.
# ---------------------------------------------------------------------------
def block_forward(x32, x16, p, num_heads, B, N, *,
                  row_tile=256, q_tile=256, kv_tile=256):
    rows, C = x32.shape
    H = num_heads
    assert C % H == 0
    hd = C // H
    tm = min(row_tile, rows)
    tq = _pick_tile(N, q_tile)
    tk = _pick_tile(N, kv_tile)
    nq, nkv = N // tq, N // tk
    Hm = p["w1"].shape[1]
    vmem = _vmem_limit_bytes()

    # ---- (a) fused QKV projection, tiled over rows (bf16 activations) ------
    # TODO(synk): for C >= 2048 on v7x, additionally column-tile the 3C output
    # (wqkv block (C, tn)) to cap resident-weight VMEM.
    qkv = pl.pallas_call(
        _qkv_proj_kernel,
        out_shape=jax.ShapeDtypeStruct((rows, 3 * C), jnp.bfloat16),
        grid=(pl.cdiv(rows, tm),),
        in_specs=[
            pl.BlockSpec((tm, C), lambda i: (i, 0)),          # x rows (bf16)
            _resident_spec((C, 3 * C)),                       # wqkv (resident)
            _resident_spec((1, 3 * C)),                       # bqkv
        ],
        out_specs=pl.BlockSpec((tm, 3 * C), lambda i: (i, 0)),
        compiler_params=pltpu.CompilerParams(
            dimension_semantics=("parallel",),
            vmem_limit_bytes=vmem),
    )(x16, p["wqkv"], p["bqkv"])

    # ---- (b) flash attention: per-head slices straight from qkv ------------
    # qkv columns are laid out [q | k | v] each of width C = H*hd, so head h's
    # q/k/v column-block indices (width hd) are h, H+h, 2H+h.
    attn = pl.pallas_call(
        _flash_attn_kernel,
        out_shape=jax.ShapeDtypeStruct((rows, C), jnp.bfloat16),
        grid=(B, H, nq, nkv),
        in_specs=[
            pl.BlockSpec((tq, hd), lambda b, h, qi, ki: (b * nq + qi, h)),
            pl.BlockSpec((tk, hd), lambda b, h, qi, ki: (b * nkv + ki, H + h)),
            pl.BlockSpec((tk, hd),
                         lambda b, h, qi, ki: (b * nkv + ki, 2 * H + h)),
        ],
        out_specs=pl.BlockSpec((tq, hd),
                               lambda b, h, qi, ki: (b * nq + qi, h)),
        scratch_shapes=[
            pltpu.VMEM((tq, 1), jnp.float32),    # running max
            pltpu.VMEM((tq, 1), jnp.float32),    # running denominator
            pltpu.VMEM((tq, hd), jnp.float32),   # running numerator
        ],
        compiler_params=pltpu.CompilerParams(
            dimension_semantics=("parallel", "parallel", "parallel",
                                 "arbitrary"),
            vmem_limit_bytes=vmem),
    )(qkv, qkv, qkv)

    # ---- (c) proj + residual + MLP + residual, tiled over rows -------------
    x2_32, x2_16 = pl.pallas_call(
        _proj_mlp_kernel,
        out_shape=(jax.ShapeDtypeStruct((rows, C), jnp.float32),
                   jax.ShapeDtypeStruct((rows, C), jnp.bfloat16)),
        grid=(pl.cdiv(rows, tm),),
        in_specs=[
            pl.BlockSpec((tm, C), lambda i: (i, 0)),          # x (residual)
            pl.BlockSpec((tm, C), lambda i: (i, 0)),          # attention out
            _resident_spec((C, C)),                           # wproj
            _resident_spec((1, C)),                           # bproj
            _resident_spec((C, Hm)),                          # w1
            _resident_spec((1, Hm)),                          # b1
            _resident_spec((Hm, C)),                          # w2
            _resident_spec((1, C)),                           # b2
        ],
        out_specs=(pl.BlockSpec((tm, C), lambda i: (i, 0)),
                   pl.BlockSpec((tm, C), lambda i: (i, 0))),
        compiler_params=pltpu.CompilerParams(
            dimension_semantics=("parallel",),
            vmem_limit_bytes=vmem),
    )(x32, attn, p["wproj"], p["bproj"], p["w1"], p["b1"], p["w2"], p["b2"])

    return x2_32, x2_16


def transformer_encoder(x, params, num_heads):
    # TODO(synk): cross-pallas_call weight prefetch (P10) to hide next-layer
    # weight DMA behind current-layer kernel (c) compute.
    B, N, C = x.shape
    rows = B * N
    x32 = x.reshape(rows, C)
    x16 = x32.astype(jnp.bfloat16)          # bf16 QKV input for the 1st layer
    for p in params:
        x32, x16 = block_forward(x32, x16, p, num_heads, B, N)
    return x32.reshape(B, N, C)


# ---------------------------------------------------------------------------
# Parameter init (torch-equivalent, f32) and kernel-side preparation
# ---------------------------------------------------------------------------
def init_params(key, dim, num_heads, num_layers, mlp_ratio):
    hidden = int(dim * mlp_ratio)
    params = []
    for _ in range(num_layers):
        key, k1, k2, k3, k4 = jax.random.split(key, 5)
        params.append({
            "wqkv":  jax.random.normal(k1, (dim, 3 * dim), jnp.float32) * (dim ** -0.5),
            "bqkv":  jnp.zeros((1, 3 * dim), jnp.float32) + 0.01,
            "wproj": jax.random.normal(k2, (dim, dim), jnp.float32) * (dim ** -0.5),
            "bproj": jnp.zeros((1, dim), jnp.float32) + 0.01,
            "w1":    jax.random.normal(k3, (dim, hidden), jnp.float32) * (dim ** -0.5),
            "b1":    jnp.zeros((1, hidden), jnp.float32) + 0.01,
            "w2":    jax.random.normal(k4, (hidden, dim), jnp.float32) * (hidden ** -0.5),
            "b2":    jnp.zeros((1, dim), jnp.float32) + 0.01,
        })
    return params


def prepare_params(params, num_heads):
    """Fold the attention scale into the q columns (f32) then cast weights
    to bf16 for the MXU; biases stay f32 (added after f32 accumulation)."""
    prepped = []
    for p in params:
        C = p["wproj"].shape[0]
        scale = (C // num_heads) ** -0.5
        wqkv = p["wqkv"].at[:, :C].multiply(scale)
        bqkv = p["bqkv"].at[:, :C].multiply(scale)
        prepped.append({
            "wqkv":  wqkv.astype(jnp.bfloat16),
            "bqkv":  bqkv.astype(jnp.float32),
            "wproj": p["wproj"].astype(jnp.bfloat16),
            "bproj": p["bproj"].astype(jnp.float32),
            "w1":    p["w1"].astype(jnp.bfloat16),
            "b1":    p["b1"].astype(jnp.float32),
            "w2":    p["w2"].astype(jnp.bfloat16),
            "b2":    p["b2"].astype(jnp.float32),
        })
    return prepped


# ---------------------------- pure-JAX reference ----------------------------
def ref_block(x, p, num_heads):
    B, N, C = x.shape
    hd = C // num_heads
    scale = hd ** -0.5
    qkv = x @ p["wqkv"] + p["bqkv"][0]
    qkv = qkv.reshape(B, N, 3, num_heads, hd).transpose(2, 0, 3, 1, 4)
    q, k, v = qkv[0], qkv[1], qkv[2]
    attn = jax.nn.softmax(jnp.einsum("bhqd,bhkd->bhqk", q, k) * scale, axis=-1)
    o = jnp.einsum("bhqk,bhkd->bhqd", attn, v).transpose(0, 2, 1, 3).reshape(B, N, C)
    x = x + o @ p["wproj"] + p["bproj"][0]
    h = jax.nn.relu(x @ p["w1"] + p["b1"][0])
    return x + h @ p["w2"] + p["b2"][0]


def ref_encoder(x, params, num_heads):
    for p in params:
        x = ref_block(x, p, num_heads)
    return x


if __name__ == "__main__":
    # Small but lane-dense shapes: head_dim = 128 so per-head blocks are
    # 128-lane aligned; C = 256 (multiple of 128).
    B, N, dim = 2, 16, 256
    num_heads, num_layers, mlp_ratio = 2, 2, 2.0

    key = jax.random.PRNGKey(0)
    key, kx = jax.random.split(key)
    x = jax.random.normal(kx, (B, N, dim), jnp.float32)

    params = init_params(key, dim, num_heads, num_layers, mlp_ratio)
    kparams = prepare_params(params, num_heads)

    enc = jax.jit(transformer_encoder, static_argnums=(2,))
    out = jax.block_until_ready(enc(x, kparams, num_heads))

    ref = ref_encoder(x, params, num_heads)
    assert out.shape == (B, N, dim)
    err = float(jnp.max(jnp.abs(out - ref)))
    tol = 5e-2 * float(jnp.maximum(1.0, jnp.max(jnp.abs(ref))))  # bf16 + approx-recip slack
    assert err < tol, f"max abs err {err} vs tol {tol}"

    print("KERNEL_OK")
</pallas_src>

<mosaic_0001>
module attributes {stable_mosaic.version = 11 : i64} {
  func.func @_qkv_proj_kernel(%arg0: i32, %arg1: memref<32x256xbf16, #tpu.memory_space<vmem>>, %arg2: memref<256x768xbf16, #tpu.memory_space<vmem>>, %arg3: memref<1x768xf32, #tpu.memory_space<vmem>>, %arg4: memref<32x768xbf16, #tpu.memory_space<vmem>>) attributes {dimension_semantics = [#tpu.dimension_semantics<parallel>], iteration_bounds = array<i64: 1>, scalar_prefetch = 0 : i64, scratch_operands = 0 : i64, tpu.core_type = #tpu.core_type<tc>, window_params = [{transform_indices = @transform_0, window_bounds = array<i64: 32, 256>}, {pipeline_mode = #tpu.pipeline_mode<synchronous>, transform_indices = @transform_1, window_bounds = array<i64: 256, 768>}, {pipeline_mode = #tpu.pipeline_mode<synchronous>, transform_indices = @transform_2, window_bounds = array<i64: 1, 768>}, {transform_indices = @transform_3, window_bounds = array<i64: 32, 768>}]} {
    %c0 = arith.constant 0 : index
    %c0_0 = arith.constant 0 : index
    %0 = vector.load %arg1[%c0, %c0_0] : memref<32x256xbf16, #tpu.memory_space<vmem>>, vector<32x256xbf16>
    %c0_1 = arith.constant 0 : index
    %c0_2 = arith.constant 0 : index
    %1 = vector.load %arg2[%c0_1, %c0_2] : memref<256x768xbf16, #tpu.memory_space<vmem>>, vector<256x768xbf16>
    %cst = arith.constant dense<0.000000e+00> : vector<32x768xf32>
    %2 = tpu.matmul %0, %1, %cst {dimension_numbers = #tpu.dot_dimension_numbers<[1], [0], [0], [1], [0, 0, 1, 1], [], []>} : vector<32x256xbf16>, vector<256x768xbf16>, vector<32x768xf32> -> vector<32x768xf32>
    %c0_3 = arith.constant 0 : index
    %c0_4 = arith.constant 0 : index
    %3 = vector.load %arg3[%c0_3, %c0_4] : memref<1x768xf32, #tpu.memory_space<vmem>>, vector<1x768xf32>
    %4 = vector.broadcast %3 : vector<1x768xf32> to vector<32x768xf32>
    %5 = arith.addf %2, %4 : vector<32x768xf32>
    %6 = arith.truncf %5 : vector<32x768xf32> to vector<32x768xbf16>
    %c0_5 = arith.constant 0 : index
    %c0_6 = arith.constant 0 : index
    %7 = vector.load %arg4[%c0_5, %c0_6] : memref<32x768xbf16, #tpu.memory_space<vmem>>, vector<32x768xbf16>
    tpu.vector_store %arg4[%c0_5, %c0_6], %6 {strides = array<i32>} : memref<32x768xbf16, #tpu.memory_space<vmem>>, vector<32x768xbf16>,
    return
  }
  func.func @transform_0(%arg0: i32) -> (i32, i32) {
    %c0_i32 = arith.constant 0 : i32
    %c0_i32_0 = arith.constant 0 : i32
    return %arg0, %c0_i32 : i32, i32
  }
  func.func @transform_1(%arg0: i32) -> (i32, i32) {
    %c0_i32 = arith.constant 0 : i32
    %c0_i32_0 = arith.constant 0 : i32
    %c0_i32_1 = arith.constant 0 : i32
    return %c0_i32, %c0_i32_0 : i32, i32
  }
  func.func @transform_2(%arg0: i32) -> (i32, i32) {
    %c0_i32 = arith.constant 0 : i32
    %c0_i32_0 = arith.constant 0 : i32
    %c0_i32_1 = arith.constant 0 : i32
    return %c0_i32, %c0_i32_0 : i32, i32
  }
  func.func @transform_3(%arg0: i32) -> (i32, i32) {
    %c0_i32 = arith.constant 0 : i32
    %c0_i32_0 = arith.constant 0 : i32
    return %arg0, %c0_i32 : i32, i32
  }
}

module attributes {stable_mosaic.version = 11 : i64} {
  func.func @_flash_attn_kernel(%arg0: i32, %arg1: i32, %arg2: i32, %arg3: i32, %arg4: memref<16x128xbf16, #tpu.memory_space<vmem>>, %arg5: memref<16x128xbf16, #tpu.memory_space<vmem>>, %arg6: memref<16x128xbf16, #tpu.memory_space<vmem>>, %arg7: memref<16x128xbf16, #tpu.memory_space<vmem>>, %arg8: memref<16x1xf32, #tpu.memory_space<vmem>>, %arg9: memref<16x1xf32, #tpu.memory_space<vmem>>, %arg10: memref<16x128xf32, #tpu.memory_space<vmem>>) attributes {dimension_semantics = [#tpu.dimension_semantics<parallel>, #tpu.dimension_semantics<parallel>, #tpu.dimension_semantics<parallel>, #tpu.dimension_semantics<arbitrary>], iteration_bounds = array<i64: 2, 2, 1, 1>, scalar_prefetch = 0 : i64, scratch_operands = 3 : i64, tpu.core_type = #tpu.core_type<tc>, window_params = [{transform_indices = @transform_0, window_bounds = array<i64: 16, 128>}, {transform_indices = @transform_1, window_bounds = array<i64: 16, 128>}, {transform_indices = @transform_2, window_bounds = array<i64: 16, 128>}, {transform_indices = @transform_3, window_bounds = array<i64: 16, 128>}]} {
    %c0_i32 = arith.constant 0 : i32
    %0 = arith.cmpi eq, %arg3, %c0_i32 : i32
    %1 = arith.extui %0 : i1 to i32
    %c0_i32_0 = arith.constant 0 : i32
    %2 = arith.cmpi ne, %1, %c0_i32_0 : i32
    scf.if %2 {
      %cst_23 = arith.constant 0xFF800000 : f32
      %33 = vector.broadcast %cst_23 : f32 to vector<16x1xf32>
      %c0_24 = arith.constant 0 : index
      %c0_25 = arith.constant 0 : index
      %34 = vector.load %arg8[%c0_24, %c0_25] : memref<16x1xf32, #tpu.memory_space<vmem>>, vector<16x1xf32>
      tpu.vector_store %arg8[%c0_24, %c0_25], %33 {strides = array<i32>} : memref<16x1xf32, #tpu.memory_space<vmem>>, vector<16x1xf32>,
      %cst_26 = arith.constant 0.000000e+00 : f32
      %35 = vector.broadcast %cst_26 : f32 to vector<16x1xf32>
      %c0_27 = arith.constant 0 : index
      %c0_28 = arith.constant 0 : index
      %36 = vector.load %arg9[%c0_27, %c0_28] : memref<16x1xf32, #tpu.memory_space<vmem>>, vector<16x1xf32>
      tpu.vector_store %arg9[%c0_27, %c0_28], %35 {strides = array<i32>} : memref<16x1xf32, #tpu.memory_space<vmem>>, vector<16x1xf32>,
      %cst_29 = arith.constant 0.000000e+00 : f32
      %37 = vector.broadcast %cst_29 : f32 to vector<16x128xf32>
      %c0_30 = arith.constant 0 : index
      %c0_31 = arith.constant 0 : index
      %38 = vector.load %arg10[%c0_30, %c0_31] : memref<16x128xf32, #tpu.memory_space<vmem>>, vector<16x128xf32>
      tpu.vector_store %arg10[%c0_30, %c0_31], %37 {strides = array<i32>} : memref<16x128xf32, #tpu.memory_space<vmem>>, vector<16x128xf32>,
    } else {
    }
    %c0 = arith.constant 0 : index
    %c0_1 = arith.constant 0 : index
    %3 = vector.load %arg4[%c0, %c0_1] : memref<16x128xbf16, #tpu.memory_space<vmem>>, vector<16x128xbf16>
    %c0_2 = arith.constant 0 : index
    %c0_3 = arith.constant 0 : index
    %4 = vector.load %arg5[%c0_2, %c0_3] : memref<16x128xbf16, #tpu.memory_space<vmem>>, vector<16x128xbf16>
    %c0_4 = arith.constant 0 : index
    %c0_5 = arith.constant 0 : index
    %5 = vector.load %arg6[%c0_4, %c0_5] : memref<16x128xbf16, #tpu.memory_space<vmem>>, vector<16x128xbf16>
    %cst = arith.constant dense<0.000000e+00> : vector<16x16xf32>
    %6 = tpu.matmul %3, %4, %cst {dimension_numbers = #tpu.dot_dimension_numbers<[1], [1], [0], [0], [0, 0, 1, 0], [], []>} : vector<16x128xbf16>, vector<16x128xbf16>, vector<16x16xf32> -> vector<16x16xf32>
    %c0_6 = arith.constant 0 : index
    %c0_7 = arith.constant 0 : index
    %7 = vector.load %arg8[%c0_6, %c0_7] : memref<16x1xf32, #tpu.memory_space<vmem>>, vector<16x1xf32>
    %cst_8 = arith.constant dense<0xFF800000> : vector<16xf32>
    %8 = vector.multi_reduction <maximumf>, %6, %cst_8 [1] : vector<16x16xf32> to vector<16xf32>
    %9 = vector.shape_cast %8 : vector<16xf32> to vector<16x1xf32>
    %10 = arith.maximumf %7, %9 : vector<16x1xf32>
    %11 = arith.subf %7, %10 : vector<16x1xf32>
    %12 = math.exp %11 : vector<16x1xf32>
    %13 = vector.broadcast %10 : vector<16x1xf32> to vector<16x16xf32>
    %14 = arith.subf %6, %13 : vector<16x16xf32>
    %15 = math.exp %14 : vector<16x16xf32>
    %c0_9 = arith.constant 0 : index
    %c0_10 = arith.constant 0 : index
    %16 = vector.load %arg9[%c0_9, %c0_10] : memref<16x1xf32, #tpu.memory_space<vmem>>, vector<16x1xf32>
    %17 = arith.mulf %12, %16 : vector<16x1xf32>
    %cst_11 = arith.constant dense<0.000000e+00> : vector<16xf32>
    %18 = vector.multi_reduction <add>, %15, %cst_11 [1] : vector<16x16xf32> to vector<16xf32>
    %19 = vector.shape_cast %18 : vector<16xf32> to vector<16x1xf32>
    %20 = arith.addf %17, %19 : vector<16x1xf32>
    %c0_12 = arith.constant 0 : index
    %c0_13 = arith.constant 0 : index
    %21 = vector.load %arg9[%c0_12, %c0_13] : memref<16x1xf32, #tpu.memory_space<vmem>>, vector<16x1xf32>
    tpu.vector_store %arg9[%c0_12, %c0_13], %20 {strides = array<i32>} : memref<16x1xf32, #tpu.memory_space<vmem>>, vector<16x1xf32>,
    %c0_14 = arith.constant 0 : index
    %c0_15 = arith.constant 0 : index
    %22 = vector.load %arg10[%c0_14, %c0_15] : memref<16x128xf32, #tpu.memory_space<vmem>>, vector<16x128xf32>
    %23 = vector.broadcast %12 : vector<16x1xf32> to vector<16x128xf32>
    %24 = arith.mulf %23, %22 : vector<16x128xf32>
    %25 = arith.truncf %15 : vector<16x16xf32> to vector<16x16xbf16>
    %cst_16 = arith.constant dense<0.000000e+00> : vector<16x128xf32>
    %26 = tpu.matmul %25, %5, %cst_16 {dimension_numbers = #tpu.dot_dimension_numbers<[1], [0], [0], [1], [0, 0, 1, 1], [], []>} : vector<16x16xbf16>, vector<16x128xbf16>, vector<16x128xf32> -> vector<16x128xf32>
    %27 = arith.addf %24, %26 : vector<16x128xf32>
    %c0_17 = arith.constant 0 : index
    %c0_18 = arith.constant 0 : index
    %28 = vector.load %arg10[%c0_17, %c0_18] : memref<16x128xf32, #tpu.memory_space<vmem>>, vector<16x128xf32>
    tpu.vector_store %arg10[%c0_17, %c0_18], %27 {strides = array<i32>} : memref<16x128xf32, #tpu.memory_space<vmem>>, vector<16x128xf32>,
    %c0_19 = arith.constant 0 : index
    %c0_20 = arith.constant 0 : index
    %29 = vector.load %arg8[%c0_19, %c0_20] : memref<16x1xf32, #tpu.memory_space<vmem>>, vector<16x1xf32>
    tpu.vector_store %arg8[%c0_19, %c0_20], %10 {strides = array<i32>} : memref<16x1xf32, #tpu.memory_space<vmem>>, vector<16x1xf32>,
    %c0_i32_21 = arith.constant 0 : i32
    %30 = arith.cmpi eq, %arg3, %c0_i32_21 : i32
    %31 = arith.extui %30 : i1 to i32
    %c0_i32_22 = arith.constant 0 : i32
    %32 = arith.cmpi ne, %31, %c0_i32_22 : i32
    scf.if %32 {
      %c0_23 = arith.constant 0 : index
      %c0_24 = arith.constant 0 : index
      %33 = vector.load %arg9[%c0_23, %c0_24] : memref<16x1xf32, #tpu.memory_space<vmem>>, vector<16x1xf32>
      %34 = tpu.reciprocal %33 {approx = true} : vector<16x1xf32> -> vector<16x1xf32>
      %c0_25 = arith.constant 0 : index
      %c0_26 = arith.constant 0 : index
      %35 = vector.load %arg10[%c0_25, %c0_26] : memref<16x128xf32, #tpu.memory_space<vmem>>, vector<16x128xf32>
      %36 = vector.broadcast %34 : vector<16x1xf32> to vector<16x128xf32>
      %37 = arith.mulf %35, %36 : vector<16x128xf32>
      %38 = arith.truncf %37 : vector<16x128xf32> to vector<16x128xbf16>
      %c0_27 = arith.constant 0 : index
      %c0_28 = arith.constant 0 : index
      %39 = vector.load %arg7[%c0_27, %c0_28] : memref<16x128xbf16, #tpu.memory_space<vmem>>, vector<16x128xbf16>
      tpu.vector_store %arg7[%c0_27, %c0_28], %38 {strides = array<i32>} : memref<16x128xbf16, #tpu.memory_space<vmem>>, vector<16x128xbf16>,
    } else {
    }
    return
  }
  func.func @transform_0(%arg0: i32, %arg1: i32, %arg2: i32, %arg3: i32) -> (i32, i32) {
    %c1_i32 = arith.constant 1 : i32
    %0 = arith.muli %arg0, %c1_i32 : i32
    %1 = arith.addi %0, %arg2 : i32
    %c0_i32 = arith.constant 0 : i32
    return %1, %arg1 : i32, i32
  }
  func.func @transform_1(%arg0: i32, %arg1: i32, %arg2: i32, %arg3: i32) -> (i32, i32) {
    %c1_i32 = arith.constant 1 : i32
    %0 = arith.muli %arg0, %c1_i32 : i32
    %1 = arith.addi %0, %arg3 : i32
    %c2_i32 = arith.constant 2 : i32
    %2 = arith.addi %c2_i32, %arg1 : i32
    %c0_i32 = arith.constant 0 : i32
    return %1, %2 : i32, i32
  }
  func.func @transform_2(%arg0: i32, %arg1: i32, %arg2: i32, %arg3: i32) -> (i32, i32) {
    %c1_i32 = arith.constant 1 : i32
    %0 = arith.muli %arg0, %c1_i32 : i32
    %1 = arith.addi %0, %arg3 : i32
    %c4_i32 = arith.constant 4 : i32
    %2 = arith.addi %c4_i32, %arg1 : i32
    %c0_i32 = arith.constant 0 : i32
    return %1, %2 : i32, i32
  }
  func.func @transform_3(%arg0: i32, %arg1: i32, %arg2: i32, %arg3: i32) -> (i32, i32) {
    %c1_i32 = arith.constant 1 : i32
    %0 = arith.muli %arg0, %c1_i32 : i32
    %1 = arith.addi %0, %arg2 : i32
    %c0_i32 = arith.constant 0 : i32
    return %1, %arg1 : i32, i32
  }
}

module attributes {stable_mosaic.version = 11 : i64} {
  func.func @_proj_mlp_kernel(%arg0: i32, %arg1: memref<32x256xf32, #tpu.memory_space<vmem>>, %arg2: memref<32x256xbf16, #tpu.memory_space<vmem>>, %arg3: memref<256x256xbf16, #tpu.memory_space<vmem>>, %arg4: memref<1x256xf32, #tpu.memory_space<vmem>>, %arg5: memref<256x512xbf16, #tpu.memory_space<vmem>>, %arg6: memref<1x512xf32, #tpu.memory_space<vmem>>, %arg7: memref<512x256xbf16, #tpu.memory_space<vmem>>, %arg8: memref<1x256xf32, #tpu.memory_space<vmem>>, %arg9: memref<32x256xf32, #tpu.memory_space<vmem>>, %arg10: memref<32x256xbf16, #tpu.memory_space<vmem>>) attributes {dimension_semantics = [#tpu.dimension_semantics<parallel>], iteration_bounds = array<i64: 1>, scalar_prefetch = 0 : i64, scratch_operands = 0 : i64, tpu.core_type = #tpu.core_type<tc>, window_params = [{transform_indices = @transform_0, window_bounds = array<i64: 32, 256>}, {transform_indices = @transform_1, window_bounds = array<i64: 32, 256>}, {pipeline_mode = #tpu.pipeline_mode<synchronous>, transform_indices = @transform_2, window_bounds = array<i64: 256, 256>}, {pipeline_mode = #tpu.pipeline_mode<synchronous>, transform_indices = @transform_3, window_bounds = array<i64: 1, 256>}, {pipeline_mode = #tpu.pipeline_mode<synchronous>, transform_indices = @transform_4, window_bounds = array<i64: 256, 512>}, {pipeline_mode = #tpu.pipeline_mode<synchronous>, transform_indices = @transform_5, window_bounds = array<i64: 1, 512>}, {pipeline_mode = #tpu.pipeline_mode<synchronous>, transform_indices = @transform_6, window_bounds = array<i64: 512, 256>}, {pipeline_mode = #tpu.pipeline_mode<synchronous>, transform_indices = @transform_7, window_bounds = array<i64: 1, 256>}, {transform_indices = @transform_8, window_bounds = array<i64: 32, 256>}, {transform_indices = @transform_9, window_bounds = array<i64: 32, 256>}]} {
    %c0 = arith.constant 0 : index
    %c0_0 = arith.constant 0 : index
    %0 = vector.load %arg1[%c0, %c0_0] : memref<32x256xf32, #tpu.memory_space<vmem>>, vector<32x256xf32>
    %c0_1 = arith.constant 0 : index
    %c0_2 = arith.constant 0 : index
    %1 = vector.load %arg2[%c0_1, %c0_2] : memref<32x256xbf16, #tpu.memory_space<vmem>>, vector<32x256xbf16>
    %c0_3 = arith.constant 0 : index
    %c0_4 = arith.constant 0 : index
    %2 = vector.load %arg3[%c0_3, %c0_4] : memref<256x256xbf16, #tpu.memory_space<vmem>>, vector<256x256xbf16>
    %cst = arith.constant dense<0.000000e+00> : vector<32x256xf32>
    %3 = tpu.matmul %1, %2, %cst {dimension_numbers = #tpu.dot_dimension_numbers<[1], [0], [0], [1], [0, 0, 1, 1], [], []>} : vector<32x256xbf16>, vector<256x256xbf16>, vector<32x256xf32> -> vector<32x256xf32>
    %4 = arith.addf %0, %3 : vector<32x256xf32>
    %c0_5 = arith.constant 0 : index
    %c0_6 = arith.constant 0 : index
    %5 = vector.load %arg4[%c0_5, %c0_6] : memref<1x256xf32, #tpu.memory_space<vmem>>, vector<1x256xf32>
    %6 = vector.broadcast %5 : vector<1x256xf32> to vector<32x256xf32>
    %7 = arith.addf %4, %6 : vector<32x256xf32>
    %8 = arith.truncf %7 : vector<32x256xf32> to vector<32x256xbf16>
    %c0_7 = arith.constant 0 : index
    %c0_8 = arith.constant 0 : index
    %9 = vector.load %arg5[%c0_7, %c0_8] : memref<256x512xbf16, #tpu.memory_space<vmem>>, vector<256x512xbf16>
    %cst_9 = arith.constant dense<0.000000e+00> : vector<32x512xf32>
    %10 = tpu.matmul %8, %9, %cst_9 {dimension_numbers = #tpu.dot_dimension_numbers<[1], [0], [0], [1], [0, 0, 1, 1], [], []>} : vector<32x256xbf16>, vector<256x512xbf16>, vector<32x512xf32> -> vector<32x512xf32>
    %c0_10 = arith.constant 0 : index
    %c0_11 = arith.constant 0 : index
    %11 = vector.load %arg6[%c0_10, %c0_11] : memref<1x512xf32, #tpu.memory_space<vmem>>, vector<1x512xf32>
    %12 = vector.broadcast %11 : vector<1x512xf32> to vector<32x512xf32>
    %13 = arith.addf %10, %12 : vector<32x512xf32>
    %cst_12 = arith.constant 0.000000e+00 : f32
    %14 = vector.broadcast %cst_12 : f32 to vector<32x512xf32>
    %15 = arith.maximumf %13, %14 : vector<32x512xf32>
    %16 = arith.truncf %15 : vector<32x512xf32> to vector<32x512xbf16>
    %c0_13 = arith.constant 0 : index
    %c0_14 = arith.constant 0 : index
    %17 = vector.load %arg7[%c0_13, %c0_14] : memref<512x256xbf16, #tpu.memory_space<vmem>>, vector<512x256xbf16>
    %cst_15 = arith.constant dense<0.000000e+00> : vector<32x256xf32>
    %18 = tpu.matmul %16, %17, %cst_15 {dimension_numbers = #tpu.dot_dimension_numbers<[1], [0], [0], [1], [0, 0, 1, 1], [], []>} : vector<32x512xbf16>, vector<512x256xbf16>, vector<32x256xf32> -> vector<32x256xf32>
    %19 = arith.addf %7, %18 : vector<32x256xf32>
    %c0_16 = arith.constant 0 : index
    %c0_17 = arith.constant 0 : index
    %20 = vector.load %arg8[%c0_16, %c0_17] : memref<1x256xf32, #tpu.memory_space<vmem>>, vector<1x256xf32>
    %21 = vector.broadcast %20 : vector<1x256xf32> to vector<32x256xf32>
    %22 = arith.addf %19, %21 : vector<32x256xf32>
    %c0_18 = arith.constant 0 : index
    %c0_19 = arith.constant 0 : index
    %23 = vector.load %arg9[%c0_18, %c0_19] : memref<32x256xf32, #tpu.memory_space<vmem>>, vector<32x256xf32>
    tpu.vector_store %arg9[%c0_18, %c0_19], %22 {strides = array<i32>} : memref<32x256xf32, #tpu.memory_space<vmem>>, vector<32x256xf32>,
    %24 = arith.truncf %22 : vector<32x256xf32> to vector<32x256xbf16>
    %c0_20 = arith.constant 0 : index
    %c0_21 = arith.constant 0 : index
    %25 = vector.load %arg10[%c0_20, %c0_21] : memref<32x256xbf16, #tpu.memory_space<vmem>>, vector<32x256xbf16>
    tpu.vector_store %arg10[%c0_20, %c0_21], %24 {strides = array<i32>} : memref<32x256xbf16, #tpu.memory_space<vmem>>, vector<32x256xbf16>,
    return
  }
  func.func @transform_0(%arg0: i32) -> (i32, i32) {
    %c0_i32 = arith.constant 0 : i32
    %c0_i32_0 = arith.constant 0 : i32
    return %arg0, %c0_i32 : i32, i32
  }
  func.func @transform_1(%arg0: i32) -> (i32, i32) {
    %c0_i32 = arith.constant 0 : i32
    %c0_i32_0 = arith.constant 0 : i32
    return %arg0, %c0_i32 : i32, i32
  }
  func.func @transform_2(%arg0: i32) -> (i32, i32) {
    %c0_i32 = arith.constant 0 : i32
    %c0_i32_0 = arith.constant 0 : i32
    %c0_i32_1 = arith.constant 0 : i32
    return %c0_i32, %c0_i32_0 : i32, i32
  }
  func.func @transform_3(%arg0: i32) -> (i32, i32) {
    %c0_i32 = arith.constant 0 : i32
    %c0_i32_0 = arith.constant 0 : i32
    %c0_i32_1 = arith.constant 0 : i32
    return %c0_i32, %c0_i32_0 : i32, i32
  }
  func.func @transform_4(%arg0: i32) -> (i32, i32) {
    %c0_i32 = arith.constant 0 : i32
    %c0_i32_0 = arith.constant 0 : i32
    %c0_i32_1 = arith.constant 0 : i32
    return %c0_i32, %c0_i32_0 : i32, i32
  }
  func.func @transform_5(%arg0: i32) -> (i32, i32) {
    %c0_i32 = arith.constant 0 : i32
    %c0_i32_0 = arith.constant 0 : i32
    %c0_i32_1 = arith.constant 0 : i32
    return %c0_i32, %c0_i32_0 : i32, i32
  }
  func.func @transform_6(%arg0: i32) -> (i32, i32) {
    %c0_i32 = arith.constant 0 : i32
    %c0_i32_0 = arith.constant 0 : i32
    %c0_i32_1 = arith.constant 0 : i32
    return %c0_i32, %c0_i32_0 : i32, i32
  }
  func.func @transform_7(%arg0: i32) -> (i32, i32) {
    %c0_i32 = arith.constant 0 : i32
    %c0_i32_0 = arith.constant 0 : i32
    %c0_i32_1 = arith.constant 0 : i32
    return %c0_i32, %c0_i32_0 : i32, i32
  }
  func.func @transform_8(%arg0: i32) -> (i32, i32) {
    %c0_i32 = arith.constant 0 : i32
    %c0_i32_0 = arith.constant 0 : i32
    return %arg0, %c0_i32 : i32, i32
  }
  func.func @transform_9(%arg0: i32) -> (i32, i32) {
    %c0_i32 = arith.constant 0 : i32
    %c0_i32_0 = arith.constant 0 : i32
    return %arg0, %c0_i32 : i32, i32
  }
}

module attributes {stable_mosaic.version = 11 : i64} {
  func.func @_qkv_proj_kernel(%arg0: i32, %arg1: memref<32x256xbf16, #tpu.memory_space<vmem>>, %arg2: memref<256x768xbf16, #tpu.memory_space<vmem>>, %arg3: memref<1x768xf32, #tpu.memory_space<vmem>>, %arg4: memref<32x768xbf16, #tpu.memory_space<vmem>>) attributes {dimension_semantics = [#tpu.dimension_semantics<parallel>], iteration_bounds = array<i64: 1>, scalar_prefetch = 0 : i64, scratch_operands = 0 : i64, tpu.core_type = #tpu.core_type<tc>, window_params = [{transform_indices = @transform_0, window_bounds = array<i64: 32, 256>}, {pipeline_mode = #tpu.pipeline_mode<synchronous>, transform_indices = @transform_1, window_bounds = array<i64: 256, 768>}, {pipeline_mode = #tpu.pipeline_mode<synchronous>, transform_indices = @transform_2, window_bounds = array<i64: 1, 768>}, {transform_indices = @transform_3, window_bounds = array<i64: 32, 768>}]} {
    %c0 = arith.constant 0 : index
    %c0_0 = arith.constant 0 : index
    %0 = vector.load %arg1[%c0, %c0_0] : memref<32x256xbf16, #tpu.memory_space<vmem>>, vector<32x256xbf16>
    %c0_1 = arith.constant 0 : index
    %c0_2 = arith.constant 0 : index
    %1 = vector.load %arg2[%c0_1, %c0_2] : memref<256x768xbf16, #tpu.memory_space<vmem>>, vector<256x768xbf16>
    %cst = arith.constant dense<0.000000e+00> : vector<32x768xf32>
    %2 = tpu.matmul %0, %1, %cst {dimension_numbers = #tpu.dot_dimension_numbers<[1], [0], [0], [1], [0, 0, 1, 1], [], []>} : vector<32x256xbf16>, vector<256x768xbf16>, vector<32x768xf32> -> vector<32x768xf32>
    %c0_3 = arith.constant 0 : index
    %c0_4 = arith.constant 0 : index
    %3 = vector.load %arg3[%c0_3, %c0_4] : memref<1x768xf32, #tpu.memory_space<vmem>>, vector<1x768xf32>
    %4 = vector.broadcast %3 : vector<1x768xf32> to vector<32x768xf32>
    %5 = arith.addf %2, %4 : vector<32x768xf32>
    %6 = arith.truncf %5 : vector<32x768xf32> to vector<32x768xbf16>
    %c0_5 = arith.constant 0 : index
    %c0_6 = arith.constant 0 : index
    %7 = vector.load %arg4[%c0_5, %c0_6] : memref<32x768xbf16, #tpu.memory_space<vmem>>, vector<32x768xbf16>
    tpu.vector_store %arg4[%c0_5, %c0_6], %6 {strides = array<i32>} : memref<32x768xbf16, #tpu.memory_space<vmem>>, vector<32x768xbf16>,
    return
  }
  func.func @transform_0(%arg0: i32) -> (i32, i32) {
    %c0_i32 = arith.constant 0 : i32
    %c0_i32_0 = arith.constant 0 : i32
    return %arg0, %c0_i32 : i32, i32
  }
  func.func @transform_1(%arg0: i32) -> (i32, i32) {
    %c0_i32 = arith.constant 0 : i32
    %c0_i32_0 = arith.constant 0 : i32
    %c0_i32_1 = arith.constant 0 : i32
    return %c0_i32, %c0_i32_0 : i32, i32
  }
  func.func @transform_2(%arg0: i32) -> (i32, i32) {
    %c0_i32 = arith.constant 0 : i32
    %c0_i32_0 = arith.constant 0 : i32
    %c0_i32_1 = arith.constant 0 : i32
    return %c0_i32, %c0_i32_0 : i32, i32
  }
  func.func @transform_3(%arg0: i32) -> (i32, i32) {
    %c0_i32 = arith.constant 0 : i32
    %c0_i32_0 = arith.constant 0 : i32
    return %arg0, %c0_i32 : i32, i32
  }
}

module attributes {stable_mosaic.version = 11 : i64} {
  func.func @_proj_mlp_kernel(%arg0: i32, %arg1: memref<32x256xf32, #tpu.memory_space<vmem>>, %arg2: memref<32x256xbf16, #tpu.memory_space<vmem>>, %arg3: memref<256x256xbf16, #tpu.memory_space<vmem>>, %arg4: memref<1x256xf32, #tpu.memory_space<vmem>>, %arg5: memref<256x512xbf16, #tpu.memory_space<vmem>>, %arg6: memref<1x512xf32, #tpu.memory_space<vmem>>, %arg7: memref<512x256xbf16, #tpu.memory_space<vmem>>, %arg8: memref<1x256xf32, #tpu.memory_space<vmem>>, %arg9: memref<32x256xf32, #tpu.memory_space<vmem>>, %arg10: memref<32x256xbf16, #tpu.memory_space<vmem>>) attributes {dimension_semantics = [#tpu.dimension_semantics<parallel>], iteration_bounds = array<i64: 1>, scalar_prefetch = 0 : i64, scratch_operands = 0 : i64, tpu.core_type = #tpu.core_type<tc>, window_params = [{transform_indices = @transform_0, window_bounds = array<i64: 32, 256>}, {transform_indices = @transform_1, window_bounds = array<i64: 32, 256>}, {pipeline_mode = #tpu.pipeline_mode<synchronous>, transform_indices = @transform_2, window_bounds = array<i64: 256, 256>}, {pipeline_mode = #tpu.pipeline_mode<synchronous>, transform_indices = @transform_3, window_bounds = array<i64: 1, 256>}, {pipeline_mode = #tpu.pipeline_mode<synchronous>, transform_indices = @transform_4, window_bounds = array<i64: 256, 512>}, {pipeline_mode = #tpu.pipeline_mode<synchronous>, transform_indices = @transform_5, window_bounds = array<i64: 1, 512>}, {pipeline_mode = #tpu.pipeline_mode<synchronous>, transform_indices = @transform_6, window_bounds = array<i64: 512, 256>}, {pipeline_mode = #tpu.pipeline_mode<synchronous>, transform_indices = @transform_7, window_bounds = array<i64: 1, 256>}, {transform_indices = @transform_8, window_bounds = array<i64: 32, 256>}, {transform_indices = @transform_9, window_bounds = array<i64: 32, 256>}]} {
    %c0 = arith.constant 0 : index
    %c0_0 = arith.constant 0 : index
    %0 = vector.load %arg1[%c0, %c0_0] : memref<32x256xf32, #tpu.memory_space<vmem>>, vector<32x256xf32>
    %c0_1 = arith.constant 0 : index
    %c0_2 = arith.constant 0 : index
    %1 = vector.load %arg2[%c0_1, %c0_2] : memref<32x256xbf16, #tpu.memory_space<vmem>>, vector<32x256xbf16>
    %c0_3 = arith.constant 0 : index
    %c0_4 = arith.constant 0 : index
    %2 = vector.load %arg3[%c0_3, %c0_4] : memref<256x256xbf16, #tpu.memory_space<vmem>>, vector<256x256xbf16>
    %cst = arith.constant dense<0.000000e+00> : vector<32x256xf32>
    %3 = tpu.matmul %1, %2, %cst {dimension_numbers = #tpu.dot_dimension_numbers<[1], [0], [0], [1], [0, 0, 1, 1], [], []>} : vector<32x256xbf16>, vector<256x256xbf16>, vector<32x256xf32> -> vector<32x256xf32>
    %4 = arith.addf %0, %3 : vector<32x256xf32>
    %c0_5 = arith.constant 0 : index
    %c0_6 = arith.constant 0 : index
    %5 = vector.load %arg4[%c0_5, %c0_6] : memref<1x256xf32, #tpu.memory_space<vmem>>, vector<1x256xf32>
    %6 = vector.broadcast %5 : vector<1x256xf32> to vector<32x256xf32>
    %7 = arith.addf %4, %6 : vector<32x256xf32>
    %8 = arith.truncf %7 : vector<32x256xf32> to vector<32x256xbf16>
    %c0_7 = arith.constant 0 : index
    %c0_8 = arith.constant 0 : index
    %9 = vector.load %arg5[%c0_7, %c0_8] : memref<256x512xbf16, #tpu.memory_space<vmem>>, vector<256x512xbf16>
    %cst_9 = arith.constant dense<0.000000e+00> : vector<32x512xf32>
    %10 = tpu.matmul %8, %9, %cst_9 {dimension_numbers = #tpu.dot_dimension_numbers<[1], [0], [0], [1], [0, 0, 1, 1], [], []>} : vector<32x256xbf16>, vector<256x512xbf16>, vector<32x512xf32> -> vector<32x512xf32>
    %c0_10 = arith.constant 0 : index
    %c0_11 = arith.constant 0 : index
    %11 = vector.load %arg6[%c0_10, %c0_11] : memref<1x512xf32, #tpu.memory_space<vmem>>, vector<1x512xf32>
    %12 = vector.broadcast %11 : vector<1x512xf32> to vector<32x512xf32>
    %13 = arith.addf %10, %12 : vector<32x512xf32>
    %cst_12 = arith.constant 0.000000e+00 : f32
    %14 = vector.broadcast %cst_12 : f32 to vector<32x512xf32>
    %15 = arith.maximumf %13, %14 : vector<32x512xf32>
    %16 = arith.truncf %15 : vector<32x512xf32> to vector<32x512xbf16>
    %c0_13 = arith.constant 0 : index
    %c0_14 = arith.constant 0 : index
    %17 = vector.load %arg7[%c0_13, %c0_14] : memref<512x256xbf16, #tpu.memory_space<vmem>>, vector<512x256xbf16>
    %cst_15 = arith.constant dense<0.000000e+00> : vector<32x256xf32>
    %18 = tpu.matmul %16, %17, %cst_15 {dimension_numbers = #tpu.dot_dimension_numbers<[1], [0], [0], [1], [0, 0, 1, 1], [], []>} : vector<32x512xbf16>, vector<512x256xbf16>, vector<32x256xf32> -> vector<32x256xf32>
    %19 = arith.addf %7, %18 : vector<32x256xf32>
    %c0_16 = arith.constant 0 : index
    %c0_17 = arith.constant 0 : index
    %20 = vector.load %arg8[%c0_16, %c0_17] : memref<1x256xf32, #tpu.memory_space<vmem>>, vector<1x256xf32>
    %21 = vector.broadcast %20 : vector<1x256xf32> to vector<32x256xf32>
    %22 = arith.addf %19, %21 : vector<32x256xf32>
    %c0_18 = arith.constant 0 : index
    %c0_19 = arith.constant 0 : index
    %23 = vector.load %arg9[%c0_18, %c0_19] : memref<32x256xf32, #tpu.memory_space<vmem>>, vector<32x256xf32>
    tpu.vector_store %arg9[%c0_18, %c0_19], %22 {strides = array<i32>} : memref<32x256xf32, #tpu.memory_space<vmem>>, vector<32x256xf32>,
    %24 = arith.truncf %22 : vector<32x256xf32> to vector<32x256xbf16>
    %c0_20 = arith.constant 0 : index
    %c0_21 = arith.constant 0 : index
    %25 = vector.load %arg10[%c0_20, %c0_21] : memref<32x256xbf16, #tpu.memory_space<vmem>>, vector<32x256xbf16>
    tpu.vector_store %arg10[%c0_20, %c0_21], %24 {strides = array<i32>} : memref<32x256xbf16, #tpu.memory_space<vmem>>, vector<32x256xbf16>,
    return
  }
  func.func @transform_0(%arg0: i32) -> (i32, i32) {
    %c0_i32 = arith.constant 0 : i32
    %c0_i32_0 = arith.constant 0 : i32
    return %arg0, %c0_i32 : i32, i32
  }
  func.func @transform_1(%arg0: i32) -> (i32, i32) {
    %c0_i32 = arith.constant 0 : i32
    %c0_i32_0 = arith.constant 0 : i32
    return %arg0, %c0_i32 : i32, i32
  }
  func.func @transform_2(%arg0: i32) -> (i32, i32) {
    %c0_i32 = arith.constant 0 : i32
    %c0_i32_0 = arith.constant 0 : i32
    %c0_i32_1 = arith.constant 0 : i32
    return %c0_i32, %c0_i32_0 : i32, i32
  }
  func.func @transform_3(%arg0: i32) -> (i32, i32) {
    %c0_i32 = arith.constant 0 : i32
    %c0_i32_0 = arith.constant 0 : i32
    %c0_i32_1 = arith.constant 0 : i32
    return %c0_i32, %c0_i32_0 : i32, i32
  }
  func.func @transform_4(%arg0: i32) -> (i32, i32) {
    %c0_i32 = arith.constant 0 : i32
    %c0_i32_0 = arith.constant 0 : i32
    %c0_i32_1 = arith.constant 0 : i32
    return %c0_i32, %c0_i32_0 : i32, i32
  }
  func.func @transform_5(%arg0: i32) -> (i32, i32) {
    %c0_i32 = arith.constant 0 : i32
    %c0_i32_0 = arith.constant 0 : i32
    %c0_i32_1 = arith.constant 0 : i32
    return %c0_i32, %c0_i32_0 : i32, i32
  }
  func.func @transform_6(%arg0: i32) -> (i32, i32) {
    %c0_i32 = arith.constant 0 : i32
    %c0_i32_0 = arith.constant 0 : i32
    %c0_i32_1 = arith.constant 0 : i32
    return %c0_i32, %c0_i32_0 : i32, i32
  }
  func.func @transform_7(%arg0: i32) -> (i32, i32) {
    %c0_i32 = arith.constant 0 : i32
    %c0_i32_0 = arith.constant 0 : i32
    %c0_i32_1 = arith.constant 0 : i32
    return %c0_i32, %c0_i32_0 : i32, i32
  }
  func.func @transform_8(%arg0: i32) -> (i32, i32) {
    %c0_i32 = arith.constant 0 : i32
    %c0_i32_0 = arith.constant 0 : i32
    return %arg0, %c0_i32 : i32, i32
  }
  func.func @transform_9(%arg0: i32) -> (i32, i32) {
    %c0_i32 = arith.constant 0 : i32
    %c0_i32_0 = arith.constant 0 : i32
    return %arg0, %c0_i32 : i32, i32
  }
}

</mosaic_0001>

<llo_original>
// kernel: transformer_encoder.7
$region0: #{transformer_encoder.7}
  #allocation0 [shape = 'u32[]', space=smem, size = 0x4, offset = 0x4, fixed_abs, tag = 'smem constant byte address 0x4 - core index']
  #allocation1 [shape = 'u32[144,128]{1,0:T(1,128)}', space=vmem, size = 0x12000, scoped, tag = 'internal scratch']
  #allocation2 [shape = 'f32[16,1]{1,0:T(8,128)}', space=vmem, size = 0x2000, scoped, tag = 'scratch operand']
  #allocation3 [shape = 'f32[16,1]{1,0:T(8,128)}', space=vmem, size = 0x2000, scoped, tag = 'scratch operand']
  #allocation4 [shape = 'f32[16,128]{1,0:T(8,128)}', space=vmem, size = 0x2000, scoped, tag = 'scratch operand']
  %s0 = inlined_call_operand.vmem [shape: bf16[32,768], index: 0, kind: input, shape index: {}, may-alias: {0,1,2}]
  %s1 = inlined_call_operand.vmem [shape: bf16[32,768], index: 1, kind: input, shape index: {}, may-alias: {0,1,2}]
  %s2 = inlined_call_operand.vmem [shape: bf16[32,768], index: 2, kind: input, shape index: {}, may-alias: {0,1,2}]
  %s3 = inlined_call_operand.vmem [shape: bf16[32,256], index: 3, kind: output, shape index: {}]
  %s4 = sld [smem:[#allocation0]]
  $region213: #{transformer_encoder.7} parent=0
    _
  %s6 = ssub.s32 1, %s4
  %s7 = scalar_select 0, %s6, %s4
  $region1: #{transformer_encoder.7} parent=0
    #allocation5 [shape = 'u8[8192]{0}', space=vmem, size = 0x2000, scoped, tag = 'input window, operand 0']
    #allocation6 [shape = 'u8[8192]{0}', space=vmem, size = 0x2000, scoped, tag = 'input window, operand 1']
    #allocation7 [shape = 'u8[8192]{0}', space=vmem, size = 0x2000, scoped, tag = 'input window, operand 2']
    #allocation8 [shape = 'u8[8192]{0}', space=vmem, size = 0x2000, scoped, tag = 'output window, operand 0']
    loop: start=0, step=1, limit=6
    $region2: #{transformer_encoder.7} parent=1 // loop_pre_header
      _
    $region3: #{transformer_encoder.7} parent=1 // loop_header
      %s9 = sphi 0, %s13
      %p10 = scmp.ge.s32.totalorder %s9, 6
      %s16 = sphi 0, %s42
      %s17 = sphi 0, %s38
      %s18 = sphi 0, %s34
      %s19 = sphi 0, %s30
      %s20 = sphi 0, %s16
      %s21 = sphi 0, %s17
      %s22 = sphi 0, %s18
      %s23 = sphi 0, %s19
      %s24 = sphi 0, %s20
      %s25 = sphi 0, %s21
      %s26 = sphi 0, %s22
      %s27 = sphi 0, %s23
      %s49 = sphi 0, %s51
      %s52 = sphi 0, %s49
      %s53 = sphi 0, %s52
      %s69 = sphi 0, %s53
      %s81 = sphi 0, %s83
      %s84 = sphi 0, %s81
      %s85 = sphi 0, %s84
      %s101 = sphi 0, %s85
      %s113 = sphi 0, %s115
      %s116 = sphi 0, %s113
      %s117 = sphi 0, %s116
      %s133 = sphi 0, %s117
      %s143 = sphi 0, %s145
      %s146 = sphi 0, %s143
      %s147 = sphi 0, %s146
      %s163 = sphi 0, %s147
    $region4: #{transformer_encoder.7} parent=1 // loop_header_branch
      %12 = sbr.rel (%p10) target = $region8
    $region5: #{transformer_encoder.7} parent=1 // loop_body
      %s14 = ssub.s32 %s9, 1
      %s15 = ssub.s32 %s9, 2
      %s28 = sadd.s32 1, %s19
      %p29 = scmp.ge.s32.totalorder %s28, 1
      %s30 = scalar_select %p29, 0, %s28
      %s31 = sadd.s32 1, %s18
      %s32 = scalar_select %p29, %s31, %s18
      %p33 = scmp.ge.s32.totalorder %s32, 1
      %s34 = scalar_select %p33, 0, %s32
      %s35 = sadd.s32 1, %s17
      %s36 = scalar_select %p33, %s35, %s17
      %p37 = scmp.ge.s32.totalorder %s36, 2
      %s38 = scalar_select %p37, 0, %s36
      %s39 = sadd.s32 1, %s16
      %s40 = scalar_select %p37, %s39, %s16
      %p41 = scmp.ge.s32.totalorder %s40, 2
      %s42 = scalar_select %p41, 0, %s40
      %s43 = sadd.s32 %s16, %s18
      %s44 = sadd.s32 %s42, %s34
      %s45 = ssub.s32 %s43, %s44
      %s46 = ssub.s32 %s17, %s38
      %s47 = sor.u32 %s45, %s46
      %p48 = scmp.eq.s32.totalorder %s47, 0
      %s50 = sadd.s32 %s49, 1
      %s51 = scalar_select %p48, %s49, %s50
      %p54 = pneg %p48
      %p55 = scmp.eq.s32.totalorder %s9, 3
      %p56 = por %p54, %p55
      %p57 = scmp.ne.s32.totalorder %s49, %s52
      %p58 = scmp.eq.s32.totalorder %s9, 0
      %p59 = por %p57, %p58
      %p60 = scmp.ne.s32.totalorder %s49, %s52
      %p61 = scmp.eq.s32.totalorder %s14, 3
      %p62 = por %p60, %p61
      %p63 = scmp.ne.s32.totalorder %s52, %s53
      %p64 = scmp.eq.s32.totalorder %s14, 0
      %p65 = por %p63, %p64
      %p66 = scmp.ne.s32.totalorder %s52, %s53
      %p67 = scmp.eq.s32.totalorder %s15, 3
      %p68 = por %p66, %p67
      %p70 = scmp.ne.s32.totalorder %s53, %s69
      %p71 = scmp.eq.s32.totalorder %s15, 0
      %p72 = por %p70, %p71
      %s73 = sadd.s32 %s16, %s19
      %s74 = sadd.s32 %s17, 2
      %s75 = sadd.s32 %s42, %s30
      %s76 = sadd.s32 %s38, 2
      %s77 = ssub.s32 %s73, %s75
      %s78 = ssub.s32 %s74, %s76
      %s79 = sor.u32 %s77, %s78
      %p80 = scmp.eq.s32.totalorder %s79, 0
      %s82 = sadd.s32 %s81, 1
      %s83 = scalar_select %p80, %s81, %s82
      %p86 = pneg %p80
      %p87 = scmp.eq.s32.totalorder %s9, 3
      %p88 = por %p86, %p87
      %p89 = scmp.ne.s32.totalorder %s81, %s84
      %p90 = scmp.eq.s32.totalorder %s9, 0
      %p91 = por %p89, %p90
      %p92 = scmp.ne.s32.totalorder %s81, %s84
      %p93 = scmp.eq.s32.totalorder %s14, 3
      %p94 = por %p92, %p93
      %p95 = scmp.ne.s32.totalorder %s84, %s85
      %p96 = scmp.eq.s32.totalorder %s14, 0
      %p97 = por %p95, %p96
      %p98 = scmp.ne.s32.totalorder %s84, %s85
      %p99 = scmp.eq.s32.totalorder %s15, 3
      %p100 = por %p98, %p99
      %p102 = scmp.ne.s32.totalorder %s85, %s101
      %p103 = scmp.eq.s32.totalorder %s15, 0
      %p104 = por %p102, %p103
      %s105 = sadd.s32 %s16, %s19
      %s106 = sadd.s32 %s17, 4
      %s107 = sadd.s32 %s42, %s30
      %s108 = sadd.s32 %s38, 4
      %s109 = ssub.s32 %s105, %s107
      %s110 = ssub.s32 %s106, %s108
      %s111 = sor.u32 %s109, %s110
      %p112 = scmp.eq.s32.totalorder %s111, 0
      %s114 = sadd.s32 %s113, 1
      %s115 = scalar_select %p112, %s113, %s114
      %p118 = pneg %p112
      %p119 = scmp.eq.s32.totalorder %s9, 3
      %p120 = por %p118, %p119
      %p121 = scmp.ne.s32.totalorder %s113, %s116
      %p122 = scmp.eq.s32.totalorder %s9, 0
      %p123 = por %p121, %p122
      %p124 = scmp.ne.s32.totalorder %s113, %s116
      %p125 = scmp.eq.s32.totalorder %s14, 3
      %p126 = por %p124, %p125
      %p127 = scmp.ne.s32.totalorder %s116, %s117
      %p128 = scmp.eq.s32.totalorder %s14, 0
      %p129 = por %p127, %p128
      %p130 = scmp.ne.s32.totalorder %s116, %s117
      %p131 = scmp.eq.s32.totalorder %s15, 3
      %p132 = por %p130, %p131
      %p134 = scmp.ne.s32.totalorder %s117, %s133
      %p135 = scmp.eq.s32.totalorder %s15, 0
      %p136 = por %p134, %p135
      %s137 = sadd.s32 %s16, %s18
      %s138 = sadd.s32 %s42, %s34
      %s139 = ssub.s32 %s137, %s138
      %s140 = ssub.s32 %s17, %s38
      %s141 = sor.u32 %s139, %s140
      %p142 = scmp.eq.s32.totalorder %s141, 0
      %s144 = sadd.s32 %s143, 1
      %s145 = scalar_select %p142, %s143, %s144
      %p148 = pneg %p142
      %p149 = scmp.eq.s32.totalorder %s9, 3
      %p150 = por %p148, %p149
      %p151 = scmp.ne.s32.totalorder %s143, %s146
      %p152 = scmp.eq.s32.totalorder %s9, 0
      %p153 = por %p151, %p152
      %p154 = scmp.ne.s32.totalorder %s143, %s146
      %p155 = scmp.eq.s32.totalorder %s14, 3
      %p156 = por %p154, %p155
      %p157 = scmp.ne.s32.totalorder %s146, %s147
      %p158 = scmp.eq.s32.totalorder %s14, 0
      %p159 = por %p157, %p158
      %p160 = scmp.ne.s32.totalorder %s146, %s147
      %p161 = scmp.eq.s32.totalorder %s15, 3
      %p162 = por %p160, %p161
      %p164 = scmp.ne.s32.totalorder %s147, %s163
      %p165 = scmp.eq.s32.totalorder %s15, 0
      %p166 = por %p164, %p165
      %p167 = scmp.le.s32.totalorder 1, %s9
      %p168 = scmp.lt.s32.totalorder %s9, 5
      %p169 = pnand %p167, %p168
      %p170 = pneg %p169
      // Predicated region
      $region9: #{transformer_encoder.7} parent=5 // pred_check
        _
      $region10: #{transformer_encoder.7} parent=5 // pred_check_branch
        %172 = sbr.rel (%p169) target = $region12
      $region11: #{transformer_encoder.7} parent=5 // pred_region
        %s173 = ssub.s32 %s9, 1
      $region12: #{transformer_encoder.7} parent=5 // pred_fallthru
        _
      %p174 = scmp.lt.s32.totalorder %s9, 4
      // Predicated region
      $region13: #{transformer_encoder.7} parent=5 // pred_check
        %p175 = pneg %p174
      $region14: #{transformer_encoder.7} parent=5 // pred_check_branch
        %177 = sbr.rel (%p175) target = $region16
      $region15: #{transformer_encoder.7} parent=5 // pred_region
        // Predicated region
        $region17: #{transformer_encoder.7} parent=15 // pred_check
          %p178 = pneg %p59
        $region18: #{transformer_encoder.7} parent=15 // pred_check_branch
          %180 = sbr.rel (%p178) target = $region20
        $region19: #{transformer_encoder.7} parent=15 // pred_region
          %s181 = sand.u32 %s49, 1
          %s182 = sand.u32 %s49, 1
          %s183 = smul.addr %s182, 8
          %s184 = scalar_lea.vmem [#allocation5], %s183
          %s185 = sadd.s32 %s16, %s18
          %s186 = smul.u32 2, %s185
          %s187 = smul.addr %s186, 6
          %s188 = sadd.s32 %s17, %s187
          %s189 = smul.addr %s188, 4
          %s190 = scalar_lea.vmem %s0, %s189
          // Predicated region
          $region21: #{transformer_encoder.7} parent=19 // pred_check
            _
          $region22: #{transformer_encoder.7} parent=19 // pred_check_branch
            %192 = sbr.rel (0) target = $region24
          $region23: #{transformer_encoder.7} parent=19 // pred_region
            // Predicated region
            $region25: #{transformer_encoder.7} parent=23 // pred_check
              _
            $region26: #{transformer_encoder.7} parent=23 // pred_check_branch
              %194 = sbr.rel target = $region28
            $region27: #{transformer_encoder.7} parent=23 // pred_region
              // Predicated region
              $region40: #{transformer_encoder.7} parent=27 // pred_check
                _
              $region41: #{transformer_encoder.7} parent=27 // pred_check_branch
                %211 = sbr.rel (0) target = $region43
              $region42: #{transformer_encoder.7} parent=27 // pred_region
                loop: start=0, step=1, limit=1
                $region44: #{transformer_encoder.7} parent=42 // loop_pre_header
                  _
                $region45: #{transformer_encoder.7} parent=42 // loop_header
                  %s213 = sphi 0, %s217
                  %p214 = scmp.ge.s32.totalorder %s213, 1
                  %s218 = sphi %s190, %s190
                  %s219 = sphi %s184, %s184
                $region46: #{transformer_encoder.7} parent=42 // loop_header_branch
                  %216 = sbr.rel (%p214) target = $region50
                $region47: #{transformer_encoder.7} parent=42 // loop_body
                  _
                $region48: #{transformer_encoder.7} parent=42 // loop_footer
                  %s217 = sadd.s32 1, %s213
                $region49: #{transformer_encoder.7} parent=42 // loop_footer_branch
                  %212 = sbr.rel target = $region45
                $region50: #{transformer_encoder.7} parent=42 // loop_exit
                  _
                loop: start=0, step=1, limit=1
                $region51: #{transformer_encoder.7} parent=42 // loop_pre_header
                  _
                $region52: #{transformer_encoder.7} parent=42 // loop_header
                  %s222 = sphi 0, %s226
                  %p223 = scmp.ge.s32.totalorder %s222, 1
                  %s227 = sphi %s190, %s190
                  %s228 = sphi %s184, %s184
                $region53: #{transformer_encoder.7} parent=42 // loop_header_branch
                  %225 = sbr.rel (%p223) target = $region57
                $region54: #{transformer_encoder.7} parent=42 // loop_body
                  %v229 = vld [vmem:[%s227] sm:$0xf]
                  %230 = vst [vmem:[%s228] sm:$0xf] %v229
                  %v231 = vld [vmem:[%s227 + $0x18] sm:$0xf]
                  %232 = vst [vmem:[%s228 + $0x4] sm:$0xf] %v231
                $region55: #{transformer_encoder.7} parent=42 // loop_footer
                  %s226 = sadd.s32 1, %s222
                $region56: #{transformer_encoder.7} parent=42 // loop_footer_branch
                  %221 = sbr.rel target = $region52
                $region57: #{transformer_encoder.7} parent=42 // loop_exit
                  _
              $region43: #{transformer_encoder.7} parent=27 // pred_fallthru
                _
            $region28: #{transformer_encoder.7} parent=23 // pred_fallthru
              _
            // Predicated region
            $region29: #{transformer_encoder.7} parent=23 // pred_check
              _
            $region30: #{transformer_encoder.7} parent=23 // pred_check_branch
              %196 = sbr.rel (0) target = $region32
            $region31: #{transformer_encoder.7} parent=23 // pred_region
              loop: start=0, step=1, limit=1
              $region33: #{transformer_encoder.7} parent=31 // loop_pre_header
                _
              $region34: #{transformer_encoder.7} parent=31 // loop_header
                %s199 = sphi 0, %s203
                %p200 = scmp.ge.s32.totalorder %s199, 1
                %s204 = sphi %s190, %s190
                %s205 = sphi %s184, %s184
              $region35: #{transformer_encoder.7} parent=31 // loop_header_branch
                %202 = sbr.rel (%p200) target = $region39
              $region36: #{transformer_encoder.7} parent=31 // loop_body
                %v206 = vld [vmem:[%s204] sm:$0xf]
                %207 = vst [vmem:[%s205] sm:$0xf] %v206
                %v208 = vld [vmem:[%s204 + $0x18] sm:$0xf]
                %209 = vst [vmem:[%s205 + $0x4] sm:$0xf] %v208
              $region37: #{transformer_encoder.7} parent=31 // loop_footer
                %s203 = sadd.s32 1, %s199
              $region38: #{transformer_encoder.7} parent=31 // loop_footer_branch
                %198 = sbr.rel target = $region34
              $region39: #{transformer_encoder.7} parent=31 // loop_exit
                _
            $region32: #{transformer_encoder.7} parent=23 // pred_fallthru
              _
          $region24: #{transformer_encoder.7} parent=19 // pred_fallthru
            _
          %233 = vnop
        $region20: #{transformer_encoder.7} parent=15 // pred_fallthru
          _
        // Predicated region
        $region58: #{transformer_encoder.7} parent=15 // pred_check
          %p234 = pneg %p91
        $region59: #{transformer_encoder.7} parent=15 // pred_check_branch
          %236 = sbr.rel (%p234) target = $region61
        $region60: #{transformer_encoder.7} parent=15 // pred_region
          %s237 = sand.u32 %s81, 1
          %s238 = sand.u32 %s81, 1
          %s239 = smul.addr %s238, 8
          %s240 = scalar_lea.vmem [#allocation6], %s239
          %s241 = sadd.s32 %s16, %s19
          %s242 = sadd.s32 %s17, 2
          %s243 = smul.u32 2, %s241
          %s244 = smul.addr %s243, 6
          %s245 = sadd.s32 %s242, %s244
          %s246 = smul.addr %s245, 4
          %s247 = scalar_lea.vmem %s1, %s246
          // Predicated region
          $region62: #{transformer_encoder.7} parent=60 // pred_check
            _
          $region63: #{transformer_encoder.7} parent=60 // pred_check_branch
            %249 = sbr.rel (0) target = $region65
          $region64: #{transformer_encoder.7} parent=60 // pred_region
            // Predicated region
            $region66: #{transformer_encoder.7} parent=64 // pred_check
              _
            $region67: #{transformer_encoder.7} parent=64 // pred_check_branch
              %251 = sbr.rel target = $region69
            $region68: #{transformer_encoder.7} parent=64 // pred_region
              // Predicated region
              $region81: #{transformer_encoder.7} parent=68 // pred_check
                _
              $region82: #{transformer_encoder.7} parent=68 // pred_check_branch
                %268 = sbr.rel (0) target = $region84
              $region83: #{transformer_encoder.7} parent=68 // pred_region
                loop: start=0, step=1, limit=1
                $region85: #{transformer_encoder.7} parent=83 // loop_pre_header
                  _
                $region86: #{transformer_encoder.7} parent=83 // loop_header
                  %s270 = sphi 0, %s274
                  %p271 = scmp.ge.s32.totalorder %s270, 1
                  %s275 = sphi %s247, %s247
                  %s276 = sphi %s240, %s240
                $region87: #{transformer_encoder.7} parent=83 // loop_header_branch
                  %273 = sbr.rel (%p271) target = $region91
                $region88: #{transformer_encoder.7} parent=83 // loop_body
                  _
                $region89: #{transformer_encoder.7} parent=83 // loop_footer
                  %s274 = sadd.s32 1, %s270
                $region90: #{transformer_encoder.7} parent=83 // loop_footer_branch
                  %269 = sbr.rel target = $region86
                $region91: #{transformer_encoder.7} parent=83 // loop_exit
                  _
                loop: start=0, step=1, limit=1
                $region92: #{transformer_encoder.7} parent=83 // loop_pre_header
                  _
                $region93: #{transformer_encoder.7} parent=83 // loop_header
                  %s279 = sphi 0, %s283
                  %p280 = scmp.ge.s32.totalorder %s279, 1
                  %s284 = sphi %s247, %s247
                  %s285 = sphi %s240, %s240
                $region94: #{transformer_encoder.7} parent=83 // loop_header_branch
                  %282 = sbr.rel (%p280) target = $region98
                $region95: #{transformer_encoder.7} parent=83 // loop_body
                  %v286 = vld [vmem:[%s284] sm:$0xf]
                  %287 = vst [vmem:[%s285] sm:$0xf] %v286
                  %v288 = vld [vmem:[%s284 + $0x18] sm:$0xf]
                  %289 = vst [vmem:[%s285 + $0x4] sm:$0xf] %v288
                $region96: #{transformer_encoder.7} parent=83 // loop_footer
                  %s283 = sadd.s32 1, %s279
                $region97: #{transformer_encoder.7} parent=83 // loop_footer_branch
                  %278 = sbr.rel target = $region93
                $region98: #{transformer_encoder.7} parent=83 // loop_exit
                  _
              $region84: #{transformer_encoder.7} parent=68 // pred_fallthru
                _
            $region69: #{transformer_encoder.7} parent=64 // pred_fallthru
              _
            // Predicated region
            $region70: #{transformer_encoder.7} parent=64 // pred_check
              _
            $region71: #{transformer_encoder.7} parent=64 // pred_check_branch
              %253 = sbr.rel (0) target = $region73
            $region72: #{transformer_encoder.7} parent=64 // pred_region
              loop: start=0, step=1, limit=1
              $region74: #{transformer_encoder.7} parent=72 // loop_pre_header
                _
              $region75: #{transformer_encoder.7} parent=72 // loop_header
                %s256 = sphi 0, %s260
                %p257 = scmp.ge.s32.totalorder %s256, 1
                %s261 = sphi %s247, %s247
                %s262 = sphi %s240, %s240
              $region76: #{transformer_encoder.7} parent=72 // loop_header_branch
                %259 = sbr.rel (%p257) target = $region80
              $region77: #{transformer_encoder.7} parent=72 // loop_body
                %v263 = vld [vmem:[%s261] sm:$0xf]
                %264 = vst [vmem:[%s262] sm:$0xf] %v263
                %v265 = vld [vmem:[%s261 + $0x18] sm:$0xf]
                %266 = vst [vmem:[%s262 + $0x4] sm:$0xf] %v265
              $region78: #{transformer_encoder.7} parent=72 // loop_footer
                %s260 = sadd.s32 1, %s256
              $region79: #{transformer_encoder.7} parent=72 // loop_footer_branch
                %255 = sbr.rel target = $region75
              $region80: #{transformer_encoder.7} parent=72 // loop_exit
                _
            $region73: #{transformer_encoder.7} parent=64 // pred_fallthru
              _
          $region65: #{transformer_encoder.7} parent=60 // pred_fallthru
            _
          %290 = vnop
        $region61: #{transformer_encoder.7} parent=15 // pred_fallthru
          _
        // Predicated region
        $region99: #{transformer_encoder.7} parent=15 // pred_check
          %p291 = pneg %p123
        $region100: #{transformer_encoder.7} parent=15 // pred_check_branch
          %293 = sbr.rel (%p291) target = $region102
        $region101: #{transformer_encoder.7} parent=15 // pred_region
          %s294 = sand.u32 %s113, 1
          %s295 = sand.u32 %s113, 1
          %s296 = smul.addr %s295, 8
          %s297 = scalar_lea.vmem [#allocation7], %s296
          %s298 = sadd.s32 %s16, %s19
          %s299 = sadd.s32 %s17, 4
          %s300 = smul.u32 2, %s298
          %s301 = smul.addr %s300, 6
          %s302 = sadd.s32 %s299, %s301
          %s303 = smul.addr %s302, 4
          %s304 = scalar_lea.vmem %s2, %s303
          // Predicated region
          $region103: #{transformer_encoder.7} parent=101 // pred_check
            _
          $region104: #{transformer_encoder.7} parent=101 // pred_check_branch
            %306 = sbr.rel (0) target = $region106
          $region105: #{transformer_encoder.7} parent=101 // pred_region
            // Predicated region
            $region107: #{transformer_encoder.7} parent=105 // pred_check
              _
            $region108: #{transformer_encoder.7} parent=105 // pred_check_branch
              %308 = sbr.rel target = $region110
            $region109: #{transformer_encoder.7} parent=105 // pred_region
              // Predicated region
              $region122: #{transformer_encoder.7} parent=109 // pred_check
                _
              $region123: #{transformer_encoder.7} parent=109 // pred_check_branch
                %325 = sbr.rel (0) target = $region125
              $region124: #{transformer_encoder.7} parent=109 // pred_region
                loop: start=0, step=1, limit=1
                $region126: #{transformer_encoder.7} parent=124 // loop_pre_header
                  _
                $region127: #{transformer_encoder.7} parent=124 // loop_header
                  %s327 = sphi 0, %s331
                  %p328 = scmp.ge.s32.totalorder %s327, 1
                  %s332 = sphi %s304, %s304
                  %s333 = sphi %s297, %s297
                $region128: #{transformer_encoder.7} parent=124 // loop_header_branch
                  %330 = sbr.rel (%p328) target = $region132
                $region129: #{transformer_encoder.7} parent=124 // loop_body
                  _
                $region130: #{transformer_encoder.7} parent=124 // loop_footer
                  %s331 = sadd.s32 1, %s327
                $region131: #{transformer_encoder.7} parent=124 // loop_footer_branch
                  %326 = sbr.rel target = $region127
                $region132: #{transformer_encoder.7} parent=124 // loop_exit
                  _
                loop: start=0, step=1, limit=1
                $region133: #{transformer_encoder.7} parent=124 // loop_pre_header
                  _
                $region134: #{transformer_encoder.7} parent=124 // loop_header
                  %s336 = sphi 0, %s340
                  %p337 = scmp.ge.s32.totalorder %s336, 1
                  %s341 = sphi %s304, %s304
                  %s342 = sphi %s297, %s297
                $region135: #{transformer_encoder.7} parent=124 // loop_header_branch
                  %339 = sbr.rel (%p337) target = $region139
                $region136: #{transformer_encoder.7} parent=124 // loop_body
                  %v343 = vld [vmem:[%s341] sm:$0xf]
                  %344 = vst [vmem:[%s342] sm:$0xf] %v343
                  %v345 = vld [vmem:[%s341 + $0x18] sm:$0xf]
                  %346 = vst [vmem:[%s342 + $0x4] sm:$0xf] %v345
                $region137: #{transformer_encoder.7} parent=124 // loop_footer
                  %s340 = sadd.s32 1, %s336
                $region138: #{transformer_encoder.7} parent=124 // loop_footer_branch
                  %335 = sbr.rel target = $region134
                $region139: #{transformer_encoder.7} parent=124 // loop_exit
                  _
              $region125: #{transformer_encoder.7} parent=109 // pred_fallthru
                _
            $region110: #{transformer_encoder.7} parent=105 // pred_fallthru
              _
            // Predicated region
            $region111: #{transformer_encoder.7} parent=105 // pred_check
              _
            $region112: #{transformer_encoder.7} parent=105 // pred_check_branch
              %310 = sbr.rel (0) target = $region114
            $region113: #{transformer_encoder.7} parent=105 // pred_region
              loop: start=0, step=1, limit=1
              $region115: #{transformer_encoder.7} parent=113 // loop_pre_header
                _
              $region116: #{transformer_encoder.7} parent=113 // loop_header
                %s313 = sphi 0, %s317
                %p314 = scmp.ge.s32.totalorder %s313, 1
                %s318 = sphi %s304, %s304
                %s319 = sphi %s297, %s297
              $region117: #{transformer_encoder.7} parent=113 // loop_header_branch
                %316 = sbr.rel (%p314) target = $region121
              $region118: #{transformer_encoder.7} parent=113 // loop_body
                %v320 = vld [vmem:[%s318] sm:$0xf]
                %321 = vst [vmem:[%s319] sm:$0xf] %v320
                %v322 = vld [vmem:[%s318 + $0x18] sm:$0xf]
                %323 = vst [vmem:[%s319 + $0x4] sm:$0xf] %v322
              $region119: #{transformer_encoder.7} parent=113 // loop_footer
                %s317 = sadd.s32 1, %s313
              $region120: #{transformer_encoder.7} parent=113 // loop_footer_branch
                %312 = sbr.rel target = $region116
              $region121: #{transformer_encoder.7} parent=113 // loop_exit
                _
            $region114: #{transformer_encoder.7} parent=105 // pred_fallthru
              _
          $region106: #{transformer_encoder.7} parent=101 // pred_fallthru
            _
          %347 = vnop
        $region102: #{transformer_encoder.7} parent=15 // pred_fallthru
          _
      $region16: #{transformer_encoder.7} parent=5 // pred_fallthru
        _
      %p348 = scmp.le.s32.totalorder 1, %s9
      %p349 = scmp.lt.s32.totalorder %s9, 5
      %p350 = pnand %p348, %p349
      %p351 = pneg %p350
      // Predicated region
      $region140: #{transformer_encoder.7} parent=5 // pred_check
        _
      $region141: #{transformer_encoder.7} parent=5 // pred_check_branch
        %353 = sbr.rel (%p350) target = $region143
      $region142: #{transformer_encoder.7} parent=5 // pred_region
        %s354 = ssub.s32 %s9, 1
        %s355 = sand.u32 %s52, 1
        %s356 = sand.u32 %s52, 1
        %s357 = smul.addr %s356, 8
        %s358 = scalar_lea.vmem [#allocation5], %s357
        // Predicated region
        $region144: #{transformer_encoder.7} parent=142 // pred_check
          %p359 = pneg %p65
        $region145: #{transformer_encoder.7} parent=142 // pred_check_branch
          %361 = sbr.rel (%p359) target = $region147
        $region146: #{transformer_encoder.7} parent=142 // pred_region
          _
        $region147: #{transformer_encoder.7} parent=142 // pred_fallthru
          _
        %s362 = sand.u32 %s84, 1
        %s363 = sand.u32 %s84, 1
        %s364 = smul.addr %s363, 8
        %s365 = scalar_lea.vmem [#allocation6], %s364
        // Predicated region
        $region148: #{transformer_encoder.7} parent=142 // pred_check
          %p366 = pneg %p97
        $region149: #{transformer_encoder.7} parent=142 // pred_check_branch
          %368 = sbr.rel (%p366) target = $region151
        $region150: #{transformer_encoder.7} parent=142 // pred_region
          _
        $region151: #{transformer_encoder.7} parent=142 // pred_fallthru
          _
        %s369 = sand.u32 %s116, 1
        %s370 = sand.u32 %s116, 1
        %s371 = smul.addr %s370, 8
        %s372 = scalar_lea.vmem [#allocation7], %s371
        // Predicated region
        $region152: #{transformer_encoder.7} parent=142 // pred_check
          %p373 = pneg %p129
        $region153: #{transformer_encoder.7} parent=142 // pred_check_branch
          %375 = sbr.rel (%p373) target = $region155
        $region154: #{transformer_encoder.7} parent=142 // pred_region
          _
        $region155: #{transformer_encoder.7} parent=142 // pred_fallthru
          _
        %s376 = sand.u32 %s52, 1
        %s377 = sand.u32 %s52, 1
        %s378 = smul.addr %s377, 8
        %s379 = scalar_lea.vmem [#allocation5], %s378
        %p380 = pneg %p65
        %p381 = pneg %p62
        %s382 = sand.u32 %s84, 1
        %s383 = sand.u32 %s84, 1
        %s384 = smul.addr %s383, 8
        %s385 = scalar_lea.vmem [#allocation6], %s384
        %p386 = pneg %p97
        %p387 = pneg %p94
        %s388 = sand.u32 %s116, 1
        %s389 = sand.u32 %s116, 1
        %s390 = smul.addr %s389, 8
        %s391 = scalar_lea.vmem [#allocation7], %s390
        %p392 = pneg %p129
        %p393 = pneg %p126
        %p394 = pneg %p159
        %p395 = pneg %p156
        %s396 = sand.u32 %s146, 1
        %s397 = sand.u32 %s146, 1
        %s398 = smul.addr %s397, 8
        %s399 = scalar_lea.vmem [#allocation8], %s398
        %s400 = sadd.s32 %s20, %s22
        %s401 = smul.u32 2, %s400
        %s402 = sadd.s32 %s20, %s23
        %s403 = sadd.s32 %s21, 2
        %s404 = smul.u32 2, %s402
        %s405 = sadd.s32 %s20, %s23
        %s406 = sadd.s32 %s21, 4
        %s407 = smul.u32 2, %s405
        %s408 = sadd.s32 %s20, %s22
        %s409 = smul.u32 2, %s408
        %p411 = scmp.eq.s32.totalorder %s23, 0
        // Predicated region
        $region156: #{transformer_encoder.7} parent=142 // pred_check
          %p412 = pneg %p411
        $region157: #{transformer_encoder.7} parent=142 // pred_check_branch
          %414 = sbr.rel (%p412) target = $region159
        $region158: #{transformer_encoder.7} parent=142 // pred_region
          %vm415 = vcmask 7168
          %416 = vst.msk [vmem:[#allocation2] sm:$0xff] %vm415, -inf
          %417 = vst.msk [vmem:[#allocation2 + $0x8] sm:$0xff] %vm415, -inf
          %418 = vst.msk [vmem:[#allocation3] sm:$0xff] %vm415, 0.0
          %419 = vst.msk [vmem:[#allocation3 + $0x8] sm:$0xff] %vm415, 0.0
          %420 = vst [vmem:[#allocation4] sm:$0xff] 0.0
          %421 = vst [vmem:[#allocation4 + $0x8] sm:$0xff] 0.0
        $region159: #{transformer_encoder.7} parent=142 // pred_fallthru
          _
        %v422 = vld [vmem:[%s358] sm:$0xf]
        %v423 = vld [vmem:[%s358 + $0x4] sm:$0xf]
        %v424 = vld [vmem:[%s365] sm:$0xf]
        %v425 = vld [vmem:[%s365 + $0x4] sm:$0xf]
        %v426 = vld [vmem:[%s372] sm:$0xf]
        %v427 = vld [vmem:[%s372 + $0x4] sm:$0xf]
        %v430 = vunpack.c.l.b16 %v422
        %v431 = vunpack.c.l.b16 %v423
        %v432 = vpack.c.b16 %v431, %v430
        %v436 = vunpack.c.l.b16 %v424
        %v437 = vunpack.c.l.b16 %v425
        %v438 = vpack.c.b16 %v437, %v436
        %440 = vmatprep.subr.bf16.mxu0 0
        %441 = vmatpush1.bf16.xpose.msra.mxu0 %v438
        %442 = vmatprep.subr.bf16.mxu0 0
        %443 = vmatpush1.bf16.xpose.msra.mxu0 0
        %444 = vmatprep.subr.bf16.mxu0 0
        %445 = vmatpush1.bf16.xpose.msra.mxu0 0
        %446 = vmatprep.subr.bf16.mxu0 0
        %447 = vmatpush1.bf16.xpose.msra.mxu0 0
        %448 = vmatprep.subr.bf16.mxu0 0
        %449 = vmatpush1.bf16.xpose.msra.mxu0 0
        %450 = vmatprep.subr.bf16.mxu0 0
        %451 = vmatpush1.bf16.xpose.msra.mxu0 0
        %452 = vmatprep.subr.bf16.mxu0 0
        %453 = vmatpush1.bf16.xpose.msra.mxu0 0
        %454 = vmatprep.subr.bf16.mxu0 0
        %455 = vmatpush1.bf16.xpose.msra.mxu0 0
        %456 = vmatprep.subr.bf16.mxu0 0
        %457 = vmatpush1.bf16.xpose.msra.mxu0 0
        %458 = vmatprep.subr.bf16.mxu0 0
        %459 = vmatpush1.bf16.xpose.msra.mxu0 0
        %460 = vmatprep.subr.bf16.mxu0 0
        %461 = vmatpush1.bf16.xpose.msra.mxu0 0
        %462 = vmatprep.subr.bf16.mxu0 0
        %463 = vmatpush1.bf16.xpose.msra.mxu0 0
        %464 = vmatprep.subr.bf16.mxu0 0
        %465 = vmatpush1.bf16.xpose.msra.mxu0 0
        %466 = vmatprep.subr.bf16.mxu0 0
        %467 = vmatpush1.bf16.xpose.msra.mxu0 0
        %468 = vmatprep.subr.bf16.mxu0 0
        %469 = vmatpush1.bf16.xpose.msra.mxu0 0
        %470 = vmatprep.subr.bf16.mxu0 0
        %471 = vmatpush1.bf16.xpose.msra.mxu0 0
        %472 = vmatprep.mubr.bf16.mxu0 0
        %473 = vmatmul.mubr.bf16.gmra.mrb[0].mxu0 %v432
        %v474 = vpop.f32.mrb[0].mxu0
        %v475 = vadd.f32 0.0, %v474
        %v476 = vpop.f32.mrb[0].mxu0
        %v477 = vpop.f32.mrb[0].mxu0
        %v478 = vadd.f32 0.0, %v477
        %v479 = vpop.f32.mrb[0].mxu0
        %480 = vdwg.mxu0
        %v481 = vld [vmem:[#allocation2] sm:$0xff]
        %v482 = vld [vmem:[#allocation2 + $0x8] sm:$0xff]
        %vm483 = vcmask 130048
        %v484 = vsel %vm483, %v475, -inf
        %485 = vmax.xlane.f32.xlu0 %v484
        %v486 = vpop.xlane.xlu0 %485
        %v487 = vsel %vm483, %v478, -inf
        %488 = vmax.xlane.f32.xlu0 %v487
        %v489 = vpop.xlane.xlu0 %488
        %v490 = vmax.f32 %v481, %v486
        %v491 = vmax.f32 %v482, %v489
        %v492 = vsub.f32 %v481, %v490
        %v493 = vsub.f32 %v482, %v491
        %v494 = vmul.f32 %v492, 1.442695
        %v495 = vpow.pop %v494
        %v496 = vmul.f32 %v493, 1.442695
        %v497 = vpow.pop %v496
        %499 = vset.pattern.permute.xlu0 0
        %500 = vperm.xlu0 %499, %v490
        %v501 = vpop.permute.xlu0 %500
        %504 = vset.pattern.permute.xlu0 0
        %505 = vperm.xlu0 %504, %v491
        %v506 = vpop.permute.xlu0 %505
        %v508 = vsub.f32 %v475, %v501
        %v509 = vsub.f32 %v478, %v506
        %v510 = vmul.f32 %v508, 1.442695
        %v511 = vpow.pop %v510
        %v512 = vmul.f32 %v509, 1.442695
        %v513 = vpow.pop %v512
        %v514 = vld [vmem:[#allocation3] sm:$0xff]
        %v515 = vld [vmem:[#allocation3 + $0x8] sm:$0xff]
        %v516 = vmul.f32 %v495, %v514
        %v517 = vmul.f32 %v497, %v515
        %v518 = vsel %vm483, %v511, 0.0
        %519 = vadd.xlane.f32.xlu0 %v518
        %v520 = vpop.xlane.xlu0 %519
        %v521 = vsel %vm483, %v513, 0.0
        %522 = vadd.xlane.f32.xlu0 %v521
        %v523 = vpop.xlane.xlu0 %522
        %v524 = vadd.f32 %v516, %v520
        %v525 = vadd.f32 %v517, %v523
        %vm526 = vcmask 7168
        %527 = vst.msk [vmem:[#allocation3] sm:$0xff] %vm526, %v524
        %528 = vst.msk [vmem:[#allocation3 + $0x8] sm:$0xff] %vm526, %v525
        %v529 = vld [vmem:[#allocation4] sm:$0xff]
        %v530 = vld [vmem:[#allocation4 + $0x8] sm:$0xff]
        %532 = vset.pattern.permute.xlu0 0
        %533 = vperm.xlu0 %532, %v495
        %v534 = vpop.permute.xlu0 %533
        %537 = vset.pattern.permute.xlu0 0
        %538 = vperm.xlu0 %537, %v497
        %v539 = vpop.permute.xlu0 %538
        %v541 = vmul.f32 %v534, %v529
        %v542 = vmul.f32 %v539, %v530
        %v543 = vpack.c.bf16 %v513, %v511
        %v546 = vunpack.c.l.b16 %v426
        %v547 = vunpack.c.l.b16 %v427
        %v548 = vpack.c.b16 %v547, %v546
        %v551 = vsel %vm483, %v543, 0
        %553 = vmatprep.subr.bf16.mxu0 0
        %554 = vmatpush1.bf16.msra.mxu0 %v548
        %555 = vmatprep.subr.bf16.mxu0 0
        %556 = vmatpush1.bf16.msra.mxu0 0
        %557 = vmatprep.subr.bf16.mxu0 0
        %558 = vmatpush1.bf16.msra.mxu0 0
        %559 = vmatprep.subr.bf16.mxu0 0
        %560 = vmatpush1.bf16.msra.mxu0 0
        %561 = vmatprep.subr.bf16.mxu0 0
        %562 = vmatpush1.bf16.msra.mxu0 0
        %563 = vmatprep.subr.bf16.mxu0 0
        %564 = vmatpush1.bf16.msra.mxu0 0
        %565 = vmatprep.subr.bf16.mxu0 0
        %566 = vmatpush1.bf16.msra.mxu0 0
        %567 = vmatprep.subr.bf16.mxu0 0
        %568 = vmatpush1.bf16.msra.mxu0 0
        %569 = vmatprep.subr.bf16.mxu0 0
        %570 = vmatpush1.bf16.msra.mxu0 0
        %571 = vmatprep.subr.bf16.mxu0 0
        %572 = vmatpush1.bf16.msra.mxu0 0
        %573 = vmatprep.subr.bf16.mxu0 0
        %574 = vmatpush1.bf16.msra.mxu0 0
        %575 = vmatprep.subr.bf16.mxu0 0
        %576 = vmatpush1.bf16.msra.mxu0 0
        %577 = vmatprep.subr.bf16.mxu0 0
        %578 = vmatpush1.bf16.msra.mxu0 0
        %579 = vmatprep.subr.bf16.mxu0 0
        %580 = vmatpush1.bf16.msra.mxu0 0
        %581 = vmatprep.subr.bf16.mxu0 0
        %582 = vmatpush1.bf16.msra.mxu0 0
        %583 = vmatprep.subr.bf16.mxu0 0
        %584 = vmatpush1.bf16.msra.mxu0 0
        %585 = vmatprep.mubr.bf16.mxu0 0
        %586 = vmatmul.mubr.bf16.gmra.mrb[0].mxu0 %v551
        %v587 = vpop.f32.mrb[0].mxu0
        %v588 = vadd.f32 0.0, %v587
        %v589 = vpop.f32.mrb[0].mxu0
        %v590 = vpop.f32.mrb[0].mxu0
        %v591 = vadd.f32 0.0, %v590
        %v592 = vpop.f32.mrb[0].mxu0
        %593 = vdwg.mxu0
        %v594 = vadd.f32 %v541, %v588
        %v595 = vadd.f32 %v542, %v591
        %596 = vst [vmem:[#allocation4] sm:$0xff] %v594
        %597 = vst [vmem:[#allocation4 + $0x8] sm:$0xff] %v595
        %598 = vst.msk [vmem:[#allocation2] sm:$0xff] %vm526, %v490
        %599 = vst.msk [vmem:[#allocation2 + $0x8] sm:$0xff] %vm526, %v491
        // Predicated region
        $region160: #{transformer_encoder.7} parent=142 // pred_check
          %p600 = pneg %p411
        $region161: #{transformer_encoder.7} parent=142 // pred_check_branch
          %602 = sbr.rel (%p600) target = $region163
        $region162: #{transformer_encoder.7} parent=142 // pred_region
          %v603 = vld [vmem:[#allocation3] sm:$0xff]
          %v604 = vld [vmem:[#allocation3 + $0x8] sm:$0xff]
          %v605 = vrcp.pop %v603
          %v606 = vrcp.pop %v604
          %v607 = vld [vmem:[#allocation4] sm:$0xff]
          %v608 = vld [vmem:[#allocation4 + $0x8] sm:$0xff]
          %610 = vset.pattern.permute.xlu0 0
          %611 = vperm.xlu0 %610, %v605
          %v612 = vpop.permute.xlu0 %611
          %615 = vset.pattern.permute.xlu0 0
          %616 = vperm.xlu0 %615, %v606
          %v617 = vpop.permute.xlu0 %616
          %v619 = vmul.f32 %v607, %v612
          %v620 = vmul.f32 %v608, %v617
          %v621 = vpack.c.bf16 %v620, %v619
          %v623 = vunpack.c.l.b16 %v621
          %v624 = vunpack.c.h.b16 %v621
          %v625 = vpack.c.b16 %v623, %v623
          %v626 = vpack.c.b16 %v624, %v624
          %629 = vst [vmem:[%s399] sm:$0xf] %v625
          %630 = vst [vmem:[%s399 + $0x4] sm:$0xf] %v626
        $region163: #{transformer_encoder.7} parent=142 // pred_fallthru
          _
        %s631 = sand.u32 %s146, 1
        %s632 = sand.u32 %s146, 1
        %s633 = smul.addr %s632, 8
        %s634 = scalar_lea.vmem [#allocation8], %s633
        // Predicated region
        $region164: #{transformer_encoder.7} parent=142 // pred_check
          %p635 = pneg %p156
        $region165: #{transformer_encoder.7} parent=142 // pred_check_branch
          %637 = sbr.rel (%p635) target = $region167
        $region166: #{transformer_encoder.7} parent=142 // pred_region
          %s638 = sadd.s32 %s20, %s22
          %s639 = smul.u32 2, %s638
          %s640 = smul.addr %s639, 2
          %s641 = sadd.s32 %s21, %s640
          %s642 = smul.addr %s641, 4
          %s643 = scalar_lea.vmem %s3, %s642
          // Predicated region
          $region168: #{transformer_encoder.7} parent=166 // pred_check
            _
          $region169: #{transformer_encoder.7} parent=166 // pred_check_branch
            %645 = sbr.rel (0) target = $region171
          $region170: #{transformer_encoder.7} parent=166 // pred_region
            // Predicated region
            $region172: #{transformer_encoder.7} parent=170 // pred_check
              _
            $region173: #{transformer_encoder.7} parent=170 // pred_check_branch
              %647 = sbr.rel target = $region175
            $region174: #{transformer_encoder.7} parent=170 // pred_region
              // Predicated region
              $region187: #{transformer_encoder.7} parent=174 // pred_check
                _
              $region188: #{transformer_encoder.7} parent=174 // pred_check_branch
                %664 = sbr.rel (0) target = $region190
              $region189: #{transformer_encoder.7} parent=174 // pred_region
                loop: start=0, step=1, limit=1
                $region191: #{transformer_encoder.7} parent=189 // loop_pre_header
                  _
                $region192: #{transformer_encoder.7} parent=189 // loop_header
                  %s666 = sphi 0, %s670
                  %p667 = scmp.ge.s32.totalorder %s666, 1
                  %s671 = sphi %s634, %s634
                  %s672 = sphi %s643, %s643
                $region193: #{transformer_encoder.7} parent=189 // loop_header_branch
                  %669 = sbr.rel (%p667) target = $region197
                $region194: #{transformer_encoder.7} parent=189 // loop_body
                  _
                $region195: #{transformer_encoder.7} parent=189 // loop_footer
                  %s670 = sadd.s32 1, %s666
                $region196: #{transformer_encoder.7} parent=189 // loop_footer_branch
                  %665 = sbr.rel target = $region192
                $region197: #{transformer_encoder.7} parent=189 // loop_exit
                  _
                loop: start=0, step=1, limit=1
                $region198: #{transformer_encoder.7} parent=189 // loop_pre_header
                  _
                $region199: #{transformer_encoder.7} parent=189 // loop_header
                  %s675 = sphi 0, %s679
                  %p676 = scmp.ge.s32.totalorder %s675, 1
                  %s680 = sphi %s634, %s634
                  %s681 = sphi %s643, %s643
                $region200: #{transformer_encoder.7} parent=189 // loop_header_branch
                  %678 = sbr.rel (%p676) target = $region204
                $region201: #{transformer_encoder.7} parent=189 // loop_body
                  %v682 = vld [vmem:[%s680] sm:$0xf]
                  %683 = vst [vmem:[%s681] sm:$0xf] %v682
                  %v684 = vld [vmem:[%s680 + $0x4] sm:$0xf]
                  %685 = vst [vmem:[%s681 + $0x8] sm:$0xf] %v684
                $region202: #{transformer_encoder.7} parent=189 // loop_footer
                  %s679 = sadd.s32 1, %s675
                $region203: #{transformer_encoder.7} parent=189 // loop_footer_branch
                  %674 = sbr.rel target = $region199
                $region204: #{transformer_encoder.7} parent=189 // loop_exit
                  _
              $region190: #{transformer_encoder.7} parent=174 // pred_fallthru
                _
            $region175: #{transformer_encoder.7} parent=170 // pred_fallthru
              _
            // Predicated region
            $region176: #{transformer_encoder.7} parent=170 // pred_check
              _
            $region177: #{transformer_encoder.7} parent=170 // pred_check_branch
              %649 = sbr.rel (0) target = $region179
            $region178: #{transformer_encoder.7} parent=170 // pred_region
              loop: start=0, step=1, limit=1
              $region180: #{transformer_encoder.7} parent=178 // loop_pre_header
                _
              $region181: #{transformer_encoder.7} parent=178 // loop_header
                %s652 = sphi 0, %s656
                %p653 = scmp.ge.s32.totalorder %s652, 1
                %s657 = sphi %s634, %s634
                %s658 = sphi %s643, %s643
              $region182: #{transformer_encoder.7} parent=178 // loop_header_branch
                %655 = sbr.rel (%p653) target = $region186
              $region183: #{transformer_encoder.7} parent=178 // loop_body
                %v659 = vld [vmem:[%s657] sm:$0xf]
                %660 = vst [vmem:[%s658] sm:$0xf] %v659
                %v661 = vld [vmem:[%s657 + $0x4] sm:$0xf]
                %662 = vst [vmem:[%s658 + $0x8] sm:$0xf] %v661
              $region184: #{transformer_encoder.7} parent=178 // loop_footer
                %s656 = sadd.s32 1, %s652
              $region185: #{transformer_encoder.7} parent=178 // loop_footer_branch
                %651 = sbr.rel target = $region181
              $region186: #{transformer_encoder.7} parent=178 // loop_exit
                _
            $region179: #{transformer_encoder.7} parent=170 // pred_fallthru
              _
          $region171: #{transformer_encoder.7} parent=166 // pred_fallthru
            _
          %686 = vnop
        $region167: #{transformer_encoder.7} parent=142 // pred_fallthru
          _
      $region143: #{transformer_encoder.7} parent=5 // pred_fallthru
        _
      %p687 = scmp.le.s32.totalorder 2, %s9
      // Predicated region
      $region205: #{transformer_encoder.7} parent=5 // pred_check
        %p688 = pneg %p687
      $region206: #{transformer_encoder.7} parent=5 // pred_check_branch
        %690 = sbr.rel (%p688) target = $region208
      $region207: #{transformer_encoder.7} parent=5 // pred_region
        %s691 = ssub.s32 %s9, 2
        // Predicated region
        $region209: #{transformer_encoder.7} parent=207 // pred_check
          %p692 = pneg %p162
        $region210: #{transformer_encoder.7} parent=207 // pred_check_branch
          %694 = sbr.rel (%p692) target = $region212
        $region211: #{transformer_encoder.7} parent=207 // pred_region
          %s695 = sand.u32 %s147, 1
          %s696 = sand.u32 %s147, 1
          %s697 = smul.addr %s696, 8
          %s698 = scalar_lea.vmem [#allocation8], %s697
        $region212: #{transformer_encoder.7} parent=207 // pred_fallthru
          _
      $region208: #{transformer_encoder.7} parent=5 // pred_fallthru
        _
    $region6: #{transformer_encoder.7} parent=1 // loop_footer
      %s13 = sadd.s32 1, %s9
    $region7: #{transformer_encoder.7} parent=1 // loop_footer_branch
      %8 = sbr.rel target = $region3
    $region8: #{transformer_encoder.7} parent=1 // loop_exit
      _

// kernel: transformer_encoder.6
$region0: #{transformer_encoder.6}
  #allocation0 [shape = 'u32[]', space=smem, size = 0x4, offset = 0x4, fixed_abs, tag = 'smem constant byte address 0x4 - core index']
  #allocation1 [shape = 'u32[144,128]{1,0:T(1,128)}', space=vmem, size = 0x12000, scoped, tag = 'internal scratch']
  %s0 = inlined_call_operand.vmem [shape: bf16[32,256], index: 0, kind: input, shape index: {}]
  %s1 = inlined_call_operand.hbm [shape: bf16[256,768], index: 1, kind: input, shape index: {}]
  %s2 = inlined_call_operand.hbm [shape: f32[1,768], index: 2, kind: input, shape index: {}]
  %s3 = inlined_call_operand.vmem [shape: bf16[32,768], index: 3, kind: output, shape index: {}]
  %s4 = sld [smem:[#allocation0]]
  $region30: #{transformer_encoder.6} parent=0
    _
  %s6 = ssub.s32 1, %s4
  %s7 = scalar_select 0, %s6, %s4
  $region1: #{transformer_encoder.6} parent=0
    #allocation2 [shape = 'u8[393216]{0}', space=vmem, size = 0x60000, scoped, tag = 'input window, operand 1, single buffered']
    #allocation3 [shape = 's32[1]{0}', space=sflag, size = 0x4, scoped, tag = 'scoped memory for transformer_encoder.6']
    #allocation4 [shape = 'u8[3072]{0}', space=vmem, size = 0xc00, scoped, tag = 'input window, operand 2, single buffered']
    #allocation5 [shape = 's32[1]{0}', space=sflag, size = 0x4, scoped, tag = 'scoped memory for transformer_encoder.6']
    %8 = vsyncpa [#allocation3], 0
    %9 = vsyncpa [#allocation5], 0
    // Predicated region
    $region2: #{transformer_encoder.6} parent=1 // pred_check
      _
    $region3: #{transformer_encoder.6} parent=1 // pred_check_branch
      %11 = sbr.rel (0) target = $region5
    $region4: #{transformer_encoder.6} parent=1 // pred_region
      _
    $region5: #{transformer_encoder.6} parent=1 // pred_fallthru
      _
    // Predicated region
    $region6: #{transformer_encoder.6} parent=1 // pred_check
      _
    $region7: #{transformer_encoder.6} parent=1 // pred_check_branch
      %13 = sbr.rel (0) target = $region9
    $region8: #{transformer_encoder.6} parent=1 // pred_region
      %s15 = ssub.s32 12288, 12288
      %16 = vsyncadd [#allocation3], %s15
      %s17 = sshll.u32 [#allocation2], 4
      %s18 = int_to_ptr.vmem [resolvable:$true] %s17
      %23 = dma.hbm_to_vmem [thread:$0]  %s1, 12288, %s18, [#allocation3], 384, 384, 24
    $region9: #{transformer_encoder.6} parent=1 // pred_fallthru
      _
    // Predicated region
    $region10: #{transformer_encoder.6} parent=1 // pred_check
      _
    $region11: #{transformer_encoder.6} parent=1 // pred_check_branch
      %25 = sbr.rel (0) target = $region13
    $region12: #{transformer_encoder.6} parent=1 // pred_region
      %s27 = ssub.s32 96, 96
      %28 = vsyncadd [#allocation5], %s27
      %s30 = sshll.u32 [#allocation4], 4
      %s31 = int_to_ptr.vmem [resolvable:$true] %s30
      %33 = dma.hbm_to_vmem [thread:$0]  %s2, 96, %s31, [#allocation5]
    $region13: #{transformer_encoder.6} parent=1 // pred_fallthru
      _
    // Predicated region
    $region14: #{transformer_encoder.6} parent=1 // pred_check
      _
    $region15: #{transformer_encoder.6} parent=1 // pred_check_branch
      %35 = sbr.rel (0) target = $region17
    $region16: #{transformer_encoder.6} parent=1 // pred_region
      %36 = dma.done [#allocation3], 12288
    $region17: #{transformer_encoder.6} parent=1 // pred_fallthru
      _
    // Predicated region
    $region18: #{transformer_encoder.6} parent=1 // pred_check
      _
    $region19: #{transformer_encoder.6} parent=1 // pred_check_branch
      %38 = sbr.rel (0) target = $region21
    $region20: #{transformer_encoder.6} parent=1 // pred_region
      %39 = dma.done [#allocation5], 96
    $region21: #{transformer_encoder.6} parent=1 // pred_fallthru
      _
    %v40 = vld [vmem:[%s0] sm:$0xff]
    %v41 = vld [vmem:[%s0 + $0x8] sm:$0xff]
    %v42 = vld [vmem:[%s0 + $0x10] sm:$0xff]
    %v43 = vld [vmem:[%s0 + $0x18] sm:$0xff]
    %v44 = vld [vmem:[#allocation2] sm:$0xff]
    %v45 = vld [vmem:[#allocation2 + $0x8] sm:$0xff]
    %v46 = vld [vmem:[#allocation2 + $0x10] sm:$0xff]
    %v47 = vld [vmem:[#allocation2 + $0x18] sm:$0xff]
    %v48 = vld [vmem:[#allocation2 + $0x20] sm:$0xff]
    %v49 = vld [vmem:[#allocation2 + $0x28] sm:$0xff]
    %v50 = vld [vmem:[#allocation2 + $0x30] sm:$0xff]
    %v51 = vld [vmem:[#allocation2 + $0x38] sm:$0xff]
    %v52 = vld [vmem:[#allocation2 + $0x40] sm:$0xff]
    %v53 = vld [vmem:[#allocation2 + $0x48] sm:$0xff]
    %v54 = vld [vmem:[#allocation2 + $0x50] sm:$0xff]
    %v55 = vld [vmem:[#allocation2 + $0x58] sm:$0xff]
    %v56 = vld [vmem:[#allocation2 + $0x60] sm:$0xff]
    %v57 = vld [vmem:[#allocation2 + $0x68] sm:$0xff]
    %v58 = vld [vmem:[#allocation2 + $0x70] sm:$0xff]
    %v59 = vld [vmem:[#allocation2 + $0x78] sm:$0xff]
    %v60 = vld [vmem:[#allocation2 + $0x80] sm:$0xff]
    %v61 = vld [vmem:[#allocation2 + $0x88] sm:$0xff]
    %v62 = vld [vmem:[#allocation2 + $0x90] sm:$0xff]
    %v63 = vld [vmem:[#allocation2 + $0x98] sm:$0xff]
    %v64 = vld [vmem:[#allocation2 + $0xa0] sm:$0xff]
    %v65 = vld [vmem:[#allocation2 + $0xa8] sm:$0xff]
    %v66 = vld [vmem:[#allocation2 + $0xb0] sm:$0xff]
    %v67 = vld [vmem:[#allocation2 + $0xb8] sm:$0xff]
    %v68 = vld [vmem:[#allocation2 + $0xc0] sm:$0xff]
    %v69 = vld [vmem:[#allocation2 + $0xc8] sm:$0xff]
    %v70 = vld [vmem:[#allocation2 + $0xd0] sm:$0xff]
    %v71 = vld [vmem:[#allocation2 + $0xd8] sm:$0xff]
    %v72 = vld [vmem:[#allocation2 + $0xe0] sm:$0xff]
    %v73 = vld [vmem:[#allocation2 + $0xe8] sm:$0xff]
    %v74 = vld [vmem:[#allocation2 + $0xf0] sm:$0xff]
    %v75 = vld [vmem:[#allocation2 + $0xf8] sm:$0xff]
    %v76 = vld [vmem:[#allocation2 + $0x100] sm:$0xff]
    %v77 = vld [vmem:[#allocation2 + $0x108] sm:$0xff]
    %v78 = vld [vmem:[#allocation2 + $0x110] sm:$0xff]
    %v79 = vld [vmem:[#allocation2 + $0x118] sm:$0xff]
    %v80 = vld [vmem:[#allocation2 + $0x120] sm:$0xff]
    %v81 = vld [vmem:[#allocation2 + $0x128] sm:$0xff]
    %v82 = vld [vmem:[#allocation2 + $0x130] sm:$0xff]
    %v83 = vld [vmem:[#allocation2 + $0x138] sm:$0xff]
    %v84 = vld [vmem:[#allocation2 + $0x140] sm:$0xff]
    %v85 = vld [vmem:[#allocation2 + $0x148] sm:$0xff]
    %v86 = vld [vmem:[#allocation2 + $0x150] sm:$0xff]
    %v87 = vld [vmem:[#allocation2 + $0x158] sm:$0xff]
    %v88 = vld [vmem:[#allocation2 + $0x160] sm:$0xff]
    %v89 = vld [vmem:[#allocation2 + $0x168] sm:$0xff]
    %v90 = vld [vmem:[#allocation2 + $0x170] sm:$0xff]
    %v91 = vld [vmem:[#allocation2 + $0x178] sm:$0xff]
    %v92 = vld [vmem:[#allocation2 + $0x180] sm:$0xff]
    %v93 = vld [vmem:[#allocation2 + $0x188] sm:$0xff]
    %v94 = vld [vmem:[#allocation2 + $0x190] sm:$0xff]
    %v95 = vld [vmem:[#allocation2 + $0x198] sm:$0xff]
    %v96 = vld [vmem:[#allocation2 + $0x1a0] sm:$0xff]
    %v97 = vld [vmem:[#allocation2 + $0x1a8] sm:$0xff]
    %v98 = vld [vmem:[#allocation2 + $0x1b0] sm:$0xff]
    %v99 = vld [vmem:[#allocation2 + $0x1b8] sm:$0xff]
    %v100 = vld [vmem:[#allocation2 + $0x1c0] sm:$0xff]
    %v101 = vld [vmem:[#allocation2 + $0x1c8] sm:$0xff]
    %v102 = vld [vmem:[#allocation2 + $0x1d0] sm:$0xff]
    %v103 = vld [vmem:[#allocation2 + $0x1d8] sm:$0xff]
    %v104 = vld [vmem:[#allocation2 + $0x1e0] sm:$0xff]
    %v105 = vld [vmem:[#allocation2 + $0x1e8] sm:$0xff]
    %v106 = vld [vmem:[#allocation2 + $0x1f0] sm:$0xff]
    %v107 = vld [vmem:[#allocation2 + $0x1f8] sm:$0xff]
    %v108 = vld [vmem:[#allocation2 + $0x200] sm:$0xff]
    %v109 = vld [vmem:[#allocation2 + $0x208] sm:$0xff]
    %v110 = vld [vmem:[#allocation2 + $0x210] sm:$0xff]
    %v111 = vld [vmem:[#allocation2 + $0x218] sm:$0xff]
    %v112 = vld [vmem:[#allocation2 + $0x220] sm:$0xff]
    %v113 = vld [vmem:[#allocation2 + $0x228] sm:$0xff]
    %v114 = vld [vmem:[#allocation2 + $0x230] sm:$0xff]
    %v115 = vld [vmem:[#allocation2 + $0x238] sm:$0xff]
    %v116 = vld [vmem:[#allocation2 + $0x240] sm:$0xff]
    %v117 = vld [vmem:[#allocation2 + $0x248] sm:$0xff]
    %v118 = vld [vmem:[#allocation2 + $0x250] sm:$0xff]
    %v119 = vld [vmem:[#allocation2 + $0x258] sm:$0xff]
    %v120 = vld [vmem:[#allocation2 + $0x260] sm:$0xff]
    %v121 = vld [vmem:[#allocation2 + $0x268] sm:$0xff]
    %v122 = vld [vmem:[#allocation2 + $0x270] sm:$0xff]
    %v123 = vld [vmem:[#allocation2 + $0x278] sm:$0xff]
    %v124 = vld [vmem:[#allocation2 + $0x280] sm:$0xff]
    %v125 = vld [vmem:[#allocation2 + $0x288] sm:$0xff]
    %v126 = vld [vmem:[#allocation2 + $0x290] sm:$0xff]
    %v127 = vld [vmem:[#allocation2 + $0x298] sm:$0xff]
    %v128 = vld [vmem:[#allocation2 + $0x2a0] sm:$0xff]
    %v129 = vld [vmem:[#allocation2 + $0x2a8] sm:$0xff]
    %v130 = vld [vmem:[#allocation2 + $0x2b0] sm:$0xff]
    %v131 = vld [vmem:[#allocation2 + $0x2b8] sm:$0xff]
    %v132 = vld [vmem:[#allocation2 + $0x2c0] sm:$0xff]
    %v133 = vld [vmem:[#allocation2 + $0x2c8] sm:$0xff]
    %v134 = vld [vmem:[#allocation2 + $0x2d0] sm:$0xff]
    %v135 = vld [vmem:[#allocation2 + $0x2d8] sm:$0xff]
    %v136 = vld [vmem:[#allocation2 + $0x2e0] sm:$0xff]
    %v137 = vld [vmem:[#allocation2 + $0x2e8] sm:$0xff]
    %v138 = vld [vmem:[#allocation2 + $0x2f0] sm:$0xff]
    %v139 = vld [vmem:[#allocation2 + $0x2f8] sm:$0xff]
    %v140 = vld [vmem:[#allocation4] sm:$0x3f]
    %v142 = vlaneseq
    %v143 = vshrl.u32 %v142, 7
    %v144 = vsub.s32 0, %v143
    %v145 = vrot.slane %v140, %v144
    %v146 = vlaneseq
    %v147 = vshrl.u32 %v146, 7
    %v148 = vsub.s32 1, %v147
    %v149 = vrot.slane %v140, %v148
    %v150 = vlaneseq
    %v151 = vshrl.u32 %v150, 7
    %v152 = vsub.s32 2, %v151
    %v153 = vrot.slane %v140, %v152
    %v154 = vlaneseq
    %v155 = vshrl.u32 %v154, 7
    %v156 = vsub.s32 3, %v155
    %v157 = vrot.slane %v140, %v156
    %v158 = vlaneseq
    %v159 = vshrl.u32 %v158, 7
    %v160 = vsub.s32 4, %v159
    %v161 = vrot.slane %v140, %v160
    %v162 = vlaneseq
    %v163 = vshrl.u32 %v162, 7
    %v164 = vsub.s32 5, %v163
    %v165 = vrot.slane %v140, %v164
    %v176 = vunpack.c.l.b16 %v40
    %v177 = vunpack.c.h.b16 %v40
    %v178 = vunpack.c.l.b16 %v41
    %v179 = vunpack.c.h.b16 %v41
    %v180 = vunpack.c.l.b16 %v42
    %v181 = vunpack.c.h.b16 %v42
    %v182 = vunpack.c.l.b16 %v43
    %v183 = vunpack.c.h.b16 %v43
    %v184 = vpack.c.b16 %v178, %v176
    %v185 = vpack.c.b16 %v179, %v177
    %v186 = vpack.c.b16 %v182, %v180
    %v187 = vpack.c.b16 %v183, %v181
    %v288 = vunpack.c.l.b16 %v44
    %v289 = vunpack.c.h.b16 %v44
    %v290 = vunpack.c.l.b16 %v45
    %v291 = vunpack.c.h.b16 %v45
    %v292 = vunpack.c.l.b16 %v46
    %v293 = vunpack.c.h.b16 %v46
    %v294 = vunpack.c.l.b16 %v47
    %v295 = vunpack.c.h.b16 %v47
    %v296 = vunpack.c.l.b16 %v48
    %v297 = vunpack.c.h.b16 %v48
    %v298 = vunpack.c.l.b16 %v49
    %v299 = vunpack.c.h.b16 %v49
    %v300 = vunpack.c.l.b16 %v50
    %v301 = vunpack.c.h.b16 %v50
    %v302 = vunpack.c.l.b16 %v51
    %v303 = vunpack.c.h.b16 %v51
    %v304 = vunpack.c.l.b16 %v52
    %v305 = vunpack.c.h.b16 %v52
    %v306 = vunpack.c.l.b16 %v53
    %v307 = vunpack.c.h.b16 %v53
    %v308 = vunpack.c.l.b16 %v54
    %v309 = vunpack.c.h.b16 %v54
    %v310 = vunpack.c.l.b16 %v55
    %v311 = vunpack.c.h.b16 %v55
    %v312 = vunpack.c.l.b16 %v56
    %v313 = vunpack.c.h.b16 %v56
    %v314 = vunpack.c.l.b16 %v57
    %v315 = vunpack.c.h.b16 %v57
    %v316 = vunpack.c.l.b16 %v58
    %v317 = vunpack.c.h.b16 %v58
    %v318 = vunpack.c.l.b16 %v59
    %v319 = vunpack.c.h.b16 %v59
    %v320 = vunpack.c.l.b16 %v60
    %v321 = vunpack.c.h.b16 %v60
    %v322 = vunpack.c.l.b16 %v61
    %v323 = vunpack.c.h.b16 %v61
    %v324 = vunpack.c.l.b16 %v62
    %v325 = vunpack.c.h.b16 %v62
    %v326 = vunpack.c.l.b16 %v63
    %v327 = vunpack.c.h.b16 %v63
    %v328 = vunpack.c.l.b16 %v64
    %v329 = vunpack.c.h.b16 %v64
    %v330 = vunpack.c.l.b16 %v65
    %v331 = vunpack.c.h.b16 %v65
    %v332 = vunpack.c.l.b16 %v66
    %v333 = vunpack.c.h.b16 %v66
    %v334 = vunpack.c.l.b16 %v67
    %v335 = vunpack.c.h.b16 %v67
    %v336 = vunpack.c.l.b16 %v68
    %v337 = vunpack.c.h.b16 %v68
    %v338 = vunpack.c.l.b16 %v69
    %v339 = vunpack.c.h.b16 %v69
    %v340 = vunpack.c.l.b16 %v70
    %v341 = vunpack.c.h.b16 %v70
    %v342 = vunpack.c.l.b16 %v71
    %v343 = vunpack.c.h.b16 %v71
    %v344 = vunpack.c.l.b16 %v72
    %v345 = vunpack.c.h.b16 %v72
    %v346 = vunpack.c.l.b16 %v73
    %v347 = vunpack.c.h.b16 %v73
    %v348 = vunpack.c.l.b16 %v74
    %v349 = vunpack.c.h.b16 %v74
    %v350 = vunpack.c.l.b16 %v75
    %v351 = vunpack.c.h.b16 %v75
    %v352 = vunpack.c.l.b16 %v76
    %v353 = vunpack.c.h.b16 %v76
    %v354 = vunpack.c.l.b16 %v77
    %v355 = vunpack.c.h.b16 %v77
    %v356 = vunpack.c.l.b16 %v78
    %v357 = vunpack.c.h.b16 %v78
    %v358 = vunpack.c.l.b16 %v79
    %v359 = vunpack.c.h.b16 %v79
    %v360 = vunpack.c.l.b16 %v80
    %v361 = vunpack.c.h.b16 %v80
    %v362 = vunpack.c.l.b16 %v81
    %v363 = vunpack.c.h.b16 %v81
    %v364 = vunpack.c.l.b16 %v82
    %v365 = vunpack.c.h.b16 %v82
    %v366 = vunpack.c.l.b16 %v83
    %v367 = vunpack.c.h.b16 %v83
    %v368 = vunpack.c.l.b16 %v84
    %v369 = vunpack.c.h.b16 %v84
    %v370 = vunpack.c.l.b16 %v85
    %v371 = vunpack.c.h.b16 %v85
    %v372 = vunpack.c.l.b16 %v86
    %v373 = vunpack.c.h.b16 %v86
    %v374 = vunpack.c.l.b16 %v87
    %v375 = vunpack.c.h.b16 %v87
    %v376 = vunpack.c.l.b16 %v88
    %v377 = vunpack.c.h.b16 %v88
    %v378 = vunpack.c.l.b16 %v89
    %v379 = vunpack.c.h.b16 %v89
    %v380 = vunpack.c.l.b16 %v90
    %v381 = vunpack.c.h.b16 %v90
    %v382 = vunpack.c.l.b16 %v91
    %v383 = vunpack.c.h.b16 %v91
    %v384 = vunpack.c.l.b16 %v92
    %v385 = vunpack.c.h.b16 %v92
    %v386 = vunpack.c.l.b16 %v93
    %v387 = vunpack.c.h.b16 %v93
    %v388 = vunpack.c.l.b16 %v94
    %v389 = vunpack.c.h.b16 %v94
    %v390 = vunpack.c.l.b16 %v95
    %v391 = vunpack.c.h.b16 %v95
    %v392 = vunpack.c.l.b16 %v96
    %v393 = vunpack.c.h.b16 %v96
    %v394 = vunpack.c.l.b16 %v97
    %v395 = vunpack.c.h.b16 %v97
    %v396 = vunpack.c.l.b16 %v98
    %v397 = vunpack.c.h.b16 %v98
    %v398 = vunpack.c.l.b16 %v99
    %v399 = vunpack.c.h.b16 %v99
    %v400 = vunpack.c.l.b16 %v100
    %v401 = vunpack.c.h.b16 %v100
    %v402 = vunpack.c.l.b16 %v101
    %v403 = vunpack.c.h.b16 %v101
    %v404 = vunpack.c.l.b16 %v102
    %v405 = vunpack.c.h.b16 %v102
    %v406 = vunpack.c.l.b16 %v103
    %v407 = vunpack.c.h.b16 %v103
    %v408 = vunpack.c.l.b16 %v104
    %v409 = vunpack.c.h.b16 %v104
    %v410 = vunpack.c.l.b16 %v105
    %v411 = vunpack.c.h.b16 %v105
    %v412 = vunpack.c.l.b16 %v106
    %v413 = vunpack.c.h.b16 %v106
    %v414 = vunpack.c.l.b16 %v107
    %v415 = vunpack.c.h.b16 %v107
    %v416 = vunpack.c.l.b16 %v108
    %v417 = vunpack.c.h.b16 %v108
    %v418 = vunpack.c.l.b16 %v109
    %v419 = vunpack.c.h.b16 %v109
    %v420 = vunpack.c.l.b16 %v110
    %v421 = vunpack.c.h.b16 %v110
    %v422 = vunpack.c.l.b16 %v111
    %v423 = vunpack.c.h.b16 %v111
    %v424 = vunpack.c.l.b16 %v112
    %v425 = vunpack.c.h.b16 %v112
    %v426 = vunpack.c.l.b16 %v113
    %v427 = vunpack.c.h.b16 %v113
    %v428 = vunpack.c.l.b16 %v114
    %v429 = vunpack.c.h.b16 %v114
    %v430 = vunpack.c.l.b16 %v115
    %v431 = vunpack.c.h.b16 %v115
    %v432 = vunpack.c.l.b16 %v116
    %v433 = vunpack.c.h.b16 %v116
    %v434 = vunpack.c.l.b16 %v117
    %v435 = vunpack.c.h.b16 %v117
    %v436 = vunpack.c.l.b16 %v118
    %v437 = vunpack.c.h.b16 %v118
    %v438 = vunpack.c.l.b16 %v119
    %v439 = vunpack.c.h.b16 %v119
    %v440 = vunpack.c.l.b16 %v120
    %v441 = vunpack.c.h.b16 %v120
    %v442 = vunpack.c.l.b16 %v121
    %v443 = vunpack.c.h.b16 %v121
    %v444 = vunpack.c.l.b16 %v122
    %v445 = vunpack.c.h.b16 %v122
    %v446 = vunpack.c.l.b16 %v123
    %v447 = vunpack.c.h.b16 %v123
    %v448 = vunpack.c.l.b16 %v124
    %v449 = vunpack.c.h.b16 %v124
    %v450 = vunpack.c.l.b16 %v125
    %v451 = vunpack.c.h.b16 %v125
    %v452 = vunpack.c.l.b16 %v126
    %v453 = vunpack.c.h.b16 %v126
    %v454 = vunpack.c.l.b16 %v127
    %v455 = vunpack.c.h.b16 %v127
    %v456 = vunpack.c.l.b16 %v128
    %v457 = vunpack.c.h.b16 %v128
    %v458 = vunpack.c.l.b16 %v129
    %v459 = vunpack.c.h.b16 %v129
    %v460 = vunpack.c.l.b16 %v130
    %v461 = vunpack.c.h.b16 %v130
    %v462 = vunpack.c.l.b16 %v131
    %v463 = vunpack.c.h.b16 %v131
    %v464 = vunpack.c.l.b16 %v132
    %v465 = vunpack.c.h.b16 %v132
    %v466 = vunpack.c.l.b16 %v133
    %v467 = vunpack.c.h.b16 %v133
    %v468 = vunpack.c.l.b16 %v134
    %v469 = vunpack.c.h.b16 %v134
    %v470 = vunpack.c.l.b16 %v135
    %v471 = vunpack.c.h.b16 %v135
    %v472 = vunpack.c.l.b16 %v136
    %v473 = vunpack.c.h.b16 %v136
    %v474 = vunpack.c.l.b16 %v137
    %v475 = vunpack.c.h.b16 %v137
    %v476 = vunpack.c.l.b16 %v138
    %v477 = vunpack.c.h.b16 %v138
    %v478 = vunpack.c.l.b16 %v139
    %v479 = vunpack.c.h.b16 %v139
    %v480 = vpack.c.b16 %v294, %v288
    %v481 = vpack.c.b16 %v295, %v289
    %v482 = vpack.c.b16 %v296, %v290
    %v483 = vpack.c.b16 %v297, %v291
    %v484 = vpack.c.b16 %v298, %v292
    %v485 = vpack.c.b16 %v299, %v293
    %v486 = vpack.c.b16 %v306, %v300
    %v487 = vpack.c.b16 %v307, %v301
    %v488 = vpack.c.b16 %v308, %v302
    %v489 = vpack.c.b16 %v309, %v303
    %v490 = vpack.c.b16 %v310, %v304
    %v491 = vpack.c.b16 %v311, %v305
    %v492 = vpack.c.b16 %v318, %v312
    %v493 = vpack.c.b16 %v319, %v313
    %v494 = vpack.c.b16 %v320, %v314
    %v495 = vpack.c.b16 %v321, %v315
    %v496 = vpack.c.b16 %v322, %v316
    %v497 = vpack.c.b16 %v323, %v317
    %v498 = vpack.c.b16 %v330, %v324
    %v499 = vpack.c.b16 %v331, %v325
    %v500 = vpack.c.b16 %v332, %v326
    %v501 = vpack.c.b16 %v333, %v327
    %v502 = vpack.c.b16 %v334, %v328
    %v503 = vpack.c.b16 %v335, %v329
    %v504 = vpack.c.b16 %v342, %v336
    %v505 = vpack.c.b16 %v343, %v337
    %v506 = vpack.c.b16 %v344, %v338
    %v507 = vpack.c.b16 %v345, %v339
    %v508 = vpack.c.b16 %v346, %v340
    %v509 = vpack.c.b16 %v347, %v341
    %v510 = vpack.c.b16 %v354, %v348
    %v511 = vpack.c.b16 %v355, %v349
    %v512 = vpack.c.b16 %v356, %v350
    %v513 = vpack.c.b16 %v357, %v351
    %v514 = vpack.c.b16 %v358, %v352
    %v515 = vpack.c.b16 %v359, %v353
    %v516 = vpack.c.b16 %v366, %v360
    %v517 = vpack.c.b16 %v367, %v361
    %v518 = vpack.c.b16 %v368, %v362
    %v519 = vpack.c.b16 %v369, %v363
    %v520 = vpack.c.b16 %v370, %v364
    %v521 = vpack.c.b16 %v371, %v365
    %v522 = vpack.c.b16 %v378, %v372
    %v523 = vpack.c.b16 %v379, %v373
    %v524 = vpack.c.b16 %v380, %v374
    %v525 = vpack.c.b16 %v381, %v375
    %v526 = vpack.c.b16 %v382, %v376
    %v527 = vpack.c.b16 %v383, %v377
    %v528 = vpack.c.b16 %v390, %v384
    %v529 = vpack.c.b16 %v391, %v385
    %v530 = vpack.c.b16 %v392, %v386
    %v531 = vpack.c.b16 %v393, %v387
    %v532 = vpack.c.b16 %v394, %v388
    %v533 = vpack.c.b16 %v395, %v389
    %v534 = vpack.c.b16 %v402, %v396
    %v535 = vpack.c.b16 %v403, %v397
    %v536 = vpack.c.b16 %v404, %v398
    %v537 = vpack.c.b16 %v405, %v399
    %v538 = vpack.c.b16 %v406, %v400
    %v539 = vpack.c.b16 %v407, %v401
    %v540 = vpack.c.b16 %v414, %v408
    %v541 = vpack.c.b16 %v415, %v409
    %v542 = vpack.c.b16 %v416, %v410
    %v543 = vpack.c.b16 %v417, %v411
    %v544 = vpack.c.b16 %v418, %v412
    %v545 = vpack.c.b16 %v419, %v413
    %v546 = vpack.c.b16 %v426, %v420
    %v547 = vpack.c.b16 %v427, %v421
    %v548 = vpack.c.b16 %v428, %v422
    %v549 = vpack.c.b16 %v429, %v423
    %v550 = vpack.c.b16 %v430, %v424
    %v551 = vpack.c.b16 %v431, %v425
    %v552 = vpack.c.b16 %v438, %v432
    %v553 = vpack.c.b16 %v439, %v433
    %v554 = vpack.c.b16 %v440, %v434
    %v555 = vpack.c.b16 %v441, %v435
    %v556 = vpack.c.b16 %v442, %v436
    %v557 = vpack.c.b16 %v443, %v437
    %v558 = vpack.c.b16 %v450, %v444
    %v559 = vpack.c.b16 %v451, %v445
    %v560 = vpack.c.b16 %v452, %v446
    %v561 = vpack.c.b16 %v453, %v447
    %v562 = vpack.c.b16 %v454, %v448
    %v563 = vpack.c.b16 %v455, %v449
    %v564 = vpack.c.b16 %v462, %v456
    %v565 = vpack.c.b16 %v463, %v457
    %v566 = vpack.c.b16 %v464, %v458
    %v567 = vpack.c.b16 %v465, %v459
    %v568 = vpack.c.b16 %v466, %v460
    %v569 = vpack.c.b16 %v467, %v461
    %v570 = vpack.c.b16 %v474, %v468
    %v571 = vpack.c.b16 %v475, %v469
    %v572 = vpack.c.b16 %v476, %v470
    %v573 = vpack.c.b16 %v477, %v471
    %v574 = vpack.c.b16 %v478, %v472
    %v575 = vpack.c.b16 %v479, %v473
    %672 = vmatprep.subr.bf16.mxu0 %v481
    %673 = vmatpush1.bf16.msra.mxu0 %v480
    %674 = vmatprep.subr.bf16.mxu0 %v487
    %675 = vmatpush1.bf16.msra.mxu0 %v486
    %676 = vmatprep.subr.bf16.mxu0 %v493
    %677 = vmatpush1.bf16.msra.mxu0 %v492
    %678 = vmatprep.subr.bf16.mxu0 %v499
    %679 = vmatpush1.bf16.msra.mxu0 %v498
    %680 = vmatprep.subr.bf16.mxu0 %v505
    %681 = vmatpush1.bf16.msra.mxu0 %v504
    %682 = vmatprep.subr.bf16.mxu0 %v511
    %683 = vmatpush1.bf16.msra.mxu0 %v510
    %684 = vmatprep.subr.bf16.mxu0 %v517
    %685 = vmatpush1.bf16.msra.mxu0 %v516
    %686 = vmatprep.subr.bf16.mxu0 %v523
    %687 = vmatpush1.bf16.msra.mxu0 %v522
    %688 = vmatprep.subr.bf16.mxu0 %v529
    %689 = vmatpush1.bf16.msra.mxu0 %v528
    %690 = vmatprep.subr.bf16.mxu0 %v535
    %691 = vmatpush1.bf16.msra.mxu0 %v534
    %692 = vmatprep.subr.bf16.mxu0 %v541
    %693 = vmatpush1.bf16.msra.mxu0 %v540
    %694 = vmatprep.subr.bf16.mxu0 %v547
    %695 = vmatpush1.bf16.msra.mxu0 %v546
    %696 = vmatprep.subr.bf16.mxu0 %v553
    %697 = vmatpush1.bf16.msra.mxu0 %v552
    %698 = vmatprep.subr.bf16.mxu0 %v559
    %699 = vmatpush1.bf16.msra.mxu0 %v558
    %700 = vmatprep.subr.bf16.mxu0 %v565
    %701 = vmatpush1.bf16.msra.mxu0 %v564
    %702 = vmatprep.subr.bf16.mxu0 %v571
    %703 = vmatpush1.bf16.msra.mxu0 %v570
    %704 = vmatprep.mubr.bf16.mxu0 %v185
    %705 = vmatmul.mubr.bf16.gmra.mrb[0].mxu0 %v184
    %v706 = vpop.f32.mrb[0].mxu0
    %v707 = vadd.f32 %v145, %v706
    %v708 = vpop.f32.mrb[0].mxu0
    %v709 = vadd.f32 %v149, %v708
    %v710 = vpop.f32.mrb[0].mxu0
    %v711 = vadd.f32 %v145, %v710
    %v712 = vpop.f32.mrb[0].mxu0
    %v713 = vadd.f32 %v149, %v712
    %714 = vmatprep.mubr.bf16.mxu0 %v187
    %715 = vmatmul.mubr.bf16.gmra.mrb[0].mxu0 %v186
    %v716 = vpop.f32.mrb[0].mxu0
    %v717 = vadd.f32 %v145, %v716
    %v718 = vpop.f32.mrb[0].mxu0
    %v719 = vadd.f32 %v149, %v718
    %v720 = vpop.f32.mrb[0].mxu0
    %v721 = vadd.f32 %v145, %v720
    %v722 = vpop.f32.mrb[0].mxu0
    %v723 = vadd.f32 %v149, %v722
    %724 = vdwg.mxu0
    %725 = vmatprep.subr.bf16.mxu0 %v483
    %726 = vmatpush1.bf16.msra.mxu0 %v482
    %727 = vmatprep.subr.bf16.mxu0 %v489
    %728 = vmatpush1.bf16.msra.mxu0 %v488
    %729 = vmatprep.subr.bf16.mxu0 %v495
    %730 = vmatpush1.bf16.msra.mxu0 %v494
    %731 = vmatprep.subr.bf16.mxu0 %v501
    %732 = vmatpush1.bf16.msra.mxu0 %v500
    %733 = vmatprep.subr.bf16.mxu0 %v507
    %734 = vmatpush1.bf16.msra.mxu0 %v506
    %735 = vmatprep.subr.bf16.mxu0 %v513
    %736 = vmatpush1.bf16.msra.mxu0 %v512
    %737 = vmatprep.subr.bf16.mxu0 %v519
    %738 = vmatpush1.bf16.msra.mxu0 %v518
    %739 = vmatprep.subr.bf16.mxu0 %v525
    %740 = vmatpush1.bf16.msra.mxu0 %v524
    %741 = vmatprep.subr.bf16.mxu0 %v531
    %742 = vmatpush1.bf16.msra.mxu0 %v530
    %743 = vmatprep.subr.bf16.mxu0 %v537
    %744 = vmatpush1.bf16.msra.mxu0 %v536
    %745 = vmatprep.subr.bf16.mxu0 %v543
    %746 = vmatpush1.bf16.msra.mxu0 %v542
    %747 = vmatprep.subr.bf16.mxu0 %v549
    %748 = vmatpush1.bf16.msra.mxu0 %v548
    %749 = vmatprep.subr.bf16.mxu0 %v555
    %750 = vmatpush1.bf16.msra.mxu0 %v554
    %751 = vmatprep.subr.bf16.mxu0 %v561
    %752 = vmatpush1.bf16.msra.mxu0 %v560
    %753 = vmatprep.subr.bf16.mxu0 %v567
    %754 = vmatpush1.bf16.msra.mxu0 %v566
    %755 = vmatprep.subr.bf16.mxu0 %v573
    %756 = vmatpush1.bf16.msra.mxu0 %v572
    %757 = vmatprep.mubr.bf16.mxu0 %v185
    %758 = vmatmul.mubr.bf16.gmra.mrb[0].mxu0 %v184
    %v759 = vpop.f32.mrb[0].mxu0
    %v760 = vadd.f32 %v153, %v759
    %v761 = vpop.f32.mrb[0].mxu0
    %v762 = vadd.f32 %v157, %v761
    %v763 = vpop.f32.mrb[0].mxu0
    %v764 = vadd.f32 %v153, %v763
    %v765 = vpop.f32.mrb[0].mxu0
    %v766 = vadd.f32 %v157, %v765
    %767 = vmatprep.mubr.bf16.mxu0 %v187
    %768 = vmatmul.mubr.bf16.gmra.mrb[0].mxu0 %v186
    %v769 = vpop.f32.mrb[0].mxu0
    %v770 = vadd.f32 %v153, %v769
    %v771 = vpop.f32.mrb[0].mxu0
    %v772 = vadd.f32 %v157, %v771
    %v773 = vpop.f32.mrb[0].mxu0
    %v774 = vadd.f32 %v153, %v773
    %v775 = vpop.f32.mrb[0].mxu0
    %v776 = vadd.f32 %v157, %v775
    %777 = vdwg.mxu0
    %778 = vmatprep.subr.bf16.mxu0 %v485
    %779 = vmatpush1.bf16.msra.mxu0 %v484
    %780 = vmatprep.subr.bf16.mxu0 %v491
    %781 = vmatpush1.bf16.msra.mxu0 %v490
    %782 = vmatprep.subr.bf16.mxu0 %v497
    %783 = vmatpush1.bf16.msra.mxu0 %v496
    %784 = vmatprep.subr.bf16.mxu0 %v503
    %785 = vmatpush1.bf16.msra.mxu0 %v502
    %786 = vmatprep.subr.bf16.mxu0 %v509
    %787 = vmatpush1.bf16.msra.mxu0 %v508
    %788 = vmatprep.subr.bf16.mxu0 %v515
    %789 = vmatpush1.bf16.msra.mxu0 %v514
    %790 = vmatprep.subr.bf16.mxu0 %v521
    %791 = vmatpush1.bf16.msra.mxu0 %v520
    %792 = vmatprep.subr.bf16.mxu0 %v527
    %793 = vmatpush1.bf16.msra.mxu0 %v526
    %794 = vmatprep.subr.bf16.mxu0 %v533
    %795 = vmatpush1.bf16.msra.mxu0 %v532
    %796 = vmatprep.subr.bf16.mxu0 %v539
    %797 = vmatpush1.bf16.msra.mxu0 %v538
    %798 = vmatprep.subr.bf16.mxu0 %v545
    %799 = vmatpush1.bf16.msra.mxu0 %v544
    %800 = vmatprep.subr.bf16.mxu0 %v551
    %801 = vmatpush1.bf16.msra.mxu0 %v550
    %802 = vmatprep.subr.bf16.mxu0 %v557
    %803 = vmatpush1.bf16.msra.mxu0 %v556
    %804 = vmatprep.subr.bf16.mxu0 %v563
    %805 = vmatpush1.bf16.msra.mxu0 %v562
    %806 = vmatprep.subr.bf16.mxu0 %v569
    %807 = vmatpush1.bf16.msra.mxu0 %v568
    %808 = vmatprep.subr.bf16.mxu0 %v575
    %809 = vmatpush1.bf16.msra.mxu0 %v574
    %810 = vmatprep.mubr.bf16.mxu0 %v185
    %811 = vmatmul.mubr.bf16.gmra.mrb[0].mxu0 %v184
    %v812 = vpop.f32.mrb[0].mxu0
    %v813 = vadd.f32 %v161, %v812
    %v814 = vpop.f32.mrb[0].mxu0
    %v815 = vadd.f32 %v165, %v814
    %v816 = vpop.f32.mrb[0].mxu0
    %v817 = vadd.f32 %v161, %v816
    %v818 = vpop.f32.mrb[0].mxu0
    %v819 = vadd.f32 %v165, %v818
    %820 = vmatprep.mubr.bf16.mxu0 %v187
    %821 = vmatmul.mubr.bf16.gmra.mrb[0].mxu0 %v186
    %v822 = vpop.f32.mrb[0].mxu0
    %v823 = vadd.f32 %v161, %v822
    %v824 = vpop.f32.mrb[0].mxu0
    %v825 = vadd.f32 %v165, %v824
    %v826 = vpop.f32.mrb[0].mxu0
    %v827 = vadd.f32 %v161, %v826
    %v828 = vpop.f32.mrb[0].mxu0
    %v829 = vadd.f32 %v165, %v828
    %830 = vdwg.mxu0
    %v831 = vpack.c.bf16 %v711, %v707
    %v832 = vpack.c.bf16 %v713, %v709
    %v833 = vpack.c.bf16 %v764, %v760
    %v834 = vpack.c.bf16 %v766, %v762
    %v835 = vpack.c.bf16 %v817, %v813
    %v836 = vpack.c.bf16 %v819, %v815
    %v837 = vpack.c.bf16 %v721, %v717
    %v838 = vpack.c.bf16 %v723, %v719
    %v839 = vpack.c.bf16 %v774, %v770
    %v840 = vpack.c.bf16 %v776, %v772
    %v841 = vpack.c.bf16 %v827, %v823
    %v842 = vpack.c.bf16 %v829, %v825
    %v855 = vunpack.c.l.b16 %v831
    %v856 = vunpack.c.l.b16 %v832
    %v857 = vunpack.c.l.b16 %v833
    %v858 = vunpack.c.l.b16 %v834
    %v859 = vunpack.c.l.b16 %v835
    %v860 = vunpack.c.l.b16 %v836
    %v861 = vunpack.c.h.b16 %v831
    %v862 = vunpack.c.h.b16 %v832
    %v863 = vunpack.c.h.b16 %v833
    %v864 = vunpack.c.h.b16 %v834
    %v865 = vunpack.c.h.b16 %v835
    %v866 = vunpack.c.h.b16 %v836
    %v867 = vunpack.c.l.b16 %v837
    %v868 = vunpack.c.l.b16 %v838
    %v869 = vunpack.c.l.b16 %v839
    %v870 = vunpack.c.l.b16 %v840
    %v871 = vunpack.c.l.b16 %v841
    %v872 = vunpack.c.l.b16 %v842
    %v873 = vunpack.c.h.b16 %v837
    %v874 = vunpack.c.h.b16 %v838
    %v875 = vunpack.c.h.b16 %v839
    %v876 = vunpack.c.h.b16 %v840
    %v877 = vunpack.c.h.b16 %v841
    %v878 = vunpack.c.h.b16 %v842
    %v879 = vpack.c.b16 %v856, %v855
    %v880 = vpack.c.b16 %v858, %v857
    %v881 = vpack.c.b16 %v860, %v859
    %v882 = vpack.c.b16 %v862, %v861
    %v883 = vpack.c.b16 %v864, %v863
    %v884 = vpack.c.b16 %v866, %v865
    %v885 = vpack.c.b16 %v868, %v867
    %v886 = vpack.c.b16 %v870, %v869
    %v887 = vpack.c.b16 %v872, %v871
    %v888 = vpack.c.b16 %v874, %v873
    %v889 = vpack.c.b16 %v876, %v875
    %v890 = vpack.c.b16 %v878, %v877
    %903 = vst [vmem:[%s3] sm:$0xff] %v879
    %904 = vst [vmem:[%s3 + $0x8] sm:$0xff] %v880
    %905 = vst [vmem:[%s3 + $0x10] sm:$0xff] %v881
    %906 = vst [vmem:[%s3 + $0x18] sm:$0xff] %v882
    %907 = vst [vmem:[%s3 + $0x20] sm:$0xff] %v883
    %908 = vst [vmem:[%s3 + $0x28] sm:$0xff] %v884
    %909 = vst [vmem:[%s3 + $0x30] sm:$0xff] %v885
    %910 = vst [vmem:[%s3 + $0x38] sm:$0xff] %v886
    %911 = vst [vmem:[%s3 + $0x40] sm:$0xff] %v887
    %912 = vst [vmem:[%s3 + $0x48] sm:$0xff] %v888
    %913 = vst [vmem:[%s3 + $0x50] sm:$0xff] %v889
    %914 = vst [vmem:[%s3 + $0x58] sm:$0xff] %v890
    // Predicated region
    $region22: #{transformer_encoder.6} parent=1 // pred_check
      _
    $region23: #{transformer_encoder.6} parent=1 // pred_check_branch
      %916 = sbr.rel (0) target = $region25
    $region24: #{transformer_encoder.6} parent=1 // pred_region
      _
    $region25: #{transformer_encoder.6} parent=1 // pred_fallthru
      _
    // Predicated region
    $region26: #{transformer_encoder.6} parent=1 // pred_check
      _
    $region27: #{transformer_encoder.6} parent=1 // pred_check_branch
      %918 = sbr.rel (0) target = $region29
    $region28: #{transformer_encoder.6} parent=1 // pred_region
      _
    $region29: #{transformer_encoder.6} parent=1 // pred_fallthru
      _
    %919 = vsyncpa [#allocation3], 1
    %920 = vsyncpa [#allocation5], 1

// kernel: transformer_encoder.9
$region0: #{transformer_encoder.9}
  #allocation0 [shape = 'u32[]', space=smem, size = 0x4, offset = 0x4, fixed_abs, tag = 'smem constant byte address 0x4 - core index']
  #allocation1 [shape = 'u32[144,128]{1,0:T(1,128)}', space=vmem, size = 0x12000, scoped, tag = 'internal scratch']
  %s0 = inlined_call_operand.vmem [shape: bf16[32,256], index: 0, kind: input, shape index: {}]
  %s1 = inlined_call_operand.vmem [shape: bf16[256,768], index: 1, kind: input, shape index: {}]
  %s2 = inlined_call_operand.vmem [shape: f32[1,768], index: 2, kind: input, shape index: {}]
  %s3 = inlined_call_operand.vmem [shape: bf16[32,768], index: 3, kind: output, shape index: {}]
  %s4 = sld [smem:[#allocation0]]
  $region22: #{transformer_encoder.9} parent=0
    _
  %s6 = ssub.s32 1, %s4
  %s7 = scalar_select 0, %s6, %s4
  // Predicated region
  $region2: #{transformer_encoder.9} parent=0 // pred_check
    _
  $region3: #{transformer_encoder.9} parent=0 // pred_check_branch
    %9 = sbr.rel (0) target = $region5
  $region4: #{transformer_encoder.9} parent=0 // pred_region
    _
  $region5: #{transformer_encoder.9} parent=0 // pred_fallthru
    _
  // Predicated region
  $region6: #{transformer_encoder.9} parent=0 // pred_check
    _
  $region7: #{transformer_encoder.9} parent=0 // pred_check_branch
    %11 = sbr.rel (0) target = $region9
  $region8: #{transformer_encoder.9} parent=0 // pred_region
    _
  $region9: #{transformer_encoder.9} parent=0 // pred_fallthru
    _
  // Predicated region
  $region10: #{transformer_encoder.9} parent=0 // pred_check
    _
  $region11: #{transformer_encoder.9} parent=0 // pred_check_branch
    %13 = sbr.rel (0) target = $region13
  $region12: #{transformer_encoder.9} parent=0 // pred_region
    _
  $region13: #{transformer_encoder.9} parent=0 // pred_fallthru
    _
  %v14 = vld [vmem:[%s0] sm:$0xff]
  %v15 = vld [vmem:[%s0 + $0x8] sm:$0xff]
  %v16 = vld [vmem:[%s0 + $0x10] sm:$0xff]
  %v17 = vld [vmem:[%s0 + $0x18] sm:$0xff]
  %v18 = vld [vmem:[%s1] sm:$0xff]
  %v19 = vld [vmem:[%s1 + $0x8] sm:$0xff]
  %v20 = vld [vmem:[%s1 + $0x10] sm:$0xff]
  %v21 = vld [vmem:[%s1 + $0x18] sm:$0xff]
  %v22 = vld [vmem:[%s1 + $0x20] sm:$0xff]
  %v23 = vld [vmem:[%s1 + $0x28] sm:$0xff]
  %v24 = vld [vmem:[%s1 + $0x30] sm:$0xff]
  %v25 = vld [vmem:[%s1 + $0x38] sm:$0xff]
  %v26 = vld [vmem:[%s1 + $0x40] sm:$0xff]
  %v27 = vld [vmem:[%s1 + $0x48] sm:$0xff]
  %v28 = vld [vmem:[%s1 + $0x50] sm:$0xff]
  %v29 = vld [vmem:[%s1 + $0x58] sm:$0xff]
  %v30 = vld [vmem:[%s1 + $0x60] sm:$0xff]
  %v31 = vld [vmem:[%s1 + $0x68] sm:$0xff]
  %v32 = vld [vmem:[%s1 + $0x70] sm:$0xff]
  %v33 = vld [vmem:[%s1 + $0x78] sm:$0xff]
  %v34 = vld [vmem:[%s1 + $0x80] sm:$0xff]
  %v35 = vld [vmem:[%s1 + $0x88] sm:$0xff]
  %v36 = vld [vmem:[%s1 + $0x90] sm:$0xff]
  %v37 = vld [vmem:[%s1 + $0x98] sm:$0xff]
  %v38 = vld [vmem:[%s1 + $0xa0] sm:$0xff]
  %v39 = vld [vmem:[%s1 + $0xa8] sm:$0xff]
  %v40 = vld [vmem:[%s1 + $0xb0] sm:$0xff]
  %v41 = vld [vmem:[%s1 + $0xb8] sm:$0xff]
  %v42 = vld [vmem:[%s1 + $0xc0] sm:$0xff]
  %v43 = vld [vmem:[%s1 + $0xc8] sm:$0xff]
  %v44 = vld [vmem:[%s1 + $0xd0] sm:$0xff]
  %v45 = vld [vmem:[%s1 + $0xd8] sm:$0xff]
  %v46 = vld [vmem:[%s1 + $0xe0] sm:$0xff]
  %v47 = vld [vmem:[%s1 + $0xe8] sm:$0xff]
  %v48 = vld [vmem:[%s1 + $0xf0] sm:$0xff]
  %v49 = vld [vmem:[%s1 + $0xf8] sm:$0xff]
  %v50 = vld [vmem:[%s1 + $0x100] sm:$0xff]
  %v51 = vld [vmem:[%s1 + $0x108] sm:$0xff]
  %v52 = vld [vmem:[%s1 + $0x110] sm:$0xff]
  %v53 = vld [vmem:[%s1 + $0x118] sm:$0xff]
  %v54 = vld [vmem:[%s1 + $0x120] sm:$0xff]
  %v55 = vld [vmem:[%s1 + $0x128] sm:$0xff]
  %v56 = vld [vmem:[%s1 + $0x130] sm:$0xff]
  %v57 = vld [vmem:[%s1 + $0x138] sm:$0xff]
  %v58 = vld [vmem:[%s1 + $0x140] sm:$0xff]
  %v59 = vld [vmem:[%s1 + $0x148] sm:$0xff]
  %v60 = vld [vmem:[%s1 + $0x150] sm:$0xff]
  %v61 = vld [vmem:[%s1 + $0x158] sm:$0xff]
  %v62 = vld [vmem:[%s1 + $0x160] sm:$0xff]
  %v63 = vld [vmem:[%s1 + $0x168] sm:$0xff]
  %v64 = vld [vmem:[%s1 + $0x170] sm:$0xff]
  %v65 = vld [vmem:[%s1 + $0x178] sm:$0xff]
  %v66 = vld [vmem:[%s1 + $0x180] sm:$0xff]
  %v67 = vld [vmem:[%s1 + $0x188] sm:$0xff]
  %v68 = vld [vmem:[%s1 + $0x190] sm:$0xff]
  %v69 = vld [vmem:[%s1 + $0x198] sm:$0xff]
  %v70 = vld [vmem:[%s1 + $0x1a0] sm:$0xff]
  %v71 = vld [vmem:[%s1 + $0x1a8] sm:$0xff]
  %v72 = vld [vmem:[%s1 + $0x1b0] sm:$0xff]
  %v73 = vld [vmem:[%s1 + $0x1b8] sm:$0xff]
  %v74 = vld [vmem:[%s1 + $0x1c0] sm:$0xff]
  %v75 = vld [vmem:[%s1 + $0x1c8] sm:$0xff]
  %v76 = vld [vmem:[%s1 + $0x1d0] sm:$0xff]
  %v77 = vld [vmem:[%s1 + $0x1d8] sm:$0xff]
  %v78 = vld [vmem:[%s1 + $0x1e0] sm:$0xff]
  %v79 = vld [vmem:[%s1 + $0x1e8] sm:$0xff]
  %v80 = vld [vmem:[%s1 + $0x1f0] sm:$0xff]
  %v81 = vld [vmem:[%s1 + $0x1f8] sm:$0xff]
  %v82 = vld [vmem:[%s1 + $0x200] sm:$0xff]
  %v83 = vld [vmem:[%s1 + $0x208] sm:$0xff]
  %v84 = vld [vmem:[%s1 + $0x210] sm:$0xff]
  %v85 = vld [vmem:[%s1 + $0x218] sm:$0xff]
  %v86 = vld [vmem:[%s1 + $0x220] sm:$0xff]
  %v87 = vld [vmem:[%s1 + $0x228] sm:$0xff]
  %v88 = vld [vmem:[%s1 + $0x230] sm:$0xff]
  %v89 = vld [vmem:[%s1 + $0x238] sm:$0xff]
  %v90 = vld [vmem:[%s1 + $0x240] sm:$0xff]
  %v91 = vld [vmem:[%s1 + $0x248] sm:$0xff]
  %v92 = vld [vmem:[%s1 + $0x250] sm:$0xff]
  %v93 = vld [vmem:[%s1 + $0x258] sm:$0xff]
  %v94 = vld [vmem:[%s1 + $0x260] sm:$0xff]
  %v95 = vld [vmem:[%s1 + $0x268] sm:$0xff]
  %v96 = vld [vmem:[%s1 + $0x270] sm:$0xff]
  %v97 = vld [vmem:[%s1 + $0x278] sm:$0xff]
  %v98 = vld [vmem:[%s1 + $0x280] sm:$0xff]
  %v99 = vld [vmem:[%s1 + $0x288] sm:$0xff]
  %v100 = vld [vmem:[%s1 + $0x290] sm:$0xff]
  %v101 = vld [vmem:[%s1 + $0x298] sm:$0xff]
  %v102 = vld [vmem:[%s1 + $0x2a0] sm:$0xff]
  %v103 = vld [vmem:[%s1 + $0x2a8] sm:$0xff]
  %v104 = vld [vmem:[%s1 + $0x2b0] sm:$0xff]
  %v105 = vld [vmem:[%s1 + $0x2b8] sm:$0xff]
  %v106 = vld [vmem:[%s1 + $0x2c0] sm:$0xff]
  %v107 = vld [vmem:[%s1 + $0x2c8] sm:$0xff]
  %v108 = vld [vmem:[%s1 + $0x2d0] sm:$0xff]
  %v109 = vld [vmem:[%s1 + $0x2d8] sm:$0xff]
  %v110 = vld [vmem:[%s1 + $0x2e0] sm:$0xff]
  %v111 = vld [vmem:[%s1 + $0x2e8] sm:$0xff]
  %v112 = vld [vmem:[%s1 + $0x2f0] sm:$0xff]
  %v113 = vld [vmem:[%s1 + $0x2f8] sm:$0xff]
  %v114 = vld [vmem:[%s2] sm:$0x3f]
  %v116 = vlaneseq
  %v117 = vshrl.u32 %v116, 7
  %v118 = vsub.s32 0, %v117
  %v119 = vrot.slane %v114, %v118
  %v120 = vlaneseq
  %v121 = vshrl.u32 %v120, 7
  %v122 = vsub.s32 1, %v121
  %v123 = vrot.slane %v114, %v122
  %v124 = vlaneseq
  %v125 = vshrl.u32 %v124, 7
  %v126 = vsub.s32 2, %v125
  %v127 = vrot.slane %v114, %v126
  %v128 = vlaneseq
  %v129 = vshrl.u32 %v128, 7
  %v130 = vsub.s32 3, %v129
  %v131 = vrot.slane %v114, %v130
  %v132 = vlaneseq
  %v133 = vshrl.u32 %v132, 7
  %v134 = vsub.s32 4, %v133
  %v135 = vrot.slane %v114, %v134
  %v136 = vlaneseq
  %v137 = vshrl.u32 %v136, 7
  %v138 = vsub.s32 5, %v137
  %v139 = vrot.slane %v114, %v138
  %v150 = vunpack.c.l.b16 %v14
  %v151 = vunpack.c.h.b16 %v14
  %v152 = vunpack.c.l.b16 %v15
  %v153 = vunpack.c.h.b16 %v15
  %v154 = vunpack.c.l.b16 %v16
  %v155 = vunpack.c.h.b16 %v16
  %v156 = vunpack.c.l.b16 %v17
  %v157 = vunpack.c.h.b16 %v17
  %v158 = vpack.c.b16 %v152, %v150
  %v159 = vpack.c.b16 %v153, %v151
  %v160 = vpack.c.b16 %v156, %v154
  %v161 = vpack.c.b16 %v157, %v155
  %v262 = vunpack.c.l.b16 %v18
  %v263 = vunpack.c.h.b16 %v18
  %v264 = vunpack.c.l.b16 %v19
  %v265 = vunpack.c.h.b16 %v19
  %v266 = vunpack.c.l.b16 %v20
  %v267 = vunpack.c.h.b16 %v20
  %v268 = vunpack.c.l.b16 %v21
  %v269 = vunpack.c.h.b16 %v21
  %v270 = vunpack.c.l.b16 %v22
  %v271 = vunpack.c.h.b16 %v22
  %v272 = vunpack.c.l.b16 %v23
  %v273 = vunpack.c.h.b16 %v23
  %v274 = vunpack.c.l.b16 %v24
  %v275 = vunpack.c.h.b16 %v24
  %v276 = vunpack.c.l.b16 %v25
  %v277 = vunpack.c.h.b16 %v25
  %v278 = vunpack.c.l.b16 %v26
  %v279 = vunpack.c.h.b16 %v26
  %v280 = vunpack.c.l.b16 %v27
  %v281 = vunpack.c.h.b16 %v27
  %v282 = vunpack.c.l.b16 %v28
  %v283 = vunpack.c.h.b16 %v28
  %v284 = vunpack.c.l.b16 %v29
  %v285 = vunpack.c.h.b16 %v29
  %v286 = vunpack.c.l.b16 %v30
  %v287 = vunpack.c.h.b16 %v30
  %v288 = vunpack.c.l.b16 %v31
  %v289 = vunpack.c.h.b16 %v31
  %v290 = vunpack.c.l.b16 %v32
  %v291 = vunpack.c.h.b16 %v32
  %v292 = vunpack.c.l.b16 %v33
  %v293 = vunpack.c.h.b16 %v33
  %v294 = vunpack.c.l.b16 %v34
  %v295 = vunpack.c.h.b16 %v34
  %v296 = vunpack.c.l.b16 %v35
  %v297 = vunpack.c.h.b16 %v35
  %v298 = vunpack.c.l.b16 %v36
  %v299 = vunpack.c.h.b16 %v36
  %v300 = vunpack.c.l.b16 %v37
  %v301 = vunpack.c.h.b16 %v37
  %v302 = vunpack.c.l.b16 %v38
  %v303 = vunpack.c.h.b16 %v38
  %v304 = vunpack.c.l.b16 %v39
  %v305 = vunpack.c.h.b16 %v39
  %v306 = vunpack.c.l.b16 %v40
  %v307 = vunpack.c.h.b16 %v40
  %v308 = vunpack.c.l.b16 %v41
  %v309 = vunpack.c.h.b16 %v41
  %v310 = vunpack.c.l.b16 %v42
  %v311 = vunpack.c.h.b16 %v42
  %v312 = vunpack.c.l.b16 %v43
  %v313 = vunpack.c.h.b16 %v43
  %v314 = vunpack.c.l.b16 %v44
  %v315 = vunpack.c.h.b16 %v44
  %v316 = vunpack.c.l.b16 %v45
  %v317 = vunpack.c.h.b16 %v45
  %v318 = vunpack.c.l.b16 %v46
  %v319 = vunpack.c.h.b16 %v46
  %v320 = vunpack.c.l.b16 %v47
  %v321 = vunpack.c.h.b16 %v47
  %v322 = vunpack.c.l.b16 %v48
  %v323 = vunpack.c.h.b16 %v48
  %v324 = vunpack.c.l.b16 %v49
  %v325 = vunpack.c.h.b16 %v49
  %v326 = vunpack.c.l.b16 %v50
  %v327 = vunpack.c.h.b16 %v50
  %v328 = vunpack.c.l.b16 %v51
  %v329 = vunpack.c.h.b16 %v51
  %v330 = vunpack.c.l.b16 %v52
  %v331 = vunpack.c.h.b16 %v52
  %v332 = vunpack.c.l.b16 %v53
  %v333 = vunpack.c.h.b16 %v53
  %v334 = vunpack.c.l.b16 %v54
  %v335 = vunpack.c.h.b16 %v54
  %v336 = vunpack.c.l.b16 %v55
  %v337 = vunpack.c.h.b16 %v55
  %v338 = vunpack.c.l.b16 %v56
  %v339 = vunpack.c.h.b16 %v56
  %v340 = vunpack.c.l.b16 %v57
  %v341 = vunpack.c.h.b16 %v57
  %v342 = vunpack.c.l.b16 %v58
  %v343 = vunpack.c.h.b16 %v58
  %v344 = vunpack.c.l.b16 %v59
  %v345 = vunpack.c.h.b16 %v59
  %v346 = vunpack.c.l.b16 %v60
  %v347 = vunpack.c.h.b16 %v60
  %v348 = vunpack.c.l.b16 %v61
  %v349 = vunpack.c.h.b16 %v61
  %v350 = vunpack.c.l.b16 %v62
  %v351 = vunpack.c.h.b16 %v62
  %v352 = vunpack.c.l.b16 %v63
  %v353 = vunpack.c.h.b16 %v63
  %v354 = vunpack.c.l.b16 %v64
  %v355 = vunpack.c.h.b16 %v64
  %v356 = vunpack.c.l.b16 %v65
  %v357 = vunpack.c.h.b16 %v65
  %v358 = vunpack.c.l.b16 %v66
  %v359 = vunpack.c.h.b16 %v66
  %v360 = vunpack.c.l.b16 %v67
  %v361 = vunpack.c.h.b16 %v67
  %v362 = vunpack.c.l.b16 %v68
  %v363 = vunpack.c.h.b16 %v68
  %v364 = vunpack.c.l.b16 %v69
  %v365 = vunpack.c.h.b16 %v69
  %v366 = vunpack.c.l.b16 %v70
  %v367 = vunpack.c.h.b16 %v70
  %v368 = vunpack.c.l.b16 %v71
  %v369 = vunpack.c.h.b16 %v71
  %v370 = vunpack.c.l.b16 %v72
  %v371 = vunpack.c.h.b16 %v72
  %v372 = vunpack.c.l.b16 %v73
  %v373 = vunpack.c.h.b16 %v73
  %v374 = vunpack.c.l.b16 %v74
  %v375 = vunpack.c.h.b16 %v74
  %v376 = vunpack.c.l.b16 %v75
  %v377 = vunpack.c.h.b16 %v75
  %v378 = vunpack.c.l.b16 %v76
  %v379 = vunpack.c.h.b16 %v76
  %v380 = vunpack.c.l.b16 %v77
  %v381 = vunpack.c.h.b16 %v77
  %v382 = vunpack.c.l.b16 %v78
  %v383 = vunpack.c.h.b16 %v78
  %v384 = vunpack.c.l.b16 %v79
  %v385 = vunpack.c.h.b16 %v79
  %v386 = vunpack.c.l.b16 %v80
  %v387 = vunpack.c.h.b16 %v80
  %v388 = vunpack.c.l.b16 %v81
  %v389 = vunpack.c.h.b16 %v81
  %v390 = vunpack.c.l.b16 %v82
  %v391 = vunpack.c.h.b16 %v82
  %v392 = vunpack.c.l.b16 %v83
  %v393 = vunpack.c.h.b16 %v83
  %v394 = vunpack.c.l.b16 %v84
  %v395 = vunpack.c.h.b16 %v84
  %v396 = vunpack.c.l.b16 %v85
  %v397 = vunpack.c.h.b16 %v85
  %v398 = vunpack.c.l.b16 %v86
  %v399 = vunpack.c.h.b16 %v86
  %v400 = vunpack.c.l.b16 %v87
  %v401 = vunpack.c.h.b16 %v87
  %v402 = vunpack.c.l.b16 %v88
  %v403 = vunpack.c.h.b16 %v88
  %v404 = vunpack.c.l.b16 %v89
  %v405 = vunpack.c.h.b16 %v89
  %v406 = vunpack.c.l.b16 %v90
  %v407 = vunpack.c.h.b16 %v90
  %v408 = vunpack.c.l.b16 %v91
  %v409 = vunpack.c.h.b16 %v91
  %v410 = vunpack.c.l.b16 %v92
  %v411 = vunpack.c.h.b16 %v92
  %v412 = vunpack.c.l.b16 %v93
  %v413 = vunpack.c.h.b16 %v93
  %v414 = vunpack.c.l.b16 %v94
  %v415 = vunpack.c.h.b16 %v94
  %v416 = vunpack.c.l.b16 %v95
  %v417 = vunpack.c.h.b16 %v95
  %v418 = vunpack.c.l.b16 %v96
  %v419 = vunpack.c.h.b16 %v96
  %v420 = vunpack.c.l.b16 %v97
  %v421 = vunpack.c.h.b16 %v97
  %v422 = vunpack.c.l.b16 %v98
  %v423 = vunpack.c.h.b16 %v98
  %v424 = vunpack.c.l.b16 %v99
  %v425 = vunpack.c.h.b16 %v99
  %v426 = vunpack.c.l.b16 %v100
  %v427 = vunpack.c.h.b16 %v100
  %v428 = vunpack.c.l.b16 %v101
  %v429 = vunpack.c.h.b16 %v101
  %v430 = vunpack.c.l.b16 %v102
  %v431 = vunpack.c.h.b16 %v102
  %v432 = vunpack.c.l.b16 %v103
  %v433 = vunpack.c.h.b16 %v103
  %v434 = vunpack.c.l.b16 %v104
  %v435 = vunpack.c.h.b16 %v104
  %v436 = vunpack.c.l.b16 %v105
  %v437 = vunpack.c.h.b16 %v105
  %v438 = vunpack.c.l.b16 %v106
  %v439 = vunpack.c.h.b16 %v106
  %v440 = vunpack.c.l.b16 %v107
  %v441 = vunpack.c.h.b16 %v107
  %v442 = vunpack.c.l.b16 %v108
  %v443 = vunpack.c.h.b16 %v108
  %v444 = vunpack.c.l.b16 %v109
  %v445 = vunpack.c.h.b16 %v109
  %v446 = vunpack.c.l.b16 %v110
  %v447 = vunpack.c.h.b16 %v110
  %v448 = vunpack.c.l.b16 %v111
  %v449 = vunpack.c.h.b16 %v111
  %v450 = vunpack.c.l.b16 %v112
  %v451 = vunpack.c.h.b16 %v112
  %v452 = vunpack.c.l.b16 %v113
  %v453 = vunpack.c.h.b16 %v113
  %v454 = vpack.c.b16 %v268, %v262
  %v455 = vpack.c.b16 %v269, %v263
  %v456 = vpack.c.b16 %v270, %v264
  %v457 = vpack.c.b16 %v271, %v265
  %v458 = vpack.c.b16 %v272, %v266
  %v459 = vpack.c.b16 %v273, %v267
  %v460 = vpack.c.b16 %v280, %v274
  %v461 = vpack.c.b16 %v281, %v275
  %v462 = vpack.c.b16 %v282, %v276
  %v463 = vpack.c.b16 %v283, %v277
  %v464 = vpack.c.b16 %v284, %v278
  %v465 = vpack.c.b16 %v285, %v279
  %v466 = vpack.c.b16 %v292, %v286
  %v467 = vpack.c.b16 %v293, %v287
  %v468 = vpack.c.b16 %v294, %v288
  %v469 = vpack.c.b16 %v295, %v289
  %v470 = vpack.c.b16 %v296, %v290
  %v471 = vpack.c.b16 %v297, %v291
  %v472 = vpack.c.b16 %v304, %v298
  %v473 = vpack.c.b16 %v305, %v299
  %v474 = vpack.c.b16 %v306, %v300
  %v475 = vpack.c.b16 %v307, %v301
  %v476 = vpack.c.b16 %v308, %v302
  %v477 = vpack.c.b16 %v309, %v303
  %v478 = vpack.c.b16 %v316, %v310
  %v479 = vpack.c.b16 %v317, %v311
  %v480 = vpack.c.b16 %v318, %v312
  %v481 = vpack.c.b16 %v319, %v313
  %v482 = vpack.c.b16 %v320, %v314
  %v483 = vpack.c.b16 %v321, %v315
  %v484 = vpack.c.b16 %v328, %v322
  %v485 = vpack.c.b16 %v329, %v323
  %v486 = vpack.c.b16 %v330, %v324
  %v487 = vpack.c.b16 %v331, %v325
  %v488 = vpack.c.b16 %v332, %v326
  %v489 = vpack.c.b16 %v333, %v327
  %v490 = vpack.c.b16 %v340, %v334
  %v491 = vpack.c.b16 %v341, %v335
  %v492 = vpack.c.b16 %v342, %v336
  %v493 = vpack.c.b16 %v343, %v337
  %v494 = vpack.c.b16 %v344, %v338
  %v495 = vpack.c.b16 %v345, %v339
  %v496 = vpack.c.b16 %v352, %v346
  %v497 = vpack.c.b16 %v353, %v347
  %v498 = vpack.c.b16 %v354, %v348
  %v499 = vpack.c.b16 %v355, %v349
  %v500 = vpack.c.b16 %v356, %v350
  %v501 = vpack.c.b16 %v357, %v351
  %v502 = vpack.c.b16 %v364, %v358
  %v503 = vpack.c.b16 %v365, %v359
  %v504 = vpack.c.b16 %v366, %v360
  %v505 = vpack.c.b16 %v367, %v361
  %v506 = vpack.c.b16 %v368, %v362
  %v507 = vpack.c.b16 %v369, %v363
  %v508 = vpack.c.b16 %v376, %v370
  %v509 = vpack.c.b16 %v377, %v371
  %v510 = vpack.c.b16 %v378, %v372
  %v511 = vpack.c.b16 %v379, %v373
  %v512 = vpack.c.b16 %v380, %v374
  %v513 = vpack.c.b16 %v381, %v375
  %v514 = vpack.c.b16 %v388, %v382
  %v515 = vpack.c.b16 %v389, %v383
  %v516 = vpack.c.b16 %v390, %v384
  %v517 = vpack.c.b16 %v391, %v385
  %v518 = vpack.c.b16 %v392, %v386
  %v519 = vpack.c.b16 %v393, %v387
  %v520 = vpack.c.b16 %v400, %v394
  %v521 = vpack.c.b16 %v401, %v395
  %v522 = vpack.c.b16 %v402, %v396
  %v523 = vpack.c.b16 %v403, %v397
  %v524 = vpack.c.b16 %v404, %v398
  %v525 = vpack.c.b16 %v405, %v399
  %v526 = vpack.c.b16 %v412, %v406
  %v527 = vpack.c.b16 %v413, %v407
  %v528 = vpack.c.b16 %v414, %v408
  %v529 = vpack.c.b16 %v415, %v409
  %v530 = vpack.c.b16 %v416, %v410
  %v531 = vpack.c.b16 %v417, %v411
  %v532 = vpack.c.b16 %v424, %v418
  %v533 = vpack.c.b16 %v425, %v419
  %v534 = vpack.c.b16 %v426, %v420
  %v535 = vpack.c.b16 %v427, %v421
  %v536 = vpack.c.b16 %v428, %v422
  %v537 = vpack.c.b16 %v429, %v423
  %v538 = vpack.c.b16 %v436, %v430
  %v539 = vpack.c.b16 %v437, %v431
  %v540 = vpack.c.b16 %v438, %v432
  %v541 = vpack.c.b16 %v439, %v433
  %v542 = vpack.c.b16 %v440, %v434
  %v543 = vpack.c.b16 %v441, %v435
  %v544 = vpack.c.b16 %v448, %v442
  %v545 = vpack.c.b16 %v449, %v443
  %v546 = vpack.c.b16 %v450, %v444
  %v547 = vpack.c.b16 %v451, %v445
  %v548 = vpack.c.b16 %v452, %v446
  %v549 = vpack.c.b16 %v453, %v447
  %646 = vmatprep.subr.bf16.mxu0 %v455
  %647 = vmatpush1.bf16.msra.mxu0 %v454
  %648 = vmatprep.subr.bf16.mxu0 %v461
  %649 = vmatpush1.bf16.msra.mxu0 %v460
  %650 = vmatprep.subr.bf16.mxu0 %v467
  %651 = vmatpush1.bf16.msra.mxu0 %v466
  %652 = vmatprep.subr.bf16.mxu0 %v473
  %653 = vmatpush1.bf16.msra.mxu0 %v472
  %654 = vmatprep.subr.bf16.mxu0 %v479
  %655 = vmatpush1.bf16.msra.mxu0 %v478
  %656 = vmatprep.subr.bf16.mxu0 %v485
  %657 = vmatpush1.bf16.msra.mxu0 %v484
  %658 = vmatprep.subr.bf16.mxu0 %v491
  %659 = vmatpush1.bf16.msra.mxu0 %v490
  %660 = vmatprep.subr.bf16.mxu0 %v497
  %661 = vmatpush1.bf16.msra.mxu0 %v496
  %662 = vmatprep.subr.bf16.mxu0 %v503
  %663 = vmatpush1.bf16.msra.mxu0 %v502
  %664 = vmatprep.subr.bf16.mxu0 %v509
  %665 = vmatpush1.bf16.msra.mxu0 %v508
  %666 = vmatprep.subr.bf16.mxu0 %v515
  %667 = vmatpush1.bf16.msra.mxu0 %v514
  %668 = vmatprep.subr.bf16.mxu0 %v521
  %669 = vmatpush1.bf16.msra.mxu0 %v520
  %670 = vmatprep.subr.bf16.mxu0 %v527
  %671 = vmatpush1.bf16.msra.mxu0 %v526
  %672 = vmatprep.subr.bf16.mxu0 %v533
  %673 = vmatpush1.bf16.msra.mxu0 %v532
  %674 = vmatprep.subr.bf16.mxu0 %v539
  %675 = vmatpush1.bf16.msra.mxu0 %v538
  %676 = vmatprep.subr.bf16.mxu0 %v545
  %677 = vmatpush1.bf16.msra.mxu0 %v544
  %678 = vmatprep.mubr.bf16.mxu0 %v159
  %679 = vmatmul.mubr.bf16.gmra.mrb[0].mxu0 %v158
  %v680 = vpop.f32.mrb[0].mxu0
  %v681 = vadd.f32 %v119, %v680
  %v682 = vpop.f32.mrb[0].mxu0
  %v683 = vadd.f32 %v123, %v682
  %v684 = vpop.f32.mrb[0].mxu0
  %v685 = vadd.f32 %v119, %v684
  %v686 = vpop.f32.mrb[0].mxu0
  %v687 = vadd.f32 %v123, %v686
  %688 = vmatprep.mubr.bf16.mxu0 %v161
  %689 = vmatmul.mubr.bf16.gmra.mrb[0].mxu0 %v160
  %v690 = vpop.f32.mrb[0].mxu0
  %v691 = vadd.f32 %v119, %v690
  %v692 = vpop.f32.mrb[0].mxu0
  %v693 = vadd.f32 %v123, %v692
  %v694 = vpop.f32.mrb[0].mxu0
  %v695 = vadd.f32 %v119, %v694
  %v696 = vpop.f32.mrb[0].mxu0
  %v697 = vadd.f32 %v123, %v696
  %698 = vdwg.mxu0
  %699 = vmatprep.subr.bf16.mxu0 %v457
  %700 = vmatpush1.bf16.msra.mxu0 %v456
  %701 = vmatprep.subr.bf16.mxu0 %v463
  %702 = vmatpush1.bf16.msra.mxu0 %v462
  %703 = vmatprep.subr.bf16.mxu0 %v469
  %704 = vmatpush1.bf16.msra.mxu0 %v468
  %705 = vmatprep.subr.bf16.mxu0 %v475
  %706 = vmatpush1.bf16.msra.mxu0 %v474
  %707 = vmatprep.subr.bf16.mxu0 %v481
  %708 = vmatpush1.bf16.msra.mxu0 %v480
  %709 = vmatprep.subr.bf16.mxu0 %v487
  %710 = vmatpush1.bf16.msra.mxu0 %v486
  %711 = vmatprep.subr.bf16.mxu0 %v493
  %712 = vmatpush1.bf16.msra.mxu0 %v492
  %713 = vmatprep.subr.bf16.mxu0 %v499
  %714 = vmatpush1.bf16.msra.mxu0 %v498
  %715 = vmatprep.subr.bf16.mxu0 %v505
  %716 = vmatpush1.bf16.msra.mxu0 %v504
  %717 = vmatprep.subr.bf16.mxu0 %v511
  %718 = vmatpush1.bf16.msra.mxu0 %v510
  %719 = vmatprep.subr.bf16.mxu0 %v517
  %720 = vmatpush1.bf16.msra.mxu0 %v516
  %721 = vmatprep.subr.bf16.mxu0 %v523
  %722 = vmatpush1.bf16.msra.mxu0 %v522
  %723 = vmatprep.subr.bf16.mxu0 %v529
  %724 = vmatpush1.bf16.msra.mxu0 %v528
  %725 = vmatprep.subr.bf16.mxu0 %v535
  %726 = vmatpush1.bf16.msra.mxu0 %v534
  %727 = vmatprep.subr.bf16.mxu0 %v541
  %728 = vmatpush1.bf16.msra.mxu0 %v540
  %729 = vmatprep.subr.bf16.mxu0 %v547
  %730 = vmatpush1.bf16.msra.mxu0 %v546
  %731 = vmatprep.mubr.bf16.mxu0 %v159
  %732 = vmatmul.mubr.bf16.gmra.mrb[0].mxu0 %v158
  %v733 = vpop.f32.mrb[0].mxu0
  %v734 = vadd.f32 %v127, %v733
  %v735 = vpop.f32.mrb[0].mxu0
  %v736 = vadd.f32 %v131, %v735
  %v737 = vpop.f32.mrb[0].mxu0
  %v738 = vadd.f32 %v127, %v737
  %v739 = vpop.f32.mrb[0].mxu0
  %v740 = vadd.f32 %v131, %v739
  %741 = vmatprep.mubr.bf16.mxu0 %v161
  %742 = vmatmul.mubr.bf16.gmra.mrb[0].mxu0 %v160
  %v743 = vpop.f32.mrb[0].mxu0
  %v744 = vadd.f32 %v127, %v743
  %v745 = vpop.f32.mrb[0].mxu0
  %v746 = vadd.f32 %v131, %v745
  %v747 = vpop.f32.mrb[0].mxu0
  %v748 = vadd.f32 %v127, %v747
  %v749 = vpop.f32.mrb[0].mxu0
  %v750 = vadd.f32 %v131, %v749
  %751 = vdwg.mxu0
  %752 = vmatprep.subr.bf16.mxu0 %v459
  %753 = vmatpush1.bf16.msra.mxu0 %v458
  %754 = vmatprep.subr.bf16.mxu0 %v465
  %755 = vmatpush1.bf16.msra.mxu0 %v464
  %756 = vmatprep.subr.bf16.mxu0 %v471
  %757 = vmatpush1.bf16.msra.mxu0 %v470
  %758 = vmatprep.subr.bf16.mxu0 %v477
  %759 = vmatpush1.bf16.msra.mxu0 %v476
  %760 = vmatprep.subr.bf16.mxu0 %v483
  %761 = vmatpush1.bf16.msra.mxu0 %v482
  %762 = vmatprep.subr.bf16.mxu0 %v489
  %763 = vmatpush1.bf16.msra.mxu0 %v488
  %764 = vmatprep.subr.bf16.mxu0 %v495
  %765 = vmatpush1.bf16.msra.mxu0 %v494
  %766 = vmatprep.subr.bf16.mxu0 %v501
  %767 = vmatpush1.bf16.msra.mxu0 %v500
  %768 = vmatprep.subr.bf16.mxu0 %v507
  %769 = vmatpush1.bf16.msra.mxu0 %v506
  %770 = vmatprep.subr.bf16.mxu0 %v513
  %771 = vmatpush1.bf16.msra.mxu0 %v512
  %772 = vmatprep.subr.bf16.mxu0 %v519
  %773 = vmatpush1.bf16.msra.mxu0 %v518
  %774 = vmatprep.subr.bf16.mxu0 %v525
  %775 = vmatpush1.bf16.msra.mxu0 %v524
  %776 = vmatprep.subr.bf16.mxu0 %v531
  %777 = vmatpush1.bf16.msra.mxu0 %v530
  %778 = vmatprep.subr.bf16.mxu0 %v537
  %779 = vmatpush1.bf16.msra.mxu0 %v536
  %780 = vmatprep.subr.bf16.mxu0 %v543
  %781 = vmatpush1.bf16.msra.mxu0 %v542
  %782 = vmatprep.subr.bf16.mxu0 %v549
  %783 = vmatpush1.bf16.msra.mxu0 %v548
  %784 = vmatprep.mubr.bf16.mxu0 %v159
  %785 = vmatmul.mubr.bf16.gmra.mrb[0].mxu0 %v158
  %v786 = vpop.f32.mrb[0].mxu0
  %v787 = vadd.f32 %v135, %v786
  %v788 = vpop.f32.mrb[0].mxu0
  %v789 = vadd.f32 %v139, %v788
  %v790 = vpop.f32.mrb[0].mxu0
  %v791 = vadd.f32 %v135, %v790
  %v792 = vpop.f32.mrb[0].mxu0
  %v793 = vadd.f32 %v139, %v792
  %794 = vmatprep.mubr.bf16.mxu0 %v161
  %795 = vmatmul.mubr.bf16.gmra.mrb[0].mxu0 %v160
  %v796 = vpop.f32.mrb[0].mxu0
  %v797 = vadd.f32 %v135, %v796
  %v798 = vpop.f32.mrb[0].mxu0
  %v799 = vadd.f32 %v139, %v798
  %v800 = vpop.f32.mrb[0].mxu0
  %v801 = vadd.f32 %v135, %v800
  %v802 = vpop.f32.mrb[0].mxu0
  %v803 = vadd.f32 %v139, %v802
  %804 = vdwg.mxu0
  %v805 = vpack.c.bf16 %v685, %v681
  %v806 = vpack.c.bf16 %v687, %v683
  %v807 = vpack.c.bf16 %v738, %v734
  %v808 = vpack.c.bf16 %v740, %v736
  %v809 = vpack.c.bf16 %v791, %v787
  %v810 = vpack.c.bf16 %v793, %v789
  %v811 = vpack.c.bf16 %v695, %v691
  %v812 = vpack.c.bf16 %v697, %v693
  %v813 = vpack.c.bf16 %v748, %v744
  %v814 = vpack.c.bf16 %v750, %v746
  %v815 = vpack.c.bf16 %v801, %v797
  %v816 = vpack.c.bf16 %v803, %v799
  %v829 = vunpack.c.l.b16 %v805
  %v830 = vunpack.c.l.b16 %v806
  %v831 = vunpack.c.l.b16 %v807
  %v832 = vunpack.c.l.b16 %v808
  %v833 = vunpack.c.l.b16 %v809
  %v834 = vunpack.c.l.b16 %v810
  %v835 = vunpack.c.h.b16 %v805
  %v836 = vunpack.c.h.b16 %v806
  %v837 = vunpack.c.h.b16 %v807
  %v838 = vunpack.c.h.b16 %v808
  %v839 = vunpack.c.h.b16 %v809
  %v840 = vunpack.c.h.b16 %v810
  %v841 = vunpack.c.l.b16 %v811
  %v842 = vunpack.c.l.b16 %v812
  %v843 = vunpack.c.l.b16 %v813
  %v844 = vunpack.c.l.b16 %v814
  %v845 = vunpack.c.l.b16 %v815
  %v846 = vunpack.c.l.b16 %v816
  %v847 = vunpack.c.h.b16 %v811
  %v848 = vunpack.c.h.b16 %v812
  %v849 = vunpack.c.h.b16 %v813
  %v850 = vunpack.c.h.b16 %v814
  %v851 = vunpack.c.h.b16 %v815
  %v852 = vunpack.c.h.b16 %v816
  %v853 = vpack.c.b16 %v830, %v829
  %v854 = vpack.c.b16 %v832, %v831
  %v855 = vpack.c.b16 %v834, %v833
  %v856 = vpack.c.b16 %v836, %v835
  %v857 = vpack.c.b16 %v838, %v837
  %v858 = vpack.c.b16 %v840, %v839
  %v859 = vpack.c.b16 %v842, %v841
  %v860 = vpack.c.b16 %v844, %v843
  %v861 = vpack.c.b16 %v846, %v845
  %v862 = vpack.c.b16 %v848, %v847
  %v863 = vpack.c.b16 %v850, %v849
  %v864 = vpack.c.b16 %v852, %v851
  %877 = vst [vmem:[%s3] sm:$0xff] %v853
  %878 = vst [vmem:[%s3 + $0x8] sm:$0xff] %v854
  %879 = vst [vmem:[%s3 + $0x10] sm:$0xff] %v855
  %880 = vst [vmem:[%s3 + $0x18] sm:$0xff] %v856
  %881 = vst [vmem:[%s3 + $0x20] sm:$0xff] %v857
  %882 = vst [vmem:[%s3 + $0x28] sm:$0xff] %v858
  %883 = vst [vmem:[%s3 + $0x30] sm:$0xff] %v859
  %884 = vst [vmem:[%s3 + $0x38] sm:$0xff] %v860
  %885 = vst [vmem:[%s3 + $0x40] sm:$0xff] %v861
  %886 = vst [vmem:[%s3 + $0x48] sm:$0xff] %v862
  %887 = vst [vmem:[%s3 + $0x50] sm:$0xff] %v863
  %888 = vst [vmem:[%s3 + $0x58] sm:$0xff] %v864
  // Predicated region
  $region14: #{transformer_encoder.9} parent=0 // pred_check
    _
  $region15: #{transformer_encoder.9} parent=0 // pred_check_branch
    %890 = sbr.rel (0) target = $region17
  $region16: #{transformer_encoder.9} parent=0 // pred_region
    _
  $region17: #{transformer_encoder.9} parent=0 // pred_fallthru
    _
  // Predicated region
  $region18: #{transformer_encoder.9} parent=0 // pred_check
    _
  $region19: #{transformer_encoder.9} parent=0 // pred_check_branch
    %892 = sbr.rel (0) target = $region21
  $region20: #{transformer_encoder.9} parent=0 // pred_region
    _
  $region21: #{transformer_encoder.9} parent=0 // pred_fallthru
    _

// kernel: transformer_encoder.8
$region0: #{transformer_encoder.8}
  #allocation0 [shape = 'u32[]', space=smem, size = 0x4, offset = 0x4, fixed_abs, tag = 'smem constant byte address 0x4 - core index']
  #allocation1 [shape = 'u32[144,128]{1,0:T(1,128)}', space=vmem, size = 0x12000, scoped, tag = 'internal scratch']
  %s0 = inlined_call_operand.vmem [shape: f32[32,256], index: 0, kind: input, shape index: {}]
  %s1 = inlined_call_operand.vmem [shape: bf16[32,256], index: 1, kind: input, shape index: {}]
  %s2 = inlined_call_operand.vmem [shape: bf16[256,256], index: 2, kind: input, shape index: {}]
  %s3 = inlined_call_operand.hbm [shape: f32[1,256], index: 3, kind: input, shape index: {}]
  %s4 = inlined_call_operand.vmem [shape: bf16[256,512], index: 4, kind: input, shape index: {}]
  %s5 = inlined_call_operand.vmem [shape: f32[1,512], index: 5, kind: input, shape index: {}]
  %s6 = inlined_call_operand.vmem [shape: bf16[512,256], index: 6, kind: input, shape index: {}]
  %s7 = inlined_call_operand.hbm [shape: f32[1,256], index: 7, kind: input, shape index: {}]
  %s8 = inlined_call_operand.vmem [shape: f32[32,256], index: 8, kind: output, shape index: {0}]
  %s9 = inlined_call_operand.vmem [shape: bf16[32,256], index: 9, kind: output, shape index: {1}]
  %10 = xla_tuple %s8, %s9
  %s11 = sld [smem:[#allocation0]]
  $region58: #{transformer_encoder.8} parent=0
    _
  %s13 = ssub.s32 1, %s11
  %s14 = scalar_select 0, %s13, %s11
  $region1: #{transformer_encoder.8} parent=0
    #allocation2 [shape = 'u8[1024]{0}', space=vmem, size = 0x400, scoped, tag = 'input window, operand 3, single buffered']
    #allocation3 [shape = 's32[1]{0}', space=sflag, size = 0x4, scoped, tag = 'scoped memory for transformer_encoder.8']
    #allocation4 [shape = 'u8[1024]{0}', space=vmem, size = 0x400, scoped, tag = 'input window, operand 7, single buffered']
    #allocation5 [shape = 's32[1]{0}', space=sflag, size = 0x4, scoped, tag = 'scoped memory for transformer_encoder.8']
    %15 = vsyncpa [#allocation3], 0
    %16 = vsyncpa [#allocation5], 0
    // Predicated region
    $region2: #{transformer_encoder.8} parent=1 // pred_check
      _
    $region3: #{transformer_encoder.8} parent=1 // pred_check_branch
      %18 = sbr.rel (0) target = $region5
    $region4: #{transformer_encoder.8} parent=1 // pred_region
      _
    $region5: #{transformer_encoder.8} parent=1 // pred_fallthru
      _
    // Predicated region
    $region6: #{transformer_encoder.8} parent=1 // pred_check
      _
    $region7: #{transformer_encoder.8} parent=1 // pred_check_branch
      %20 = sbr.rel (0) target = $region9
    $region8: #{transformer_encoder.8} parent=1 // pred_region
      _
    $region9: #{transformer_encoder.8} parent=1 // pred_fallthru
      _
    // Predicated region
    $region10: #{transformer_encoder.8} parent=1 // pred_check
      _
    $region11: #{transformer_encoder.8} parent=1 // pred_check_branch
      %22 = sbr.rel (0) target = $region13
    $region12: #{transformer_encoder.8} parent=1 // pred_region
      _
    $region13: #{transformer_encoder.8} parent=1 // pred_fallthru
      _
    // Predicated region
    $region14: #{transformer_encoder.8} parent=1 // pred_check
      _
    $region15: #{transformer_encoder.8} parent=1 // pred_check_branch
      %24 = sbr.rel (0) target = $region17
    $region16: #{transformer_encoder.8} parent=1 // pred_region
      %s26 = ssub.s32 32, 32
      %27 = vsyncadd [#allocation3], %s26
      %s29 = sshll.u32 [#allocation2], 4
      %s30 = int_to_ptr.vmem [resolvable:$true] %s29
      %32 = dma.hbm_to_vmem [thread:$0]  %s3, 32, %s30, [#allocation3]
    $region17: #{transformer_encoder.8} parent=1 // pred_fallthru
      _
    // Predicated region
    $region18: #{transformer_encoder.8} parent=1 // pred_check
      _
    $region19: #{transformer_encoder.8} parent=1 // pred_check_branch
      %34 = sbr.rel (0) target = $region21
    $region20: #{transformer_encoder.8} parent=1 // pred_region
      _
    $region21: #{transformer_encoder.8} parent=1 // pred_fallthru
      _
    // Predicated region
    $region22: #{transformer_encoder.8} parent=1 // pred_check
      _
    $region23: #{transformer_encoder.8} parent=1 // pred_check_branch
      %36 = sbr.rel (0) target = $region25
    $region24: #{transformer_encoder.8} parent=1 // pred_region
      _
    $region25: #{transformer_encoder.8} parent=1 // pred_fallthru
      _
    // Predicated region
    $region26: #{transformer_encoder.8} parent=1 // pred_check
      _
    $region27: #{transformer_encoder.8} parent=1 // pred_check_branch
      %38 = sbr.rel (0) target = $region29
    $region28: #{transformer_encoder.8} parent=1 // pred_region
      _
    $region29: #{transformer_encoder.8} parent=1 // pred_fallthru
      _
    // Predicated region
    $region30: #{transformer_encoder.8} parent=1 // pred_check
      _
    $region31: #{transformer_encoder.8} parent=1 // pred_check_branch
      %40 = sbr.rel (0) target = $region33
    $region32: #{transformer_encoder.8} parent=1 // pred_region
      %s42 = ssub.s32 32, 32
      %43 = vsyncadd [#allocation5], %s42
      %s45 = sshll.u32 [#allocation4], 4
      %s46 = int_to_ptr.vmem [resolvable:$true] %s45
      %48 = dma.hbm_to_vmem [thread:$0]  %s7, 32, %s46, [#allocation5]
    $region33: #{transformer_encoder.8} parent=1 // pred_fallthru
      _
    // Predicated region
    $region34: #{transformer_encoder.8} parent=1 // pred_check
      _
    $region35: #{transformer_encoder.8} parent=1 // pred_check_branch
      %50 = sbr.rel (0) target = $region37
    $region36: #{transformer_encoder.8} parent=1 // pred_region
      %51 = dma.done [#allocation3], 32
    $region37: #{transformer_encoder.8} parent=1 // pred_fallthru
      _
    // Predicated region
    $region38: #{transformer_encoder.8} parent=1 // pred_check
      _
    $region39: #{transformer_encoder.8} parent=1 // pred_check_branch
      %53 = sbr.rel (0) target = $region41
    $region40: #{transformer_encoder.8} parent=1 // pred_region
      %54 = dma.done [#allocation5], 32
    $region41: #{transformer_encoder.8} parent=1 // pred_fallthru
      _
    %v55 = vld [vmem:[%s0] sm:$0xff]
    %v56 = vld [vmem:[%s0 + $0x8] sm:$0xff]
    %v57 = vld [vmem:[%s0 + $0x10] sm:$0xff]
    %v58 = vld [vmem:[%s0 + $0x18] sm:$0xff]
    %v59 = vld [vmem:[%s0 + $0x20] sm:$0xff]
    %v60 = vld [vmem:[%s0 + $0x28] sm:$0xff]
    %v61 = vld [vmem:[%s0 + $0x30] sm:$0xff]
    %v62 = vld [vmem:[%s0 + $0x38] sm:$0xff]
    %v63 = vld [vmem:[%s1] sm:$0xff]
    %v64 = vld [vmem:[%s1 + $0x8] sm:$0xff]
    %v65 = vld [vmem:[%s1 + $0x10] sm:$0xff]
    %v66 = vld [vmem:[%s1 + $0x18] sm:$0xff]
    %v67 = vld [vmem:[%s2] sm:$0xff]
    %v68 = vld [vmem:[%s2 + $0x8] sm:$0xff]
    %v69 = vld [vmem:[%s2 + $0x10] sm:$0xff]
    %v70 = vld [vmem:[%s2 + $0x18] sm:$0xff]
    %v71 = vld [vmem:[%s2 + $0x20] sm:$0xff]
    %v72 = vld [vmem:[%s2 + $0x28] sm:$0xff]
    %v73 = vld [vmem:[%s2 + $0x30] sm:$0xff]
    %v74 = vld [vmem:[%s2 + $0x38] sm:$0xff]
    %v75 = vld [vmem:[%s2 + $0x40] sm:$0xff]
    %v76 = vld [vmem:[%s2 + $0x48] sm:$0xff]
    %v77 = vld [vmem:[%s2 + $0x50] sm:$0xff]
    %v78 = vld [vmem:[%s2 + $0x58] sm:$0xff]
    %v79 = vld [vmem:[%s2 + $0x60] sm:$0xff]
    %v80 = vld [vmem:[%s2 + $0x68] sm:$0xff]
    %v81 = vld [vmem:[%s2 + $0x70] sm:$0xff]
    %v82 = vld [vmem:[%s2 + $0x78] sm:$0xff]
    %v83 = vld [vmem:[%s2 + $0x80] sm:$0xff]
    %v84 = vld [vmem:[%s2 + $0x88] sm:$0xff]
    %v85 = vld [vmem:[%s2 + $0x90] sm:$0xff]
    %v86 = vld [vmem:[%s2 + $0x98] sm:$0xff]
    %v87 = vld [vmem:[%s2 + $0xa0] sm:$0xff]
    %v88 = vld [vmem:[%s2 + $0xa8] sm:$0xff]
    %v89 = vld [vmem:[%s2 + $0xb0] sm:$0xff]
    %v90 = vld [vmem:[%s2 + $0xb8] sm:$0xff]
    %v91 = vld [vmem:[%s2 + $0xc0] sm:$0xff]
    %v92 = vld [vmem:[%s2 + $0xc8] sm:$0xff]
    %v93 = vld [vmem:[%s2 + $0xd0] sm:$0xff]
    %v94 = vld [vmem:[%s2 + $0xd8] sm:$0xff]
    %v95 = vld [vmem:[%s2 + $0xe0] sm:$0xff]
    %v96 = vld [vmem:[%s2 + $0xe8] sm:$0xff]
    %v97 = vld [vmem:[%s2 + $0xf0] sm:$0xff]
    %v98 = vld [vmem:[%s2 + $0xf8] sm:$0xff]
    %v103 = vunpack.c.l.b16 %v63
    %v104 = vunpack.c.h.b16 %v63
    %v105 = vunpack.c.l.b16 %v64
    %v106 = vunpack.c.h.b16 %v64
    %v107 = vunpack.c.l.b16 %v65
    %v108 = vunpack.c.h.b16 %v65
    %v109 = vunpack.c.l.b16 %v66
    %v110 = vunpack.c.h.b16 %v66
    %v111 = vpack.c.b16 %v105, %v103
    %v112 = vpack.c.b16 %v106, %v104
    %v113 = vpack.c.b16 %v109, %v107
    %v114 = vpack.c.b16 %v110, %v108
    %v151 = vunpack.c.l.b16 %v67
    %v152 = vunpack.c.h.b16 %v67
    %v153 = vunpack.c.l.b16 %v68
    %v154 = vunpack.c.h.b16 %v68
    %v155 = vunpack.c.l.b16 %v69
    %v156 = vunpack.c.h.b16 %v69
    %v157 = vunpack.c.l.b16 %v70
    %v158 = vunpack.c.h.b16 %v70
    %v159 = vunpack.c.l.b16 %v71
    %v160 = vunpack.c.h.b16 %v71
    %v161 = vunpack.c.l.b16 %v72
    %v162 = vunpack.c.h.b16 %v72
    %v163 = vunpack.c.l.b16 %v73
    %v164 = vunpack.c.h.b16 %v73
    %v165 = vunpack.c.l.b16 %v74
    %v166 = vunpack.c.h.b16 %v74
    %v167 = vunpack.c.l.b16 %v75
    %v168 = vunpack.c.h.b16 %v75
    %v169 = vunpack.c.l.b16 %v76
    %v170 = vunpack.c.h.b16 %v76
    %v171 = vunpack.c.l.b16 %v77
    %v172 = vunpack.c.h.b16 %v77
    %v173 = vunpack.c.l.b16 %v78
    %v174 = vunpack.c.h.b16 %v78
    %v175 = vunpack.c.l.b16 %v79
    %v176 = vunpack.c.h.b16 %v79
    %v177 = vunpack.c.l.b16 %v80
    %v178 = vunpack.c.h.b16 %v80
    %v179 = vunpack.c.l.b16 %v81
    %v180 = vunpack.c.h.b16 %v81
    %v181 = vunpack.c.l.b16 %v82
    %v182 = vunpack.c.h.b16 %v82
    %v183 = vunpack.c.l.b16 %v83
    %v184 = vunpack.c.h.b16 %v83
    %v185 = vunpack.c.l.b16 %v84
    %v186 = vunpack.c.h.b16 %v84
    %v187 = vunpack.c.l.b16 %v85
    %v188 = vunpack.c.h.b16 %v85
    %v189 = vunpack.c.l.b16 %v86
    %v190 = vunpack.c.h.b16 %v86
    %v191 = vunpack.c.l.b16 %v87
    %v192 = vunpack.c.h.b16 %v87
    %v193 = vunpack.c.l.b16 %v88
    %v194 = vunpack.c.h.b16 %v88
    %v195 = vunpack.c.l.b16 %v89
    %v196 = vunpack.c.h.b16 %v89
    %v197 = vunpack.c.l.b16 %v90
    %v198 = vunpack.c.h.b16 %v90
    %v199 = vunpack.c.l.b16 %v91
    %v200 = vunpack.c.h.b16 %v91
    %v201 = vunpack.c.l.b16 %v92
    %v202 = vunpack.c.h.b16 %v92
    %v203 = vunpack.c.l.b16 %v93
    %v204 = vunpack.c.h.b16 %v93
    %v205 = vunpack.c.l.b16 %v94
    %v206 = vunpack.c.h.b16 %v94
    %v207 = vunpack.c.l.b16 %v95
    %v208 = vunpack.c.h.b16 %v95
    %v209 = vunpack.c.l.b16 %v96
    %v210 = vunpack.c.h.b16 %v96
    %v211 = vunpack.c.l.b16 %v97
    %v212 = vunpack.c.h.b16 %v97
    %v213 = vunpack.c.l.b16 %v98
    %v214 = vunpack.c.h.b16 %v98
    %v215 = vpack.c.b16 %v153, %v151
    %v216 = vpack.c.b16 %v154, %v152
    %v217 = vpack.c.b16 %v157, %v155
    %v218 = vpack.c.b16 %v158, %v156
    %v219 = vpack.c.b16 %v161, %v159
    %v220 = vpack.c.b16 %v162, %v160
    %v221 = vpack.c.b16 %v165, %v163
    %v222 = vpack.c.b16 %v166, %v164
    %v223 = vpack.c.b16 %v169, %v167
    %v224 = vpack.c.b16 %v170, %v168
    %v225 = vpack.c.b16 %v173, %v171
    %v226 = vpack.c.b16 %v174, %v172
    %v227 = vpack.c.b16 %v177, %v175
    %v228 = vpack.c.b16 %v178, %v176
    %v229 = vpack.c.b16 %v181, %v179
    %v230 = vpack.c.b16 %v182, %v180
    %v231 = vpack.c.b16 %v185, %v183
    %v232 = vpack.c.b16 %v186, %v184
    %v233 = vpack.c.b16 %v189, %v187
    %v234 = vpack.c.b16 %v190, %v188
    %v235 = vpack.c.b16 %v193, %v191
    %v236 = vpack.c.b16 %v194, %v192
    %v237 = vpack.c.b16 %v197, %v195
    %v238 = vpack.c.b16 %v198, %v196
    %v239 = vpack.c.b16 %v201, %v199
    %v240 = vpack.c.b16 %v202, %v200
    %v241 = vpack.c.b16 %v205, %v203
    %v242 = vpack.c.b16 %v206, %v204
    %v243 = vpack.c.b16 %v209, %v207
    %v244 = vpack.c.b16 %v210, %v208
    %v245 = vpack.c.b16 %v213, %v211
    %v246 = vpack.c.b16 %v214, %v212
    %279 = vmatprep.subr.bf16.mxu0 %v216
    %280 = vmatpush1.bf16.msra.mxu0 %v215
    %281 = vmatprep.subr.bf16.mxu0 %v218
    %282 = vmatpush1.bf16.msra.mxu0 %v217
    %283 = vmatprep.subr.bf16.mxu0 %v220
    %284 = vmatpush1.bf16.msra.mxu0 %v219
    %285 = vmatprep.subr.bf16.mxu0 %v222
    %286 = vmatpush1.bf16.msra.mxu0 %v221
    %287 = vmatprep.subr.bf16.mxu0 %v224
    %288 = vmatpush1.bf16.msra.mxu0 %v223
    %289 = vmatprep.subr.bf16.mxu0 %v226
    %290 = vmatpush1.bf16.msra.mxu0 %v225
    %291 = vmatprep.subr.bf16.mxu0 %v228
    %292 = vmatpush1.bf16.msra.mxu0 %v227
    %293 = vmatprep.subr.bf16.mxu0 %v230
    %294 = vmatpush1.bf16.msra.mxu0 %v229
    %295 = vmatprep.subr.bf16.mxu0 %v232
    %296 = vmatpush1.bf16.msra.mxu0 %v231
    %297 = vmatprep.subr.bf16.mxu0 %v234
    %298 = vmatpush1.bf16.msra.mxu0 %v233
    %299 = vmatprep.subr.bf16.mxu0 %v236
    %300 = vmatpush1.bf16.msra.mxu0 %v235
    %301 = vmatprep.subr.bf16.mxu0 %v238
    %302 = vmatpush1.bf16.msra.mxu0 %v237
    %303 = vmatprep.subr.bf16.mxu0 %v240
    %304 = vmatpush1.bf16.msra.mxu0 %v239
    %305 = vmatprep.subr.bf16.mxu0 %v242
    %306 = vmatpush1.bf16.msra.mxu0 %v241
    %307 = vmatprep.subr.bf16.mxu0 %v244
    %308 = vmatpush1.bf16.msra.mxu0 %v243
    %309 = vmatprep.subr.bf16.mxu0 %v246
    %310 = vmatpush1.bf16.msra.mxu0 %v245
    %311 = vmatprep.mubr.bf16.mxu0 %v112
    %312 = vmatmul.mubr.bf16.gmra.mrb[0].mxu0 %v111
    %v313 = vpop.f32.mrb[0].mxu0
    %v314 = vadd.f32 0.0, %v313
    %v315 = vpop.f32.mrb[0].mxu0
    %v316 = vadd.f32 0.0, %v315
    %v317 = vpop.f32.mrb[0].mxu0
    %v318 = vadd.f32 0.0, %v317
    %v319 = vpop.f32.mrb[0].mxu0
    %v320 = vadd.f32 0.0, %v319
    %321 = vmatprep.mubr.bf16.mxu0 %v114
    %322 = vmatmul.mubr.bf16.gmra.mrb[0].mxu0 %v113
    %v323 = vpop.f32.mrb[0].mxu0
    %v324 = vadd.f32 0.0, %v323
    %v325 = vpop.f32.mrb[0].mxu0
    %v326 = vadd.f32 0.0, %v325
    %v327 = vpop.f32.mrb[0].mxu0
    %v328 = vadd.f32 0.0, %v327
    %v329 = vpop.f32.mrb[0].mxu0
    %v330 = vadd.f32 0.0, %v329
    %331 = vdwg.mxu0
    %v332 = vadd.f32 %v55, %v314
    %v333 = vadd.f32 %v56, %v316
    %v334 = vadd.f32 %v57, %v318
    %v335 = vadd.f32 %v58, %v320
    %v336 = vadd.f32 %v59, %v324
    %v337 = vadd.f32 %v60, %v326
    %v338 = vadd.f32 %v61, %v328
    %v339 = vadd.f32 %v62, %v330
    %v340 = vld [vmem:[#allocation2] sm:$0x3]
    %v342 = vlaneseq
    %v343 = vshrl.u32 %v342, 7
    %v344 = vsub.s32 0, %v343
    %v345 = vrot.slane %v340, %v344
    %v346 = vlaneseq
    %v347 = vshrl.u32 %v346, 7
    %v348 = vsub.s32 1, %v347
    %v349 = vrot.slane %v340, %v348
    %v352 = vadd.f32 %v332, %v345
    %v353 = vadd.f32 %v333, %v349
    %v354 = vadd.f32 %v334, %v345
    %v355 = vadd.f32 %v335, %v349
    %v356 = vadd.f32 %v336, %v345
    %v357 = vadd.f32 %v337, %v349
    %v358 = vadd.f32 %v338, %v345
    %v359 = vadd.f32 %v339, %v349
    %v360 = vpack.c.bf16 %v354, %v352
    %v361 = vpack.c.bf16 %v355, %v353
    %v362 = vpack.c.bf16 %v358, %v356
    %v363 = vpack.c.bf16 %v359, %v357
    %v364 = vld [vmem:[%s4] sm:$0xff]
    %v365 = vld [vmem:[%s4 + $0x8] sm:$0xff]
    %v366 = vld [vmem:[%s4 + $0x10] sm:$0xff]
    %v367 = vld [vmem:[%s4 + $0x18] sm:$0xff]
    %v368 = vld [vmem:[%s4 + $0x20] sm:$0xff]
    %v369 = vld [vmem:[%s4 + $0x28] sm:$0xff]
    %v370 = vld [vmem:[%s4 + $0x30] sm:$0xff]
    %v371 = vld [vmem:[%s4 + $0x38] sm:$0xff]
    %v372 = vld [vmem:[%s4 + $0x40] sm:$0xff]
    %v373 = vld [vmem:[%s4 + $0x48] sm:$0xff]
    %v374 = vld [vmem:[%s4 + $0x50] sm:$0xff]
    %v375 = vld [vmem:[%s4 + $0x58] sm:$0xff]
    %v376 = vld [vmem:[%s4 + $0x60] sm:$0xff]
    %v377 = vld [vmem:[%s4 + $0x68] sm:$0xff]
    %v378 = vld [vmem:[%s4 + $0x70] sm:$0xff]
    %v379 = vld [vmem:[%s4 + $0x78] sm:$0xff]
    %v380 = vld [vmem:[%s4 + $0x80] sm:$0xff]
    %v381 = vld [vmem:[%s4 + $0x88] sm:$0xff]
    %v382 = vld [vmem:[%s4 + $0x90] sm:$0xff]
    %v383 = vld [vmem:[%s4 + $0x98] sm:$0xff]
    %v384 = vld [vmem:[%s4 + $0xa0] sm:$0xff]
    %v385 = vld [vmem:[%s4 + $0xa8] sm:$0xff]
    %v386 = vld [vmem:[%s4 + $0xb0] sm:$0xff]
    %v387 = vld [vmem:[%s4 + $0xb8] sm:$0xff]
    %v388 = vld [vmem:[%s4 + $0xc0] sm:$0xff]
    %v389 = vld [vmem:[%s4 + $0xc8] sm:$0xff]
    %v390 = vld [vmem:[%s4 + $0xd0] sm:$0xff]
    %v391 = vld [vmem:[%s4 + $0xd8] sm:$0xff]
    %v392 = vld [vmem:[%s4 + $0xe0] sm:$0xff]
    %v393 = vld [vmem:[%s4 + $0xe8] sm:$0xff]
    %v394 = vld [vmem:[%s4 + $0xf0] sm:$0xff]
    %v395 = vld [vmem:[%s4 + $0xf8] sm:$0xff]
    %v396 = vld [vmem:[%s4 + $0x100] sm:$0xff]
    %v397 = vld [vmem:[%s4 + $0x108] sm:$0xff]
    %v398 = vld [vmem:[%s4 + $0x110] sm:$0xff]
    %v399 = vld [vmem:[%s4 + $0x118] sm:$0xff]
    %v400 = vld [vmem:[%s4 + $0x120] sm:$0xff]
    %v401 = vld [vmem:[%s4 + $0x128] sm:$0xff]
    %v402 = vld [vmem:[%s4 + $0x130] sm:$0xff]
    %v403 = vld [vmem:[%s4 + $0x138] sm:$0xff]
    %v404 = vld [vmem:[%s4 + $0x140] sm:$0xff]
    %v405 = vld [vmem:[%s4 + $0x148] sm:$0xff]
    %v406 = vld [vmem:[%s4 + $0x150] sm:$0xff]
    %v407 = vld [vmem:[%s4 + $0x158] sm:$0xff]
    %v408 = vld [vmem:[%s4 + $0x160] sm:$0xff]
    %v409 = vld [vmem:[%s4 + $0x168] sm:$0xff]
    %v410 = vld [vmem:[%s4 + $0x170] sm:$0xff]
    %v411 = vld [vmem:[%s4 + $0x178] sm:$0xff]
    %v412 = vld [vmem:[%s4 + $0x180] sm:$0xff]
    %v413 = vld [vmem:[%s4 + $0x188] sm:$0xff]
    %v414 = vld [vmem:[%s4 + $0x190] sm:$0xff]
    %v415 = vld [vmem:[%s4 + $0x198] sm:$0xff]
    %v416 = vld [vmem:[%s4 + $0x1a0] sm:$0xff]
    %v417 = vld [vmem:[%s4 + $0x1a8] sm:$0xff]
    %v418 = vld [vmem:[%s4 + $0x1b0] sm:$0xff]
    %v419 = vld [vmem:[%s4 + $0x1b8] sm:$0xff]
    %v420 = vld [vmem:[%s4 + $0x1c0] sm:$0xff]
    %v421 = vld [vmem:[%s4 + $0x1c8] sm:$0xff]
    %v422 = vld [vmem:[%s4 + $0x1d0] sm:$0xff]
    %v423 = vld [vmem:[%s4 + $0x1d8] sm:$0xff]
    %v424 = vld [vmem:[%s4 + $0x1e0] sm:$0xff]
    %v425 = vld [vmem:[%s4 + $0x1e8] sm:$0xff]
    %v426 = vld [vmem:[%s4 + $0x1f0] sm:$0xff]
    %v427 = vld [vmem:[%s4 + $0x1f8] sm:$0xff]
    %v428 = vld [vmem:[%s5] sm:$0xf]
    %v430 = vlaneseq
    %v431 = vshrl.u32 %v430, 7
    %v432 = vsub.s32 0, %v431
    %v433 = vrot.slane %v428, %v432
    %v434 = vlaneseq
    %v435 = vshrl.u32 %v434, 7
    %v436 = vsub.s32 1, %v435
    %v437 = vrot.slane %v428, %v436
    %v438 = vlaneseq
    %v439 = vshrl.u32 %v438, 7
    %v440 = vsub.s32 2, %v439
    %v441 = vrot.slane %v428, %v440
    %v442 = vlaneseq
    %v443 = vshrl.u32 %v442, 7
    %v444 = vsub.s32 3, %v443
    %v445 = vrot.slane %v428, %v444
    %v514 = vunpack.c.l.b16 %v364
    %v515 = vunpack.c.h.b16 %v364
    %v516 = vunpack.c.l.b16 %v365
    %v517 = vunpack.c.h.b16 %v365
    %v518 = vunpack.c.l.b16 %v366
    %v519 = vunpack.c.h.b16 %v366
    %v520 = vunpack.c.l.b16 %v367
    %v521 = vunpack.c.h.b16 %v367
    %v522 = vunpack.c.l.b16 %v368
    %v523 = vunpack.c.h.b16 %v368
    %v524 = vunpack.c.l.b16 %v369
    %v525 = vunpack.c.h.b16 %v369
    %v526 = vunpack.c.l.b16 %v370
    %v527 = vunpack.c.h.b16 %v370
    %v528 = vunpack.c.l.b16 %v371
    %v529 = vunpack.c.h.b16 %v371
    %v530 = vunpack.c.l.b16 %v372
    %v531 = vunpack.c.h.b16 %v372
    %v532 = vunpack.c.l.b16 %v373
    %v533 = vunpack.c.h.b16 %v373
    %v534 = vunpack.c.l.b16 %v374
    %v535 = vunpack.c.h.b16 %v374
    %v536 = vunpack.c.l.b16 %v375
    %v537 = vunpack.c.h.b16 %v375
    %v538 = vunpack.c.l.b16 %v376
    %v539 = vunpack.c.h.b16 %v376
    %v540 = vunpack.c.l.b16 %v377
    %v541 = vunpack.c.h.b16 %v377
    %v542 = vunpack.c.l.b16 %v378
    %v543 = vunpack.c.h.b16 %v378
    %v544 = vunpack.c.l.b16 %v379
    %v545 = vunpack.c.h.b16 %v379
    %v546 = vunpack.c.l.b16 %v380
    %v547 = vunpack.c.h.b16 %v380
    %v548 = vunpack.c.l.b16 %v381
    %v549 = vunpack.c.h.b16 %v381
    %v550 = vunpack.c.l.b16 %v382
    %v551 = vunpack.c.h.b16 %v382
    %v552 = vunpack.c.l.b16 %v383
    %v553 = vunpack.c.h.b16 %v383
    %v554 = vunpack.c.l.b16 %v384
    %v555 = vunpack.c.h.b16 %v384
    %v556 = vunpack.c.l.b16 %v385
    %v557 = vunpack.c.h.b16 %v385
    %v558 = vunpack.c.l.b16 %v386
    %v559 = vunpack.c.h.b16 %v386
    %v560 = vunpack.c.l.b16 %v387
    %v561 = vunpack.c.h.b16 %v387
    %v562 = vunpack.c.l.b16 %v388
    %v563 = vunpack.c.h.b16 %v388
    %v564 = vunpack.c.l.b16 %v389
    %v565 = vunpack.c.h.b16 %v389
    %v566 = vunpack.c.l.b16 %v390
    %v567 = vunpack.c.h.b16 %v390
    %v568 = vunpack.c.l.b16 %v391
    %v569 = vunpack.c.h.b16 %v391
    %v570 = vunpack.c.l.b16 %v392
    %v571 = vunpack.c.h.b16 %v392
    %v572 = vunpack.c.l.b16 %v393
    %v573 = vunpack.c.h.b16 %v393
    %v574 = vunpack.c.l.b16 %v394
    %v575 = vunpack.c.h.b16 %v394
    %v576 = vunpack.c.l.b16 %v395
    %v577 = vunpack.c.h.b16 %v395
    %v578 = vunpack.c.l.b16 %v396
    %v579 = vunpack.c.h.b16 %v396
    %v580 = vunpack.c.l.b16 %v397
    %v581 = vunpack.c.h.b16 %v397
    %v582 = vunpack.c.l.b16 %v398
    %v583 = vunpack.c.h.b16 %v398
    %v584 = vunpack.c.l.b16 %v399
    %v585 = vunpack.c.h.b16 %v399
    %v586 = vunpack.c.l.b16 %v400
    %v587 = vunpack.c.h.b16 %v400
    %v588 = vunpack.c.l.b16 %v401
    %v589 = vunpack.c.h.b16 %v401
    %v590 = vunpack.c.l.b16 %v402
    %v591 = vunpack.c.h.b16 %v402
    %v592 = vunpack.c.l.b16 %v403
    %v593 = vunpack.c.h.b16 %v403
    %v594 = vunpack.c.l.b16 %v404
    %v595 = vunpack.c.h.b16 %v404
    %v596 = vunpack.c.l.b16 %v405
    %v597 = vunpack.c.h.b16 %v405
    %v598 = vunpack.c.l.b16 %v406
    %v599 = vunpack.c.h.b16 %v406
    %v600 = vunpack.c.l.b16 %v407
    %v601 = vunpack.c.h.b16 %v407
    %v602 = vunpack.c.l.b16 %v408
    %v603 = vunpack.c.h.b16 %v408
    %v604 = vunpack.c.l.b16 %v409
    %v605 = vunpack.c.h.b16 %v409
    %v606 = vunpack.c.l.b16 %v410
    %v607 = vunpack.c.h.b16 %v410
    %v608 = vunpack.c.l.b16 %v411
    %v609 = vunpack.c.h.b16 %v411
    %v610 = vunpack.c.l.b16 %v412
    %v611 = vunpack.c.h.b16 %v412
    %v612 = vunpack.c.l.b16 %v413
    %v613 = vunpack.c.h.b16 %v413
    %v614 = vunpack.c.l.b16 %v414
    %v615 = vunpack.c.h.b16 %v414
    %v616 = vunpack.c.l.b16 %v415
    %v617 = vunpack.c.h.b16 %v415
    %v618 = vunpack.c.l.b16 %v416
    %v619 = vunpack.c.h.b16 %v416
    %v620 = vunpack.c.l.b16 %v417
    %v621 = vunpack.c.h.b16 %v417
    %v622 = vunpack.c.l.b16 %v418
    %v623 = vunpack.c.h.b16 %v418
    %v624 = vunpack.c.l.b16 %v419
    %v625 = vunpack.c.h.b16 %v419
    %v626 = vunpack.c.l.b16 %v420
    %v627 = vunpack.c.h.b16 %v420
    %v628 = vunpack.c.l.b16 %v421
    %v629 = vunpack.c.h.b16 %v421
    %v630 = vunpack.c.l.b16 %v422
    %v631 = vunpack.c.h.b16 %v422
    %v632 = vunpack.c.l.b16 %v423
    %v633 = vunpack.c.h.b16 %v423
    %v634 = vunpack.c.l.b16 %v424
    %v635 = vunpack.c.h.b16 %v424
    %v636 = vunpack.c.l.b16 %v425
    %v637 = vunpack.c.h.b16 %v425
    %v638 = vunpack.c.l.b16 %v426
    %v639 = vunpack.c.h.b16 %v426
    %v640 = vunpack.c.l.b16 %v427
    %v641 = vunpack.c.h.b16 %v427
    %v642 = vpack.c.b16 %v518, %v514
    %v643 = vpack.c.b16 %v519, %v515
    %v644 = vpack.c.b16 %v520, %v516
    %v645 = vpack.c.b16 %v521, %v517
    %v646 = vpack.c.b16 %v526, %v522
    %v647 = vpack.c.b16 %v527, %v523
    %v648 = vpack.c.b16 %v528, %v524
    %v649 = vpack.c.b16 %v529, %v525
    %v650 = vpack.c.b16 %v534, %v530
    %v651 = vpack.c.b16 %v535, %v531
    %v652 = vpack.c.b16 %v536, %v532
    %v653 = vpack.c.b16 %v537, %v533
    %v654 = vpack.c.b16 %v542, %v538
    %v655 = vpack.c.b16 %v543, %v539
    %v656 = vpack.c.b16 %v544, %v540
    %v657 = vpack.c.b16 %v545, %v541
    %v658 = vpack.c.b16 %v550, %v546
    %v659 = vpack.c.b16 %v551, %v547
    %v660 = vpack.c.b16 %v552, %v548
    %v661 = vpack.c.b16 %v553, %v549
    %v662 = vpack.c.b16 %v558, %v554
    %v663 = vpack.c.b16 %v559, %v555
    %v664 = vpack.c.b16 %v560, %v556
    %v665 = vpack.c.b16 %v561, %v557
    %v666 = vpack.c.b16 %v566, %v562
    %v667 = vpack.c.b16 %v567, %v563
    %v668 = vpack.c.b16 %v568, %v564
    %v669 = vpack.c.b16 %v569, %v565
    %v670 = vpack.c.b16 %v574, %v570
    %v671 = vpack.c.b16 %v575, %v571
    %v672 = vpack.c.b16 %v576, %v572
    %v673 = vpack.c.b16 %v577, %v573
    %v674 = vpack.c.b16 %v582, %v578
    %v675 = vpack.c.b16 %v583, %v579
    %v676 = vpack.c.b16 %v584, %v580
    %v677 = vpack.c.b16 %v585, %v581
    %v678 = vpack.c.b16 %v590, %v586
    %v679 = vpack.c.b16 %v591, %v587
    %v680 = vpack.c.b16 %v592, %v588
    %v681 = vpack.c.b16 %v593, %v589
    %v682 = vpack.c.b16 %v598, %v594
    %v683 = vpack.c.b16 %v599, %v595
    %v684 = vpack.c.b16 %v600, %v596
    %v685 = vpack.c.b16 %v601, %v597
    %v686 = vpack.c.b16 %v606, %v602
    %v687 = vpack.c.b16 %v607, %v603
    %v688 = vpack.c.b16 %v608, %v604
    %v689 = vpack.c.b16 %v609, %v605
    %v690 = vpack.c.b16 %v614, %v610
    %v691 = vpack.c.b16 %v615, %v611
    %v692 = vpack.c.b16 %v616, %v612
    %v693 = vpack.c.b16 %v617, %v613
    %v694 = vpack.c.b16 %v622, %v618
    %v695 = vpack.c.b16 %v623, %v619
    %v696 = vpack.c.b16 %v624, %v620
    %v697 = vpack.c.b16 %v625, %v621
    %v698 = vpack.c.b16 %v630, %v626
    %v699 = vpack.c.b16 %v631, %v627
    %v700 = vpack.c.b16 %v632, %v628
    %v701 = vpack.c.b16 %v633, %v629
    %v702 = vpack.c.b16 %v638, %v634
    %v703 = vpack.c.b16 %v639, %v635
    %v704 = vpack.c.b16 %v640, %v636
    %v705 = vpack.c.b16 %v641, %v637
    %770 = vmatprep.subr.bf16.mxu0 %v643
    %771 = vmatpush1.bf16.msra.mxu0 %v642
    %772 = vmatprep.subr.bf16.mxu0 %v647
    %773 = vmatpush1.bf16.msra.mxu0 %v646
    %774 = vmatprep.subr.bf16.mxu0 %v651
    %775 = vmatpush1.bf16.msra.mxu0 %v650
    %776 = vmatprep.subr.bf16.mxu0 %v655
    %777 = vmatpush1.bf16.msra.mxu0 %v654
    %778 = vmatprep.subr.bf16.mxu0 %v659
    %779 = vmatpush1.bf16.msra.mxu0 %v658
    %780 = vmatprep.subr.bf16.mxu0 %v663
    %781 = vmatpush1.bf16.msra.mxu0 %v662
    %782 = vmatprep.subr.bf16.mxu0 %v667
    %783 = vmatpush1.bf16.msra.mxu0 %v666
    %784 = vmatprep.subr.bf16.mxu0 %v671
    %785 = vmatpush1.bf16.msra.mxu0 %v670
    %786 = vmatprep.subr.bf16.mxu0 %v675
    %787 = vmatpush1.bf16.msra.mxu0 %v674
    %788 = vmatprep.subr.bf16.mxu0 %v679
    %789 = vmatpush1.bf16.msra.mxu0 %v678
    %790 = vmatprep.subr.bf16.mxu0 %v683
    %791 = vmatpush1.bf16.msra.mxu0 %v682
    %792 = vmatprep.subr.bf16.mxu0 %v687
    %793 = vmatpush1.bf16.msra.mxu0 %v686
    %794 = vmatprep.subr.bf16.mxu0 %v691
    %795 = vmatpush1.bf16.msra.mxu0 %v690
    %796 = vmatprep.subr.bf16.mxu0 %v695
    %797 = vmatpush1.bf16.msra.mxu0 %v694
    %798 = vmatprep.subr.bf16.mxu0 %v699
    %799 = vmatpush1.bf16.msra.mxu0 %v698
    %800 = vmatprep.subr.bf16.mxu0 %v703
    %801 = vmatpush1.bf16.msra.mxu0 %v702
    %802 = vmatprep.mubr.bf16.mxu0 %v361
    %803 = vmatmul.mubr.bf16.gmra.mrb[0].mxu0 %v360
    %v804 = vpop.f32.mrb[0].mxu0
    %v805 = vadd.f32 %v433, %v804
    %v806 = vpop.f32.mrb[0].mxu0
    %v807 = vadd.f32 %v437, %v806
    %v808 = vpop.f32.mrb[0].mxu0
    %v809 = vadd.f32 %v433, %v808
    %v810 = vpop.f32.mrb[0].mxu0
    %v811 = vadd.f32 %v437, %v810
    %812 = vmatprep.mubr.bf16.mxu0 %v363
    %813 = vmatmul.mubr.bf16.gmra.mrb[0].mxu0 %v362
    %v814 = vpop.f32.mrb[0].mxu0
    %v815 = vadd.f32 %v433, %v814
    %v816 = vpop.f32.mrb[0].mxu0
    %v817 = vadd.f32 %v437, %v816
    %v818 = vpop.f32.mrb[0].mxu0
    %v819 = vadd.f32 %v433, %v818
    %v820 = vpop.f32.mrb[0].mxu0
    %v821 = vadd.f32 %v437, %v820
    %822 = vdwg.mxu0
    %823 = vmatprep.subr.bf16.mxu0 %v645
    %824 = vmatpush1.bf16.msra.mxu0 %v644
    %825 = vmatprep.subr.bf16.mxu0 %v649
    %826 = vmatpush1.bf16.msra.mxu0 %v648
    %827 = vmatprep.subr.bf16.mxu0 %v653
    %828 = vmatpush1.bf16.msra.mxu0 %v652
    %829 = vmatprep.subr.bf16.mxu0 %v657
    %830 = vmatpush1.bf16.msra.mxu0 %v656
    %831 = vmatprep.subr.bf16.mxu0 %v661
    %832 = vmatpush1.bf16.msra.mxu0 %v660
    %833 = vmatprep.subr.bf16.mxu0 %v665
    %834 = vmatpush1.bf16.msra.mxu0 %v664
    %835 = vmatprep.subr.bf16.mxu0 %v669
    %836 = vmatpush1.bf16.msra.mxu0 %v668
    %837 = vmatprep.subr.bf16.mxu0 %v673
    %838 = vmatpush1.bf16.msra.mxu0 %v672
    %839 = vmatprep.subr.bf16.mxu0 %v677
    %840 = vmatpush1.bf16.msra.mxu0 %v676
    %841 = vmatprep.subr.bf16.mxu0 %v681
    %842 = vmatpush1.bf16.msra.mxu0 %v680
    %843 = vmatprep.subr.bf16.mxu0 %v685
    %844 = vmatpush1.bf16.msra.mxu0 %v684
    %845 = vmatprep.subr.bf16.mxu0 %v689
    %846 = vmatpush1.bf16.msra.mxu0 %v688
    %847 = vmatprep.subr.bf16.mxu0 %v693
    %848 = vmatpush1.bf16.msra.mxu0 %v692
    %849 = vmatprep.subr.bf16.mxu0 %v697
    %850 = vmatpush1.bf16.msra.mxu0 %v696
    %851 = vmatprep.subr.bf16.mxu0 %v701
    %852 = vmatpush1.bf16.msra.mxu0 %v700
    %853 = vmatprep.subr.bf16.mxu0 %v705
    %854 = vmatpush1.bf16.msra.mxu0 %v704
    %855 = vmatprep.mubr.bf16.mxu0 %v361
    %856 = vmatmul.mubr.bf16.gmra.mrb[0].mxu0 %v360
    %v857 = vpop.f32.mrb[0].mxu0
    %v858 = vadd.f32 %v441, %v857
    %v859 = vpop.f32.mrb[0].mxu0
    %v860 = vadd.f32 %v445, %v859
    %v861 = vpop.f32.mrb[0].mxu0
    %v862 = vadd.f32 %v441, %v861
    %v863 = vpop.f32.mrb[0].mxu0
    %v864 = vadd.f32 %v445, %v863
    %865 = vmatprep.mubr.bf16.mxu0 %v363
    %866 = vmatmul.mubr.bf16.gmra.mrb[0].mxu0 %v362
    %v867 = vpop.f32.mrb[0].mxu0
    %v868 = vadd.f32 %v441, %v867
    %v869 = vpop.f32.mrb[0].mxu0
    %v870 = vadd.f32 %v445, %v869
    %v871 = vpop.f32.mrb[0].mxu0
    %v872 = vadd.f32 %v441, %v871
    %v873 = vpop.f32.mrb[0].mxu0
    %v874 = vadd.f32 %v445, %v873
    %875 = vdwg.mxu0
    %v876 = vmax.f32 %v805, 0.0
    %v877 = vmax.f32 %v807, 0.0
    %v878 = vmax.f32 %v858, 0.0
    %v879 = vmax.f32 %v860, 0.0
    %v880 = vmax.f32 %v809, 0.0
    %v881 = vmax.f32 %v811, 0.0
    %v882 = vmax.f32 %v862, 0.0
    %v883 = vmax.f32 %v864, 0.0
    %v884 = vmax.f32 %v815, 0.0
    %v885 = vmax.f32 %v817, 0.0
    %v886 = vmax.f32 %v868, 0.0
    %v887 = vmax.f32 %v870, 0.0
    %v888 = vmax.f32 %v819, 0.0
    %v889 = vmax.f32 %v821, 0.0
    %v890 = vmax.f32 %v872, 0.0
    %v891 = vmax.f32 %v874, 0.0
    %v892 = vpack.c.bf16 %v880, %v876
    %v893 = vpack.c.bf16 %v881, %v877
    %v894 = vpack.c.bf16 %v882, %v878
    %v895 = vpack.c.bf16 %v883, %v879
    %v896 = vpack.c.bf16 %v888, %v884
    %v897 = vpack.c.bf16 %v889, %v885
    %v898 = vpack.c.bf16 %v890, %v886
    %v899 = vpack.c.bf16 %v891, %v887
    %v900 = vld [vmem:[%s6] sm:$0xff]
    %v901 = vld [vmem:[%s6 + $0x8] sm:$0xff]
    %v902 = vld [vmem:[%s6 + $0x10] sm:$0xff]
    %v903 = vld [vmem:[%s6 + $0x18] sm:$0xff]
    %v904 = vld [vmem:[%s6 + $0x20] sm:$0xff]
    %v905 = vld [vmem:[%s6 + $0x28] sm:$0xff]
    %v906 = vld [vmem:[%s6 + $0x30] sm:$0xff]
    %v907 = vld [vmem:[%s6 + $0x38] sm:$0xff]
    %v908 = vld [vmem:[%s6 + $0x40] sm:$0xff]
    %v909 = vld [vmem:[%s6 + $0x48] sm:$0xff]
    %v910 = vld [vmem:[%s6 + $0x50] sm:$0xff]
    %v911 = vld [vmem:[%s6 + $0x58] sm:$0xff]
    %v912 = vld [vmem:[%s6 + $0x60] sm:$0xff]
    %v913 = vld [vmem:[%s6 + $0x68] sm:$0xff]
    %v914 = vld [vmem:[%s6 + $0x70] sm:$0xff]
    %v915 = vld [vmem:[%s6 + $0x78] sm:$0xff]
    %v916 = vld [vmem:[%s6 + $0x80] sm:$0xff]
    %v917 = vld [vmem:[%s6 + $0x88] sm:$0xff]
    %v918 = vld [vmem:[%s6 + $0x90] sm:$0xff]
    %v919 = vld [vmem:[%s6 + $0x98] sm:$0xff]
    %v920 = vld [vmem:[%s6 + $0xa0] sm:$0xff]
    %v921 = vld [vmem:[%s6 + $0xa8] sm:$0xff]
    %v922 = vld [vmem:[%s6 + $0xb0] sm:$0xff]
    %v923 = vld [vmem:[%s6 + $0xb8] sm:$0xff]
    %v924 = vld [vmem:[%s6 + $0xc0] sm:$0xff]
    %v925 = vld [vmem:[%s6 + $0xc8] sm:$0xff]
    %v926 = vld [vmem:[%s6 + $0xd0] sm:$0xff]
    %v927 = vld [vmem:[%s6 + $0xd8] sm:$0xff]
    %v928 = vld [vmem:[%s6 + $0xe0] sm:$0xff]
    %v929 = vld [vmem:[%s6 + $0xe8] sm:$0xff]
    %v930 = vld [vmem:[%s6 + $0xf0] sm:$0xff]
    %v931 = vld [vmem:[%s6 + $0xf8] sm:$0xff]
    %v932 = vld [vmem:[%s6 + $0x100] sm:$0xff]
    %v933 = vld [vmem:[%s6 + $0x108] sm:$0xff]
    %v934 = vld [vmem:[%s6 + $0x110] sm:$0xff]
    %v935 = vld [vmem:[%s6 + $0x118] sm:$0xff]
    %v936 = vld [vmem:[%s6 + $0x120] sm:$0xff]
    %v937 = vld [vmem:[%s6 + $0x128] sm:$0xff]
    %v938 = vld [vmem:[%s6 + $0x130] sm:$0xff]
    %v939 = vld [vmem:[%s6 + $0x138] sm:$0xff]
    %v940 = vld [vmem:[%s6 + $0x140] sm:$0xff]
    %v941 = vld [vmem:[%s6 + $0x148] sm:$0xff]
    %v942 = vld [vmem:[%s6 + $0x150] sm:$0xff]
    %v943 = vld [vmem:[%s6 + $0x158] sm:$0xff]
    %v944 = vld [vmem:[%s6 + $0x160] sm:$0xff]
    %v945 = vld [vmem:[%s6 + $0x168] sm:$0xff]
    %v946 = vld [vmem:[%s6 + $0x170] sm:$0xff]
    %v947 = vld [vmem:[%s6 + $0x178] sm:$0xff]
    %v948 = vld [vmem:[%s6 + $0x180] sm:$0xff]
    %v949 = vld [vmem:[%s6 + $0x188] sm:$0xff]
    %v950 = vld [vmem:[%s6 + $0x190] sm:$0xff]
    %v951 = vld [vmem:[%s6 + $0x198] sm:$0xff]
    %v952 = vld [vmem:[%s6 + $0x1a0] sm:$0xff]
    %v953 = vld [vmem:[%s6 + $0x1a8] sm:$0xff]
    %v954 = vld [vmem:[%s6 + $0x1b0] sm:$0xff]
    %v955 = vld [vmem:[%s6 + $0x1b8] sm:$0xff]
    %v956 = vld [vmem:[%s6 + $0x1c0] sm:$0xff]
    %v957 = vld [vmem:[%s6 + $0x1c8] sm:$0xff]
    %v958 = vld [vmem:[%s6 + $0x1d0] sm:$0xff]
    %v959 = vld [vmem:[%s6 + $0x1d8] sm:$0xff]
    %v960 = vld [vmem:[%s6 + $0x1e0] sm:$0xff]
    %v961 = vld [vmem:[%s6 + $0x1e8] sm:$0xff]
    %v962 = vld [vmem:[%s6 + $0x1f0] sm:$0xff]
    %v963 = vld [vmem:[%s6 + $0x1f8] sm:$0xff]
    %v1028 = vunpack.c.l.b16 %v900
    %v1029 = vunpack.c.h.b16 %v900
    %v1030 = vunpack.c.l.b16 %v901
    %v1031 = vunpack.c.h.b16 %v901
    %v1032 = vunpack.c.l.b16 %v902
    %v1033 = vunpack.c.h.b16 %v902
    %v1034 = vunpack.c.l.b16 %v903
    %v1035 = vunpack.c.h.b16 %v903
    %v1036 = vunpack.c.l.b16 %v904
    %v1037 = vunpack.c.h.b16 %v904
    %v1038 = vunpack.c.l.b16 %v905
    %v1039 = vunpack.c.h.b16 %v905
    %v1040 = vunpack.c.l.b16 %v906
    %v1041 = vunpack.c.h.b16 %v906
    %v1042 = vunpack.c.l.b16 %v907
    %v1043 = vunpack.c.h.b16 %v907
    %v1044 = vunpack.c.l.b16 %v908
    %v1045 = vunpack.c.h.b16 %v908
    %v1046 = vunpack.c.l.b16 %v909
    %v1047 = vunpack.c.h.b16 %v909
    %v1048 = vunpack.c.l.b16 %v910
    %v1049 = vunpack.c.h.b16 %v910
    %v1050 = vunpack.c.l.b16 %v911
    %v1051 = vunpack.c.h.b16 %v911
    %v1052 = vunpack.c.l.b16 %v912
    %v1053 = vunpack.c.h.b16 %v912
    %v1054 = vunpack.c.l.b16 %v913
    %v1055 = vunpack.c.h.b16 %v913
    %v1056 = vunpack.c.l.b16 %v914
    %v1057 = vunpack.c.h.b16 %v914
    %v1058 = vunpack.c.l.b16 %v915
    %v1059 = vunpack.c.h.b16 %v915
    %v1060 = vunpack.c.l.b16 %v916
    %v1061 = vunpack.c.h.b16 %v916
    %v1062 = vunpack.c.l.b16 %v917
    %v1063 = vunpack.c.h.b16 %v917
    %v1064 = vunpack.c.l.b16 %v918
    %v1065 = vunpack.c.h.b16 %v918
    %v1066 = vunpack.c.l.b16 %v919
    %v1067 = vunpack.c.h.b16 %v919
    %v1068 = vunpack.c.l.b16 %v920
    %v1069 = vunpack.c.h.b16 %v920
    %v1070 = vunpack.c.l.b16 %v921
    %v1071 = vunpack.c.h.b16 %v921
    %v1072 = vunpack.c.l.b16 %v922
    %v1073 = vunpack.c.h.b16 %v922
    %v1074 = vunpack.c.l.b16 %v923
    %v1075 = vunpack.c.h.b16 %v923
    %v1076 = vunpack.c.l.b16 %v924
    %v1077 = vunpack.c.h.b16 %v924
    %v1078 = vunpack.c.l.b16 %v925
    %v1079 = vunpack.c.h.b16 %v925
    %v1080 = vunpack.c.l.b16 %v926
    %v1081 = vunpack.c.h.b16 %v926
    %v1082 = vunpack.c.l.b16 %v927
    %v1083 = vunpack.c.h.b16 %v927
    %v1084 = vunpack.c.l.b16 %v928
    %v1085 = vunpack.c.h.b16 %v928
    %v1086 = vunpack.c.l.b16 %v929
    %v1087 = vunpack.c.h.b16 %v929
    %v1088 = vunpack.c.l.b16 %v930
    %v1089 = vunpack.c.h.b16 %v930
    %v1090 = vunpack.c.l.b16 %v931
    %v1091 = vunpack.c.h.b16 %v931
    %v1092 = vunpack.c.l.b16 %v932
    %v1093 = vunpack.c.h.b16 %v932
    %v1094 = vunpack.c.l.b16 %v933
    %v1095 = vunpack.c.h.b16 %v933
    %v1096 = vunpack.c.l.b16 %v934
    %v1097 = vunpack.c.h.b16 %v934
    %v1098 = vunpack.c.l.b16 %v935
    %v1099 = vunpack.c.h.b16 %v935
    %v1100 = vunpack.c.l.b16 %v936
    %v1101 = vunpack.c.h.b16 %v936
    %v1102 = vunpack.c.l.b16 %v937
    %v1103 = vunpack.c.h.b16 %v937
    %v1104 = vunpack.c.l.b16 %v938
    %v1105 = vunpack.c.h.b16 %v938
    %v1106 = vunpack.c.l.b16 %v939
    %v1107 = vunpack.c.h.b16 %v939
    %v1108 = vunpack.c.l.b16 %v940
    %v1109 = vunpack.c.h.b16 %v940
    %v1110 = vunpack.c.l.b16 %v941
    %v1111 = vunpack.c.h.b16 %v941
    %v1112 = vunpack.c.l.b16 %v942
    %v1113 = vunpack.c.h.b16 %v942
    %v1114 = vunpack.c.l.b16 %v943
    %v1115 = vunpack.c.h.b16 %v943
    %v1116 = vunpack.c.l.b16 %v944
    %v1117 = vunpack.c.h.b16 %v944
    %v1118 = vunpack.c.l.b16 %v945
    %v1119 = vunpack.c.h.b16 %v945
    %v1120 = vunpack.c.l.b16 %v946
    %v1121 = vunpack.c.h.b16 %v946
    %v1122 = vunpack.c.l.b16 %v947
    %v1123 = vunpack.c.h.b16 %v947
    %v1124 = vunpack.c.l.b16 %v948
    %v1125 = vunpack.c.h.b16 %v948
    %v1126 = vunpack.c.l.b16 %v949
    %v1127 = vunpack.c.h.b16 %v949
    %v1128 = vunpack.c.l.b16 %v950
    %v1129 = vunpack.c.h.b16 %v950
    %v1130 = vunpack.c.l.b16 %v951
    %v1131 = vunpack.c.h.b16 %v951
    %v1132 = vunpack.c.l.b16 %v952
    %v1133 = vunpack.c.h.b16 %v952
    %v1134 = vunpack.c.l.b16 %v953
    %v1135 = vunpack.c.h.b16 %v953
    %v1136 = vunpack.c.l.b16 %v954
    %v1137 = vunpack.c.h.b16 %v954
    %v1138 = vunpack.c.l.b16 %v955
    %v1139 = vunpack.c.h.b16 %v955
    %v1140 = vunpack.c.l.b16 %v956
    %v1141 = vunpack.c.h.b16 %v956
    %v1142 = vunpack.c.l.b16 %v957
    %v1143 = vunpack.c.h.b16 %v957
    %v1144 = vunpack.c.l.b16 %v958
    %v1145 = vunpack.c.h.b16 %v958
    %v1146 = vunpack.c.l.b16 %v959
    %v1147 = vunpack.c.h.b16 %v959
    %v1148 = vunpack.c.l.b16 %v960
    %v1149 = vunpack.c.h.b16 %v960
    %v1150 = vunpack.c.l.b16 %v961
    %v1151 = vunpack.c.h.b16 %v961
    %v1152 = vunpack.c.l.b16 %v962
    %v1153 = vunpack.c.h.b16 %v962
    %v1154 = vunpack.c.l.b16 %v963
    %v1155 = vunpack.c.h.b16 %v963
    %v1156 = vpack.c.b16 %v1030, %v1028
    %v1157 = vpack.c.b16 %v1031, %v1029
    %v1158 = vpack.c.b16 %v1034, %v1032
    %v1159 = vpack.c.b16 %v1035, %v1033
    %v1160 = vpack.c.b16 %v1038, %v1036
    %v1161 = vpack.c.b16 %v1039, %v1037
    %v1162 = vpack.c.b16 %v1042, %v1040
    %v1163 = vpack.c.b16 %v1043, %v1041
    %v1164 = vpack.c.b16 %v1046, %v1044
    %v1165 = vpack.c.b16 %v1047, %v1045
    %v1166 = vpack.c.b16 %v1050, %v1048
    %v1167 = vpack.c.b16 %v1051, %v1049
    %v1168 = vpack.c.b16 %v1054, %v1052
    %v1169 = vpack.c.b16 %v1055, %v1053
    %v1170 = vpack.c.b16 %v1058, %v1056
    %v1171 = vpack.c.b16 %v1059, %v1057
    %v1172 = vpack.c.b16 %v1062, %v1060
    %v1173 = vpack.c.b16 %v1063, %v1061
    %v1174 = vpack.c.b16 %v1066, %v1064
    %v1175 = vpack.c.b16 %v1067, %v1065
    %v1176 = vpack.c.b16 %v1070, %v1068
    %v1177 = vpack.c.b16 %v1071, %v1069
    %v1178 = vpack.c.b16 %v1074, %v1072
    %v1179 = vpack.c.b16 %v1075, %v1073
    %v1180 = vpack.c.b16 %v1078, %v1076
    %v1181 = vpack.c.b16 %v1079, %v1077
    %v1182 = vpack.c.b16 %v1082, %v1080
    %v1183 = vpack.c.b16 %v1083, %v1081
    %v1184 = vpack.c.b16 %v1086, %v1084
    %v1185 = vpack.c.b16 %v1087, %v1085
    %v1186 = vpack.c.b16 %v1090, %v1088
    %v1187 = vpack.c.b16 %v1091, %v1089
    %v1188 = vpack.c.b16 %v1094, %v1092
    %v1189 = vpack.c.b16 %v1095, %v1093
    %v1190 = vpack.c.b16 %v1098, %v1096
    %v1191 = vpack.c.b16 %v1099, %v1097
    %v1192 = vpack.c.b16 %v1102, %v1100
    %v1193 = vpack.c.b16 %v1103, %v1101
    %v1194 = vpack.c.b16 %v1106, %v1104
    %v1195 = vpack.c.b16 %v1107, %v1105
    %v1196 = vpack.c.b16 %v1110, %v1108
    %v1197 = vpack.c.b16 %v1111, %v1109
    %v1198 = vpack.c.b16 %v1114, %v1112
    %v1199 = vpack.c.b16 %v1115, %v1113
    %v1200 = vpack.c.b16 %v1118, %v1116
    %v1201 = vpack.c.b16 %v1119, %v1117
    %v1202 = vpack.c.b16 %v1122, %v1120
    %v1203 = vpack.c.b16 %v1123, %v1121
    %v1204 = vpack.c.b16 %v1126, %v1124
    %v1205 = vpack.c.b16 %v1127, %v1125
    %v1206 = vpack.c.b16 %v1130, %v1128
    %v1207 = vpack.c.b16 %v1131, %v1129
    %v1208 = vpack.c.b16 %v1134, %v1132
    %v1209 = vpack.c.b16 %v1135, %v1133
    %v1210 = vpack.c.b16 %v1138, %v1136
    %v1211 = vpack.c.b16 %v1139, %v1137
    %v1212 = vpack.c.b16 %v1142, %v1140
    %v1213 = vpack.c.b16 %v1143, %v1141
    %v1214 = vpack.c.b16 %v1146, %v1144
    %v1215 = vpack.c.b16 %v1147, %v1145
    %v1216 = vpack.c.b16 %v1150, %v1148
    %v1217 = vpack.c.b16 %v1151, %v1149
    %v1218 = vpack.c.b16 %v1154, %v1152
    %v1219 = vpack.c.b16 %v1155, %v1153
    %1284 = vmatprep.subr.bf16.mxu0 %v1157
    %1285 = vmatpush1.bf16.msra.mxu0 %v1156
    %1286 = vmatprep.subr.bf16.mxu0 %v1159
    %1287 = vmatpush1.bf16.msra.mxu0 %v1158
    %1288 = vmatprep.subr.bf16.mxu0 %v1161
    %1289 = vmatpush1.bf16.msra.mxu0 %v1160
    %1290 = vmatprep.subr.bf16.mxu0 %v1163
    %1291 = vmatpush1.bf16.msra.mxu0 %v1162
    %1292 = vmatprep.subr.bf16.mxu0 %v1165
    %1293 = vmatpush1.bf16.msra.mxu0 %v1164
    %1294 = vmatprep.subr.bf16.mxu0 %v1167
    %1295 = vmatpush1.bf16.msra.mxu0 %v1166
    %1296 = vmatprep.subr.bf16.mxu0 %v1169
    %1297 = vmatpush1.bf16.msra.mxu0 %v1168
    %1298 = vmatprep.subr.bf16.mxu0 %v1171
    %1299 = vmatpush1.bf16.msra.mxu0 %v1170
    %1300 = vmatprep.subr.bf16.mxu0 %v1173
    %1301 = vmatpush1.bf16.msra.mxu0 %v1172
    %1302 = vmatprep.subr.bf16.mxu0 %v1175
    %1303 = vmatpush1.bf16.msra.mxu0 %v1174
    %1304 = vmatprep.subr.bf16.mxu0 %v1177
    %1305 = vmatpush1.bf16.msra.mxu0 %v1176
    %1306 = vmatprep.subr.bf16.mxu0 %v1179
    %1307 = vmatpush1.bf16.msra.mxu0 %v1178
    %1308 = vmatprep.subr.bf16.mxu0 %v1181
    %1309 = vmatpush1.bf16.msra.mxu0 %v1180
    %1310 = vmatprep.subr.bf16.mxu0 %v1183
    %1311 = vmatpush1.bf16.msra.mxu0 %v1182
    %1312 = vmatprep.subr.bf16.mxu0 %v1185
    %1313 = vmatpush1.bf16.msra.mxu0 %v1184
    %1314 = vmatprep.subr.bf16.mxu0 %v1187
    %1315 = vmatpush1.bf16.msra.mxu0 %v1186
    %1316 = vmatprep.mubr.bf16.mxu0 %v893
    %1317 = vmatmul.mubr.bf16.gmra.mrb[0].mxu0 %v892
    %v1318 = vpop.f32.mrb[0].mxu0
    %v1319 = vadd.f32 0.0, %v1318
    %v1320 = vpop.f32.mrb[0].mxu0
    %v1321 = vadd.f32 0.0, %v1320
    %v1322 = vpop.f32.mrb[0].mxu0
    %v1323 = vadd.f32 0.0, %v1322
    %v1324 = vpop.f32.mrb[0].mxu0
    %v1325 = vadd.f32 0.0, %v1324
    %1326 = vmatprep.mubr.bf16.mxu0 %v897
    %1327 = vmatmul.mubr.bf16.gmra.mrb[0].mxu0 %v896
    %v1328 = vpop.f32.mrb[0].mxu0
    %v1329 = vadd.f32 0.0, %v1328
    %v1330 = vpop.f32.mrb[0].mxu0
    %v1331 = vadd.f32 0.0, %v1330
    %v1332 = vpop.f32.mrb[0].mxu0
    %v1333 = vadd.f32 0.0, %v1332
    %v1334 = vpop.f32.mrb[0].mxu0
    %v1335 = vadd.f32 0.0, %v1334
    %1336 = vdwg.mxu0
    %1337 = vmatprep.subr.bf16.mxu0 %v1189
    %1338 = vmatpush1.bf16.msra.mxu0 %v1188
    %1339 = vmatprep.subr.bf16.mxu0 %v1191
    %1340 = vmatpush1.bf16.msra.mxu0 %v1190
    %1341 = vmatprep.subr.bf16.mxu0 %v1193
    %1342 = vmatpush1.bf16.msra.mxu0 %v1192
    %1343 = vmatprep.subr.bf16.mxu0 %v1195
    %1344 = vmatpush1.bf16.msra.mxu0 %v1194
    %1345 = vmatprep.subr.bf16.mxu0 %v1197
    %1346 = vmatpush1.bf16.msra.mxu0 %v1196
    %1347 = vmatprep.subr.bf16.mxu0 %v1199
    %1348 = vmatpush1.bf16.msra.mxu0 %v1198
    %1349 = vmatprep.subr.bf16.mxu0 %v1201
    %1350 = vmatpush1.bf16.msra.mxu0 %v1200
    %1351 = vmatprep.subr.bf16.mxu0 %v1203
    %1352 = vmatpush1.bf16.msra.mxu0 %v1202
    %1353 = vmatprep.subr.bf16.mxu0 %v1205
    %1354 = vmatpush1.bf16.msra.mxu0 %v1204
    %1355 = vmatprep.subr.bf16.mxu0 %v1207
    %1356 = vmatpush1.bf16.msra.mxu0 %v1206
    %1357 = vmatprep.subr.bf16.mxu0 %v1209
    %1358 = vmatpush1.bf16.msra.mxu0 %v1208
    %1359 = vmatprep.subr.bf16.mxu0 %v1211
    %1360 = vmatpush1.bf16.msra.mxu0 %v1210
    %1361 = vmatprep.subr.bf16.mxu0 %v1213
    %1362 = vmatpush1.bf16.msra.mxu0 %v1212
    %1363 = vmatprep.subr.bf16.mxu0 %v1215
    %1364 = vmatpush1.bf16.msra.mxu0 %v1214
    %1365 = vmatprep.subr.bf16.mxu0 %v1217
    %1366 = vmatpush1.bf16.msra.mxu0 %v1216
    %1367 = vmatprep.subr.bf16.mxu0 %v1219
    %1368 = vmatpush1.bf16.msra.mxu0 %v1218
    %1369 = vmatprep.mubr.bf16.mxu0 %v895
    %1370 = vmatmul.mubr.bf16.gmra.mrb[0].mxu0 %v894
    %v1371 = vpop.f32.mrb[0].mxu0
    %v1372 = vadd.f32 %v1319, %v1371
    %v1373 = vpop.f32.mrb[0].mxu0
    %v1374 = vadd.f32 %v1321, %v1373
    %v1375 = vpop.f32.mrb[0].mxu0
    %v1376 = vadd.f32 %v1323, %v1375
    %v1377 = vpop.f32.mrb[0].mxu0
    %v1378 = vadd.f32 %v1325, %v1377
    %1379 = vmatprep.mubr.bf16.mxu0 %v899
    %1380 = vmatmul.mubr.bf16.gmra.mrb[0].mxu0 %v898
    %v1381 = vpop.f32.mrb[0].mxu0
    %v1382 = vadd.f32 %v1329, %v1381
    %v1383 = vpop.f32.mrb[0].mxu0
    %v1384 = vadd.f32 %v1331, %v1383
    %v1385 = vpop.f32.mrb[0].mxu0
    %v1386 = vadd.f32 %v1333, %v1385
    %v1387 = vpop.f32.mrb[0].mxu0
    %v1388 = vadd.f32 %v1335, %v1387
    %1389 = vdwg.mxu0
    %v1390 = vadd.f32 %v352, %v1372
    %v1391 = vadd.f32 %v353, %v1374
    %v1392 = vadd.f32 %v354, %v1376
    %v1393 = vadd.f32 %v355, %v1378
    %v1394 = vadd.f32 %v356, %v1382
    %v1395 = vadd.f32 %v357, %v1384
    %v1396 = vadd.f32 %v358, %v1386
    %v1397 = vadd.f32 %v359, %v1388
    %v1398 = vld [vmem:[#allocation4] sm:$0x3]
    %v1400 = vlaneseq
    %v1401 = vshrl.u32 %v1400, 7
    %v1402 = vsub.s32 0, %v1401
    %v1403 = vrot.slane %v1398, %v1402
    %v1404 = vlaneseq
    %v1405 = vshrl.u32 %v1404, 7
    %v1406 = vsub.s32 1, %v1405
    %v1407 = vrot.slane %v1398, %v1406
    %v1410 = vadd.f32 %v1390, %v1403
    %v1411 = vadd.f32 %v1391, %v1407
    %v1412 = vadd.f32 %v1392, %v1403
    %v1413 = vadd.f32 %v1393, %v1407
    %v1414 = vadd.f32 %v1394, %v1403
    %v1415 = vadd.f32 %v1395, %v1407
    %v1416 = vadd.f32 %v1396, %v1403
    %v1417 = vadd.f32 %v1397, %v1407
    %1418 = vst [vmem:[%s8] sm:$0xff] %v1410
    %1419 = vst [vmem:[%s8 + $0x8] sm:$0xff] %v1411
    %1420 = vst [vmem:[%s8 + $0x10] sm:$0xff] %v1412
    %1421 = vst [vmem:[%s8 + $0x18] sm:$0xff] %v1413
    %1422 = vst [vmem:[%s8 + $0x20] sm:$0xff] %v1414
    %1423 = vst [vmem:[%s8 + $0x28] sm:$0xff] %v1415
    %1424 = vst [vmem:[%s8 + $0x30] sm:$0xff] %v1416
    %1425 = vst [vmem:[%s8 + $0x38] sm:$0xff] %v1417
    %v1426 = vpack.c.bf16 %v1412, %v1410
    %v1427 = vpack.c.bf16 %v1413, %v1411
    %v1428 = vpack.c.bf16 %v1416, %v1414
    %v1429 = vpack.c.bf16 %v1417, %v1415
    %v1434 = vunpack.c.l.b16 %v1426
    %v1435 = vunpack.c.l.b16 %v1427
    %v1436 = vunpack.c.h.b16 %v1426
    %v1437 = vunpack.c.h.b16 %v1427
    %v1438 = vunpack.c.l.b16 %v1428
    %v1439 = vunpack.c.l.b16 %v1429
    %v1440 = vunpack.c.h.b16 %v1428
    %v1441 = vunpack.c.h.b16 %v1429
    %v1442 = vpack.c.b16 %v1435, %v1434
    %v1443 = vpack.c.b16 %v1437, %v1436
    %v1444 = vpack.c.b16 %v1439, %v1438
    %v1445 = vpack.c.b16 %v1441, %v1440
    %1450 = vst [vmem:[%s9] sm:$0xff] %v1442
    %1451 = vst [vmem:[%s9 + $0x8] sm:$0xff] %v1443
    %1452 = vst [vmem:[%s9 + $0x10] sm:$0xff] %v1444
    %1453 = vst [vmem:[%s9 + $0x18] sm:$0xff] %v1445
    // Predicated region
    $region42: #{transformer_encoder.8} parent=1 // pred_check
      _
    $region43: #{transformer_encoder.8} parent=1 // pred_check_branch
      %1455 = sbr.rel (0) target = $region45
    $region44: #{transformer_encoder.8} parent=1 // pred_region
      _
    $region45: #{transformer_encoder.8} parent=1 // pred_fallthru
      _
    // Predicated region
    $region46: #{transformer_encoder.8} parent=1 // pred_check
      _
    $region47: #{transformer_encoder.8} parent=1 // pred_check_branch
      %1457 = sbr.rel (0) target = $region49
    $region48: #{transformer_encoder.8} parent=1 // pred_region
      _
    $region49: #{transformer_encoder.8} parent=1 // pred_fallthru
      _
    // Predicated region
    $region50: #{transformer_encoder.8} parent=1 // pred_check
      _
    $region51: #{transformer_encoder.8} parent=1 // pred_check_branch
      %1459 = sbr.rel (0) target = $region53
    $region52: #{transformer_encoder.8} parent=1 // pred_region
      _
    $region53: #{transformer_encoder.8} parent=1 // pred_fallthru
      _
    // Predicated region
    $region54: #{transformer_encoder.8} parent=1 // pred_check
      _
    $region55: #{transformer_encoder.8} parent=1 // pred_check_branch
      %1461 = sbr.rel (0) target = $region57
    $region56: #{transformer_encoder.8} parent=1 // pred_region
      _
    $region57: #{transformer_encoder.8} parent=1 // pred_fallthru
      _
    %1462 = vsyncpa [#allocation3], 1
    %1463 = vsyncpa [#allocation5], 1

// kernel: transformer_encoder.11
$region0: #{transformer_encoder.11}
  #allocation0 [shape = 'u32[]', space=smem, size = 0x4, offset = 0x4, fixed_abs, tag = 'smem constant byte address 0x4 - core index']
  #allocation1 [shape = 'u32[144,128]{1,0:T(1,128)}', space=vmem, size = 0x12000, scoped, tag = 'internal scratch']
  %s0 = inlined_call_operand.vmem [shape: f32[32,256], index: 0, kind: input, shape index: {}]
  %s1 = inlined_call_operand.vmem [shape: bf16[32,256], index: 1, kind: input, shape index: {}]
  %s2 = inlined_call_operand.vmem [shape: bf16[256,256], index: 2, kind: input, shape index: {}]
  %s3 = inlined_call_operand.vmem [shape: f32[1,256], index: 3, kind: input, shape index: {}]
  %s4 = inlined_call_operand.vmem [shape: bf16[256,512], index: 4, kind: input, shape index: {}]
  %s5 = inlined_call_operand.vmem [shape: f32[1,512], index: 5, kind: input, shape index: {}]
  %s6 = inlined_call_operand.vmem [shape: bf16[512,256], index: 6, kind: input, shape index: {}]
  %s7 = inlined_call_operand.vmem [shape: f32[1,256], index: 7, kind: input, shape index: {}]
  %s8 = inlined_call_operand.hbm [shape: f32[32,256], index: 8, kind: output, shape index: {0}]
  %s9 = inlined_call_operand.hbm [shape: bf16[32,256], index: 9, kind: output, shape index: {1}]
  %10 = xla_tuple %s8, %s9
  %s11 = sld [smem:[#allocation0]]
  $region50: #{transformer_encoder.11} parent=0
    _
  %s13 = ssub.s32 1, %s11
  %s14 = scalar_select 0, %s13, %s11
  $region1: #{transformer_encoder.11} parent=0
    #allocation2 [shape = 'u8[32768]{0}', space=vmem, size = 0x8000, scoped, tag = 'output window, operand 0, single buffered']
    #allocation3 [shape = 's32[1]{0}', space=sflag, size = 0x4, scoped, tag = 'scoped memory for transformer_encoder.11']
    #allocation4 [shape = 'u8[16384]{0}', space=vmem, size = 0x4000, scoped, tag = 'output window, operand 1, single buffered']
    #allocation5 [shape = 's32[1]{0}', space=sflag, size = 0x4, scoped, tag = 'scoped memory for transformer_encoder.11']
    %15 = vsyncpa [#allocation3], 0
    %16 = vsyncpa [#allocation5], 0
    // Predicated region
    $region2: #{transformer_encoder.11} parent=1 // pred_check
      _
    $region3: #{transformer_encoder.11} parent=1 // pred_check_branch
      %18 = sbr.rel (0) target = $region5
    $region4: #{transformer_encoder.11} parent=1 // pred_region
      _
    $region5: #{transformer_encoder.11} parent=1 // pred_fallthru
      _
    // Predicated region
    $region6: #{transformer_encoder.11} parent=1 // pred_check
      _
    $region7: #{transformer_encoder.11} parent=1 // pred_check_branch
      %20 = sbr.rel (0) target = $region9
    $region8: #{transformer_encoder.11} parent=1 // pred_region
      _
    $region9: #{transformer_encoder.11} parent=1 // pred_fallthru
      _
    // Predicated region
    $region10: #{transformer_encoder.11} parent=1 // pred_check
      _
    $region11: #{transformer_encoder.11} parent=1 // pred_check_branch
      %22 = sbr.rel (0) target = $region13
    $region12: #{transformer_encoder.11} parent=1 // pred_region
      _
    $region13: #{transformer_encoder.11} parent=1 // pred_fallthru
      _
    // Predicated region
    $region14: #{transformer_encoder.11} parent=1 // pred_check
      _
    $region15: #{transformer_encoder.11} parent=1 // pred_check_branch
      %24 = sbr.rel (0) target = $region17
    $region16: #{transformer_encoder.11} parent=1 // pred_region
      _
    $region17: #{transformer_encoder.11} parent=1 // pred_fallthru
      _
    // Predicated region
    $region18: #{transformer_encoder.11} parent=1 // pred_check
      _
    $region19: #{transformer_encoder.11} parent=1 // pred_check_branch
      %26 = sbr.rel (0) target = $region21
    $region20: #{transformer_encoder.11} parent=1 // pred_region
      _
    $region21: #{transformer_encoder.11} parent=1 // pred_fallthru
      _
    // Predicated region
    $region22: #{transformer_encoder.11} parent=1 // pred_check
      _
    $region23: #{transformer_encoder.11} parent=1 // pred_check_branch
      %28 = sbr.rel (0) target = $region25
    $region24: #{transformer_encoder.11} parent=1 // pred_region
      _
    $region25: #{transformer_encoder.11} parent=1 // pred_fallthru
      _
    // Predicated region
    $region26: #{transformer_encoder.11} parent=1 // pred_check
      _
    $region27: #{transformer_encoder.11} parent=1 // pred_check_branch
      %30 = sbr.rel (0) target = $region29
    $region28: #{transformer_encoder.11} parent=1 // pred_region
      _
    $region29: #{transformer_encoder.11} parent=1 // pred_fallthru
      _
    // Predicated region
    $region30: #{transformer_encoder.11} parent=1 // pred_check
      _
    $region31: #{transformer_encoder.11} parent=1 // pred_check_branch
      %32 = sbr.rel (0) target = $region33
    $region32: #{transformer_encoder.11} parent=1 // pred_region
      _
    $region33: #{transformer_encoder.11} parent=1 // pred_fallthru
      _
    %v33 = vld [vmem:[%s0] sm:$0xff]
    %v34 = vld [vmem:[%s0 + $0x8] sm:$0xff]
    %v35 = vld [vmem:[%s0 + $0x10] sm:$0xff]
    %v36 = vld [vmem:[%s0 + $0x18] sm:$0xff]
    %v37 = vld [vmem:[%s0 + $0x20] sm:$0xff]
    %v38 = vld [vmem:[%s0 + $0x28] sm:$0xff]
    %v39 = vld [vmem:[%s0 + $0x30] sm:$0xff]
    %v40 = vld [vmem:[%s0 + $0x38] sm:$0xff]
    %v41 = vld [vmem:[%s1] sm:$0xff]
    %v42 = vld [vmem:[%s1 + $0x8] sm:$0xff]
    %v43 = vld [vmem:[%s1 + $0x10] sm:$0xff]
    %v44 = vld [vmem:[%s1 + $0x18] sm:$0xff]
    %v45 = vld [vmem:[%s2] sm:$0xff]
    %v46 = vld [vmem:[%s2 + $0x8] sm:$0xff]
    %v47 = vld [vmem:[%s2 + $0x10] sm:$0xff]
    %v48 = vld [vmem:[%s2 + $0x18] sm:$0xff]
    %v49 = vld [vmem:[%s2 + $0x20] sm:$0xff]
    %v50 = vld [vmem:[%s2 + $0x28] sm:$0xff]
    %v51 = vld [vmem:[%s2 + $0x30] sm:$0xff]
    %v52 = vld [vmem:[%s2 + $0x38] sm:$0xff]
    %v53 = vld [vmem:[%s2 + $0x40] sm:$0xff]
    %v54 = vld [vmem:[%s2 + $0x48] sm:$0xff]
    %v55 = vld [vmem:[%s2 + $0x50] sm:$0xff]
    %v56 = vld [vmem:[%s2 + $0x58] sm:$0xff]
    %v57 = vld [vmem:[%s2 + $0x60] sm:$0xff]
    %v58 = vld [vmem:[%s2 + $0x68] sm:$0xff]
    %v59 = vld [vmem:[%s2 + $0x70] sm:$0xff]
    %v60 = vld [vmem:[%s2 + $0x78] sm:$0xff]
    %v61 = vld [vmem:[%s2 + $0x80] sm:$0xff]
    %v62 = vld [vmem:[%s2 + $0x88] sm:$0xff]
    %v63 = vld [vmem:[%s2 + $0x90] sm:$0xff]
    %v64 = vld [vmem:[%s2 + $0x98] sm:$0xff]
    %v65 = vld [vmem:[%s2 + $0xa0] sm:$0xff]
    %v66 = vld [vmem:[%s2 + $0xa8] sm:$0xff]
    %v67 = vld [vmem:[%s2 + $0xb0] sm:$0xff]
    %v68 = vld [vmem:[%s2 + $0xb8] sm:$0xff]
    %v69 = vld [vmem:[%s2 + $0xc0] sm:$0xff]
    %v70 = vld [vmem:[%s2 + $0xc8] sm:$0xff]
    %v71 = vld [vmem:[%s2 + $0xd0] sm:$0xff]
    %v72 = vld [vmem:[%s2 + $0xd8] sm:$0xff]
    %v73 = vld [vmem:[%s2 + $0xe0] sm:$0xff]
    %v74 = vld [vmem:[%s2 + $0xe8] sm:$0xff]
    %v75 = vld [vmem:[%s2 + $0xf0] sm:$0xff]
    %v76 = vld [vmem:[%s2 + $0xf8] sm:$0xff]
    %v81 = vunpack.c.l.b16 %v41
    %v82 = vunpack.c.h.b16 %v41
    %v83 = vunpack.c.l.b16 %v42
    %v84 = vunpack.c.h.b16 %v42
    %v85 = vunpack.c.l.b16 %v43
    %v86 = vunpack.c.h.b16 %v43
    %v87 = vunpack.c.l.b16 %v44
    %v88 = vunpack.c.h.b16 %v44
    %v89 = vpack.c.b16 %v83, %v81
    %v90 = vpack.c.b16 %v84, %v82
    %v91 = vpack.c.b16 %v87, %v85
    %v92 = vpack.c.b16 %v88, %v86
    %v129 = vunpack.c.l.b16 %v45
    %v130 = vunpack.c.h.b16 %v45
    %v131 = vunpack.c.l.b16 %v46
    %v132 = vunpack.c.h.b16 %v46
    %v133 = vunpack.c.l.b16 %v47
    %v134 = vunpack.c.h.b16 %v47
    %v135 = vunpack.c.l.b16 %v48
    %v136 = vunpack.c.h.b16 %v48
    %v137 = vunpack.c.l.b16 %v49
    %v138 = vunpack.c.h.b16 %v49
    %v139 = vunpack.c.l.b16 %v50
    %v140 = vunpack.c.h.b16 %v50
    %v141 = vunpack.c.l.b16 %v51
    %v142 = vunpack.c.h.b16 %v51
    %v143 = vunpack.c.l.b16 %v52
    %v144 = vunpack.c.h.b16 %v52
    %v145 = vunpack.c.l.b16 %v53
    %v146 = vunpack.c.h.b16 %v53
    %v147 = vunpack.c.l.b16 %v54
    %v148 = vunpack.c.h.b16 %v54
    %v149 = vunpack.c.l.b16 %v55
    %v150 = vunpack.c.h.b16 %v55
    %v151 = vunpack.c.l.b16 %v56
    %v152 = vunpack.c.h.b16 %v56
    %v153 = vunpack.c.l.b16 %v57
    %v154 = vunpack.c.h.b16 %v57
    %v155 = vunpack.c.l.b16 %v58
    %v156 = vunpack.c.h.b16 %v58
    %v157 = vunpack.c.l.b16 %v59
    %v158 = vunpack.c.h.b16 %v59
    %v159 = vunpack.c.l.b16 %v60
    %v160 = vunpack.c.h.b16 %v60
    %v161 = vunpack.c.l.b16 %v61
    %v162 = vunpack.c.h.b16 %v61
    %v163 = vunpack.c.l.b16 %v62
    %v164 = vunpack.c.h.b16 %v62
    %v165 = vunpack.c.l.b16 %v63
    %v166 = vunpack.c.h.b16 %v63
    %v167 = vunpack.c.l.b16 %v64
    %v168 = vunpack.c.h.b16 %v64
    %v169 = vunpack.c.l.b16 %v65
    %v170 = vunpack.c.h.b16 %v65
    %v171 = vunpack.c.l.b16 %v66
    %v172 = vunpack.c.h.b16 %v66
    %v173 = vunpack.c.l.b16 %v67
    %v174 = vunpack.c.h.b16 %v67
    %v175 = vunpack.c.l.b16 %v68
    %v176 = vunpack.c.h.b16 %v68
    %v177 = vunpack.c.l.b16 %v69
    %v178 = vunpack.c.h.b16 %v69
    %v179 = vunpack.c.l.b16 %v70
    %v180 = vunpack.c.h.b16 %v70
    %v181 = vunpack.c.l.b16 %v71
    %v182 = vunpack.c.h.b16 %v71
    %v183 = vunpack.c.l.b16 %v72
    %v184 = vunpack.c.h.b16 %v72
    %v185 = vunpack.c.l.b16 %v73
    %v186 = vunpack.c.h.b16 %v73
    %v187 = vunpack.c.l.b16 %v74
    %v188 = vunpack.c.h.b16 %v74
    %v189 = vunpack.c.l.b16 %v75
    %v190 = vunpack.c.h.b16 %v75
    %v191 = vunpack.c.l.b16 %v76
    %v192 = vunpack.c.h.b16 %v76
    %v193 = vpack.c.b16 %v131, %v129
    %v194 = vpack.c.b16 %v132, %v130
    %v195 = vpack.c.b16 %v135, %v133
    %v196 = vpack.c.b16 %v136, %v134
    %v197 = vpack.c.b16 %v139, %v137
    %v198 = vpack.c.b16 %v140, %v138
    %v199 = vpack.c.b16 %v143, %v141
    %v200 = vpack.c.b16 %v144, %v142
    %v201 = vpack.c.b16 %v147, %v145
    %v202 = vpack.c.b16 %v148, %v146
    %v203 = vpack.c.b16 %v151, %v149
    %v204 = vpack.c.b16 %v152, %v150
    %v205 = vpack.c.b16 %v155, %v153
    %v206 = vpack.c.b16 %v156, %v154
    %v207 = vpack.c.b16 %v159, %v157
    %v208 = vpack.c.b16 %v160, %v158
    %v209 = vpack.c.b16 %v163, %v161
    %v210 = vpack.c.b16 %v164, %v162
    %v211 = vpack.c.b16 %v167, %v165
    %v212 = vpack.c.b16 %v168, %v166
    %v213 = vpack.c.b16 %v171, %v169
    %v214 = vpack.c.b16 %v172, %v170
    %v215 = vpack.c.b16 %v175, %v173
    %v216 = vpack.c.b16 %v176, %v174
    %v217 = vpack.c.b16 %v179, %v177
    %v218 = vpack.c.b16 %v180, %v178
    %v219 = vpack.c.b16 %v183, %v181
    %v220 = vpack.c.b16 %v184, %v182
    %v221 = vpack.c.b16 %v187, %v185
    %v222 = vpack.c.b16 %v188, %v186
    %v223 = vpack.c.b16 %v191, %v189
    %v224 = vpack.c.b16 %v192, %v190
    %257 = vmatprep.subr.bf16.mxu0 %v194
    %258 = vmatpush1.bf16.msra.mxu0 %v193
    %259 = vmatprep.subr.bf16.mxu0 %v196
    %260 = vmatpush1.bf16.msra.mxu0 %v195
    %261 = vmatprep.subr.bf16.mxu0 %v198
    %262 = vmatpush1.bf16.msra.mxu0 %v197
    %263 = vmatprep.subr.bf16.mxu0 %v200
    %264 = vmatpush1.bf16.msra.mxu0 %v199
    %265 = vmatprep.subr.bf16.mxu0 %v202
    %266 = vmatpush1.bf16.msra.mxu0 %v201
    %267 = vmatprep.subr.bf16.mxu0 %v204
    %268 = vmatpush1.bf16.msra.mxu0 %v203
    %269 = vmatprep.subr.bf16.mxu0 %v206
    %270 = vmatpush1.bf16.msra.mxu0 %v205
    %271 = vmatprep.subr.bf16.mxu0 %v208
    %272 = vmatpush1.bf16.msra.mxu0 %v207
    %273 = vmatprep.subr.bf16.mxu0 %v210
    %274 = vmatpush1.bf16.msra.mxu0 %v209
    %275 = vmatprep.subr.bf16.mxu0 %v212
    %276 = vmatpush1.bf16.msra.mxu0 %v211
    %277 = vmatprep.subr.bf16.mxu0 %v214
    %278 = vmatpush1.bf16.msra.mxu0 %v213
    %279 = vmatprep.subr.bf16.mxu0 %v216
    %280 = vmatpush1.bf16.msra.mxu0 %v215
    %281 = vmatprep.subr.bf16.mxu0 %v218
    %282 = vmatpush1.bf16.msra.mxu0 %v217
    %283 = vmatprep.subr.bf16.mxu0 %v220
    %284 = vmatpush1.bf16.msra.mxu0 %v219
    %285 = vmatprep.subr.bf16.mxu0 %v222
    %286 = vmatpush1.bf16.msra.mxu0 %v221
    %287 = vmatprep.subr.bf16.mxu0 %v224
    %288 = vmatpush1.bf16.msra.mxu0 %v223
    %289 = vmatprep.mubr.bf16.mxu0 %v90
    %290 = vmatmul.mubr.bf16.gmra.mrb[0].mxu0 %v89
    %v291 = vpop.f32.mrb[0].mxu0
    %v292 = vadd.f32 0.0, %v291
    %v293 = vpop.f32.mrb[0].mxu0
    %v294 = vadd.f32 0.0, %v293
    %v295 = vpop.f32.mrb[0].mxu0
    %v296 = vadd.f32 0.0, %v295
    %v297 = vpop.f32.mrb[0].mxu0
    %v298 = vadd.f32 0.0, %v297
    %299 = vmatprep.mubr.bf16.mxu0 %v92
    %300 = vmatmul.mubr.bf16.gmra.mrb[0].mxu0 %v91
    %v301 = vpop.f32.mrb[0].mxu0
    %v302 = vadd.f32 0.0, %v301
    %v303 = vpop.f32.mrb[0].mxu0
    %v304 = vadd.f32 0.0, %v303
    %v305 = vpop.f32.mrb[0].mxu0
    %v306 = vadd.f32 0.0, %v305
    %v307 = vpop.f32.mrb[0].mxu0
    %v308 = vadd.f32 0.0, %v307
    %309 = vdwg.mxu0
    %v310 = vadd.f32 %v33, %v292
    %v311 = vadd.f32 %v34, %v294
    %v312 = vadd.f32 %v35, %v296
    %v313 = vadd.f32 %v36, %v298
    %v314 = vadd.f32 %v37, %v302
    %v315 = vadd.f32 %v38, %v304
    %v316 = vadd.f32 %v39, %v306
    %v317 = vadd.f32 %v40, %v308
    %v318 = vld [vmem:[%s3] sm:$0x3]
    %v320 = vlaneseq
    %v321 = vshrl.u32 %v320, 7
    %v322 = vsub.s32 0, %v321
    %v323 = vrot.slane %v318, %v322
    %v324 = vlaneseq
    %v325 = vshrl.u32 %v324, 7
    %v326 = vsub.s32 1, %v325
    %v327 = vrot.slane %v318, %v326
    %v330 = vadd.f32 %v310, %v323
    %v331 = vadd.f32 %v311, %v327
    %v332 = vadd.f32 %v312, %v323
    %v333 = vadd.f32 %v313, %v327
    %v334 = vadd.f32 %v314, %v323
    %v335 = vadd.f32 %v315, %v327
    %v336 = vadd.f32 %v316, %v323
    %v337 = vadd.f32 %v317, %v327
    %v338 = vpack.c.bf16 %v332, %v330
    %v339 = vpack.c.bf16 %v333, %v331
    %v340 = vpack.c.bf16 %v336, %v334
    %v341 = vpack.c.bf16 %v337, %v335
    %v342 = vld [vmem:[%s4] sm:$0xff]
    %v343 = vld [vmem:[%s4 + $0x8] sm:$0xff]
    %v344 = vld [vmem:[%s4 + $0x10] sm:$0xff]
    %v345 = vld [vmem:[%s4 + $0x18] sm:$0xff]
    %v346 = vld [vmem:[%s4 + $0x20] sm:$0xff]
    %v347 = vld [vmem:[%s4 + $0x28] sm:$0xff]
    %v348 = vld [vmem:[%s4 + $0x30] sm:$0xff]
    %v349 = vld [vmem:[%s4 + $0x38] sm:$0xff]
    %v350 = vld [vmem:[%s4 + $0x40] sm:$0xff]
    %v351 = vld [vmem:[%s4 + $0x48] sm:$0xff]
    %v352 = vld [vmem:[%s4 + $0x50] sm:$0xff]
    %v353 = vld [vmem:[%s4 + $0x58] sm:$0xff]
    %v354 = vld [vmem:[%s4 + $0x60] sm:$0xff]
    %v355 = vld [vmem:[%s4 + $0x68] sm:$0xff]
    %v356 = vld [vmem:[%s4 + $0x70] sm:$0xff]
    %v357 = vld [vmem:[%s4 + $0x78] sm:$0xff]
    %v358 = vld [vmem:[%s4 + $0x80] sm:$0xff]
    %v359 = vld [vmem:[%s4 + $0x88] sm:$0xff]
    %v360 = vld [vmem:[%s4 + $0x90] sm:$0xff]
    %v361 = vld [vmem:[%s4 + $0x98] sm:$0xff]
    %v362 = vld [vmem:[%s4 + $0xa0] sm:$0xff]
    %v363 = vld [vmem:[%s4 + $0xa8] sm:$0xff]
    %v364 = vld [vmem:[%s4 + $0xb0] sm:$0xff]
    %v365 = vld [vmem:[%s4 + $0xb8] sm:$0xff]
    %v366 = vld [vmem:[%s4 + $0xc0] sm:$0xff]
    %v367 = vld [vmem:[%s4 + $0xc8] sm:$0xff]
    %v368 = vld [vmem:[%s4 + $0xd0] sm:$0xff]
    %v369 = vld [vmem:[%s4 + $0xd8] sm:$0xff]
    %v370 = vld [vmem:[%s4 + $0xe0] sm:$0xff]
    %v371 = vld [vmem:[%s4 + $0xe8] sm:$0xff]
    %v372 = vld [vmem:[%s4 + $0xf0] sm:$0xff]
    %v373 = vld [vmem:[%s4 + $0xf8] sm:$0xff]
    %v374 = vld [vmem:[%s4 + $0x100] sm:$0xff]
    %v375 = vld [vmem:[%s4 + $0x108] sm:$0xff]
    %v376 = vld [vmem:[%s4 + $0x110] sm:$0xff]
    %v377 = vld [vmem:[%s4 + $0x118] sm:$0xff]
    %v378 = vld [vmem:[%s4 + $0x120] sm:$0xff]
    %v379 = vld [vmem:[%s4 + $0x128] sm:$0xff]
    %v380 = vld [vmem:[%s4 + $0x130] sm:$0xff]
    %v381 = vld [vmem:[%s4 + $0x138] sm:$0xff]
    %v382 = vld [vmem:[%s4 + $0x140] sm:$0xff]
    %v383 = vld [vmem:[%s4 + $0x148] sm:$0xff]
    %v384 = vld [vmem:[%s4 + $0x150] sm:$0xff]
    %v385 = vld [vmem:[%s4 + $0x158] sm:$0xff]
    %v386 = vld [vmem:[%s4 + $0x160] sm:$0xff]
    %v387 = vld [vmem:[%s4 + $0x168] sm:$0xff]
    %v388 = vld [vmem:[%s4 + $0x170] sm:$0xff]
    %v389 = vld [vmem:[%s4 + $0x178] sm:$0xff]
    %v390 = vld [vmem:[%s4 + $0x180] sm:$0xff]
    %v391 = vld [vmem:[%s4 + $0x188] sm:$0xff]
    %v392 = vld [vmem:[%s4 + $0x190] sm:$0xff]
    %v393 = vld [vmem:[%s4 + $0x198] sm:$0xff]
    %v394 = vld [vmem:[%s4 + $0x1a0] sm:$0xff]
    %v395 = vld [vmem:[%s4 + $0x1a8] sm:$0xff]
    %v396 = vld [vmem:[%s4 + $0x1b0] sm:$0xff]
    %v397 = vld [vmem:[%s4 + $0x1b8] sm:$0xff]
    %v398 = vld [vmem:[%s4 + $0x1c0] sm:$0xff]
    %v399 = vld [vmem:[%s4 + $0x1c8] sm:$0xff]
    %v400 = vld [vmem:[%s4 + $0x1d0] sm:$0xff]
    %v401 = vld [vmem:[%s4 + $0x1d8] sm:$0xff]
    %v402 = vld [vmem:[%s4 + $0x1e0] sm:$0xff]
    %v403 = vld [vmem:[%s4 + $0x1e8] sm:$0xff]
    %v404 = vld [vmem:[%s4 + $0x1f0] sm:$0xff]
    %v405 = vld [vmem:[%s4 + $0x1f8] sm:$0xff]
    %v406 = vld [vmem:[%s5] sm:$0xf]
    %v408 = vlaneseq
    %v409 = vshrl.u32 %v408, 7
    %v410 = vsub.s32 0, %v409
    %v411 = vrot.slane %v406, %v410
    %v412 = vlaneseq
    %v413 = vshrl.u32 %v412, 7
    %v414 = vsub.s32 1, %v413
    %v415 = vrot.slane %v406, %v414
    %v416 = vlaneseq
    %v417 = vshrl.u32 %v416, 7
    %v418 = vsub.s32 2, %v417
    %v419 = vrot.slane %v406, %v418
    %v420 = vlaneseq
    %v421 = vshrl.u32 %v420, 7
    %v422 = vsub.s32 3, %v421
    %v423 = vrot.slane %v406, %v422
    %v492 = vunpack.c.l.b16 %v342
    %v493 = vunpack.c.h.b16 %v342
    %v494 = vunpack.c.l.b16 %v343
    %v495 = vunpack.c.h.b16 %v343
    %v496 = vunpack.c.l.b16 %v344
    %v497 = vunpack.c.h.b16 %v344
    %v498 = vunpack.c.l.b16 %v345
    %v499 = vunpack.c.h.b16 %v345
    %v500 = vunpack.c.l.b16 %v346
    %v501 = vunpack.c.h.b16 %v346
    %v502 = vunpack.c.l.b16 %v347
    %v503 = vunpack.c.h.b16 %v347
    %v504 = vunpack.c.l.b16 %v348
    %v505 = vunpack.c.h.b16 %v348
    %v506 = vunpack.c.l.b16 %v349
    %v507 = vunpack.c.h.b16 %v349
    %v508 = vunpack.c.l.b16 %v350
    %v509 = vunpack.c.h.b16 %v350
    %v510 = vunpack.c.l.b16 %v351
    %v511 = vunpack.c.h.b16 %v351
    %v512 = vunpack.c.l.b16 %v352
    %v513 = vunpack.c.h.b16 %v352
    %v514 = vunpack.c.l.b16 %v353
    %v515 = vunpack.c.h.b16 %v353
    %v516 = vunpack.c.l.b16 %v354
    %v517 = vunpack.c.h.b16 %v354
    %v518 = vunpack.c.l.b16 %v355
    %v519 = vunpack.c.h.b16 %v355
    %v520 = vunpack.c.l.b16 %v356
    %v521 = vunpack.c.h.b16 %v356
    %v522 = vunpack.c.l.b16 %v357
    %v523 = vunpack.c.h.b16 %v357
    %v524 = vunpack.c.l.b16 %v358
    %v525 = vunpack.c.h.b16 %v358
    %v526 = vunpack.c.l.b16 %v359
    %v527 = vunpack.c.h.b16 %v359
    %v528 = vunpack.c.l.b16 %v360
    %v529 = vunpack.c.h.b16 %v360
    %v530 = vunpack.c.l.b16 %v361
    %v531 = vunpack.c.h.b16 %v361
    %v532 = vunpack.c.l.b16 %v362
    %v533 = vunpack.c.h.b16 %v362
    %v534 = vunpack.c.l.b16 %v363
    %v535 = vunpack.c.h.b16 %v363
    %v536 = vunpack.c.l.b16 %v364
    %v537 = vunpack.c.h.b16 %v364
    %v538 = vunpack.c.l.b16 %v365
    %v539 = vunpack.c.h.b16 %v365
    %v540 = vunpack.c.l.b16 %v366
    %v541 = vunpack.c.h.b16 %v366
    %v542 = vunpack.c.l.b16 %v367
    %v543 = vunpack.c.h.b16 %v367
    %v544 = vunpack.c.l.b16 %v368
    %v545 = vunpack.c.h.b16 %v368
    %v546 = vunpack.c.l.b16 %v369
    %v547 = vunpack.c.h.b16 %v369
    %v548 = vunpack.c.l.b16 %v370
    %v549 = vunpack.c.h.b16 %v370
    %v550 = vunpack.c.l.b16 %v371
    %v551 = vunpack.c.h.b16 %v371
    %v552 = vunpack.c.l.b16 %v372
    %v553 = vunpack.c.h.b16 %v372
    %v554 = vunpack.c.l.b16 %v373
    %v555 = vunpack.c.h.b16 %v373
    %v556 = vunpack.c.l.b16 %v374
    %v557 = vunpack.c.h.b16 %v374
    %v558 = vunpack.c.l.b16 %v375
    %v559 = vunpack.c.h.b16 %v375
    %v560 = vunpack.c.l.b16 %v376
    %v561 = vunpack.c.h.b16 %v376
    %v562 = vunpack.c.l.b16 %v377
    %v563 = vunpack.c.h.b16 %v377
    %v564 = vunpack.c.l.b16 %v378
    %v565 = vunpack.c.h.b16 %v378
    %v566 = vunpack.c.l.b16 %v379
    %v567 = vunpack.c.h.b16 %v379
    %v568 = vunpack.c.l.b16 %v380
    %v569 = vunpack.c.h.b16 %v380
    %v570 = vunpack.c.l.b16 %v381
    %v571 = vunpack.c.h.b16 %v381
    %v572 = vunpack.c.l.b16 %v382
    %v573 = vunpack.c.h.b16 %v382
    %v574 = vunpack.c.l.b16 %v383
    %v575 = vunpack.c.h.b16 %v383
    %v576 = vunpack.c.l.b16 %v384
    %v577 = vunpack.c.h.b16 %v384
    %v578 = vunpack.c.l.b16 %v385
    %v579 = vunpack.c.h.b16 %v385
    %v580 = vunpack.c.l.b16 %v386
    %v581 = vunpack.c.h.b16 %v386
    %v582 = vunpack.c.l.b16 %v387
    %v583 = vunpack.c.h.b16 %v387
    %v584 = vunpack.c.l.b16 %v388
    %v585 = vunpack.c.h.b16 %v388
    %v586 = vunpack.c.l.b16 %v389
    %v587 = vunpack.c.h.b16 %v389
    %v588 = vunpack.c.l.b16 %v390
    %v589 = vunpack.c.h.b16 %v390
    %v590 = vunpack.c.l.b16 %v391
    %v591 = vunpack.c.h.b16 %v391
    %v592 = vunpack.c.l.b16 %v392
    %v593 = vunpack.c.h.b16 %v392
    %v594 = vunpack.c.l.b16 %v393
    %v595 = vunpack.c.h.b16 %v393
    %v596 = vunpack.c.l.b16 %v394
    %v597 = vunpack.c.h.b16 %v394
    %v598 = vunpack.c.l.b16 %v395
    %v599 = vunpack.c.h.b16 %v395
    %v600 = vunpack.c.l.b16 %v396
    %v601 = vunpack.c.h.b16 %v396
    %v602 = vunpack.c.l.b16 %v397
    %v603 = vunpack.c.h.b16 %v397
    %v604 = vunpack.c.l.b16 %v398
    %v605 = vunpack.c.h.b16 %v398
    %v606 = vunpack.c.l.b16 %v399
    %v607 = vunpack.c.h.b16 %v399
    %v608 = vunpack.c.l.b16 %v400
    %v609 = vunpack.c.h.b16 %v400
    %v610 = vunpack.c.l.b16 %v401
    %v611 = vunpack.c.h.b16 %v401
    %v612 = vunpack.c.l.b16 %v402
    %v613 = vunpack.c.h.b16 %v402
    %v614 = vunpack.c.l.b16 %v403
    %v615 = vunpack.c.h.b16 %v403
    %v616 = vunpack.c.l.b16 %v404
    %v617 = vunpack.c.h.b16 %v404
    %v618 = vunpack.c.l.b16 %v405
    %v619 = vunpack.c.h.b16 %v405
    %v620 = vpack.c.b16 %v496, %v492
    %v621 = vpack.c.b16 %v497, %v493
    %v622 = vpack.c.b16 %v498, %v494
    %v623 = vpack.c.b16 %v499, %v495
    %v624 = vpack.c.b16 %v504, %v500
    %v625 = vpack.c.b16 %v505, %v501
    %v626 = vpack.c.b16 %v506, %v502
    %v627 = vpack.c.b16 %v507, %v503
    %v628 = vpack.c.b16 %v512, %v508
    %v629 = vpack.c.b16 %v513, %v509
    %v630 = vpack.c.b16 %v514, %v510
    %v631 = vpack.c.b16 %v515, %v511
    %v632 = vpack.c.b16 %v520, %v516
    %v633 = vpack.c.b16 %v521, %v517
    %v634 = vpack.c.b16 %v522, %v518
    %v635 = vpack.c.b16 %v523, %v519
    %v636 = vpack.c.b16 %v528, %v524
    %v637 = vpack.c.b16 %v529, %v525
    %v638 = vpack.c.b16 %v530, %v526
    %v639 = vpack.c.b16 %v531, %v527
    %v640 = vpack.c.b16 %v536, %v532
    %v641 = vpack.c.b16 %v537, %v533
    %v642 = vpack.c.b16 %v538, %v534
    %v643 = vpack.c.b16 %v539, %v535
    %v644 = vpack.c.b16 %v544, %v540
    %v645 = vpack.c.b16 %v545, %v541
    %v646 = vpack.c.b16 %v546, %v542
    %v647 = vpack.c.b16 %v547, %v543
    %v648 = vpack.c.b16 %v552, %v548
    %v649 = vpack.c.b16 %v553, %v549
    %v650 = vpack.c.b16 %v554, %v550
    %v651 = vpack.c.b16 %v555, %v551
    %v652 = vpack.c.b16 %v560, %v556
    %v653 = vpack.c.b16 %v561, %v557
    %v654 = vpack.c.b16 %v562, %v558
    %v655 = vpack.c.b16 %v563, %v559
    %v656 = vpack.c.b16 %v568, %v564
    %v657 = vpack.c.b16 %v569, %v565
    %v658 = vpack.c.b16 %v570, %v566
    %v659 = vpack.c.b16 %v571, %v567
    %v660 = vpack.c.b16 %v576, %v572
    %v661 = vpack.c.b16 %v577, %v573
    %v662 = vpack.c.b16 %v578, %v574
    %v663 = vpack.c.b16 %v579, %v575
    %v664 = vpack.c.b16 %v584, %v580
    %v665 = vpack.c.b16 %v585, %v581
    %v666 = vpack.c.b16 %v586, %v582
    %v667 = vpack.c.b16 %v587, %v583
    %v668 = vpack.c.b16 %v592, %v588
    %v669 = vpack.c.b16 %v593, %v589
    %v670 = vpack.c.b16 %v594, %v590
    %v671 = vpack.c.b16 %v595, %v591
    %v672 = vpack.c.b16 %v600, %v596
    %v673 = vpack.c.b16 %v601, %v597
    %v674 = vpack.c.b16 %v602, %v598
    %v675 = vpack.c.b16 %v603, %v599
    %v676 = vpack.c.b16 %v608, %v604
    %v677 = vpack.c.b16 %v609, %v605
    %v678 = vpack.c.b16 %v610, %v606
    %v679 = vpack.c.b16 %v611, %v607
    %v680 = vpack.c.b16 %v616, %v612
    %v681 = vpack.c.b16 %v617, %v613
    %v682 = vpack.c.b16 %v618, %v614
    %v683 = vpack.c.b16 %v619, %v615
    %748 = vmatprep.subr.bf16.mxu0 %v621
    %749 = vmatpush1.bf16.msra.mxu0 %v620
    %750 = vmatprep.subr.bf16.mxu0 %v625
    %751 = vmatpush1.bf16.msra.mxu0 %v624
    %752 = vmatprep.subr.bf16.mxu0 %v629
    %753 = vmatpush1.bf16.msra.mxu0 %v628
    %754 = vmatprep.subr.bf16.mxu0 %v633
    %755 = vmatpush1.bf16.msra.mxu0 %v632
    %756 = vmatprep.subr.bf16.mxu0 %v637
    %757 = vmatpush1.bf16.msra.mxu0 %v636
    %758 = vmatprep.subr.bf16.mxu0 %v641
    %759 = vmatpush1.bf16.msra.mxu0 %v640
    %760 = vmatprep.subr.bf16.mxu0 %v645
    %761 = vmatpush1.bf16.msra.mxu0 %v644
    %762 = vmatprep.subr.bf16.mxu0 %v649
    %763 = vmatpush1.bf16.msra.mxu0 %v648
    %764 = vmatprep.subr.bf16.mxu0 %v653
    %765 = vmatpush1.bf16.msra.mxu0 %v652
    %766 = vmatprep.subr.bf16.mxu0 %v657
    %767 = vmatpush1.bf16.msra.mxu0 %v656
    %768 = vmatprep.subr.bf16.mxu0 %v661
    %769 = vmatpush1.bf16.msra.mxu0 %v660
    %770 = vmatprep.subr.bf16.mxu0 %v665
    %771 = vmatpush1.bf16.msra.mxu0 %v664
    %772 = vmatprep.subr.bf16.mxu0 %v669
    %773 = vmatpush1.bf16.msra.mxu0 %v668
    %774 = vmatprep.subr.bf16.mxu0 %v673
    %775 = vmatpush1.bf16.msra.mxu0 %v672
    %776 = vmatprep.subr.bf16.mxu0 %v677
    %777 = vmatpush1.bf16.msra.mxu0 %v676
    %778 = vmatprep.subr.bf16.mxu0 %v681
    %779 = vmatpush1.bf16.msra.mxu0 %v680
    %780 = vmatprep.mubr.bf16.mxu0 %v339
    %781 = vmatmul.mubr.bf16.gmra.mrb[0].mxu0 %v338
    %v782 = vpop.f32.mrb[0].mxu0
    %v783 = vadd.f32 %v411, %v782
    %v784 = vpop.f32.mrb[0].mxu0
    %v785 = vadd.f32 %v415, %v784
    %v786 = vpop.f32.mrb[0].mxu0
    %v787 = vadd.f32 %v411, %v786
    %v788 = vpop.f32.mrb[0].mxu0
    %v789 = vadd.f32 %v415, %v788
    %790 = vmatprep.mubr.bf16.mxu0 %v341
    %791 = vmatmul.mubr.bf16.gmra.mrb[0].mxu0 %v340
    %v792 = vpop.f32.mrb[0].mxu0
    %v793 = vadd.f32 %v411, %v792
    %v794 = vpop.f32.mrb[0].mxu0
    %v795 = vadd.f32 %v415, %v794
    %v796 = vpop.f32.mrb[0].mxu0
    %v797 = vadd.f32 %v411, %v796
    %v798 = vpop.f32.mrb[0].mxu0
    %v799 = vadd.f32 %v415, %v798
    %800 = vdwg.mxu0
    %801 = vmatprep.subr.bf16.mxu0 %v623
    %802 = vmatpush1.bf16.msra.mxu0 %v622
    %803 = vmatprep.subr.bf16.mxu0 %v627
    %804 = vmatpush1.bf16.msra.mxu0 %v626
    %805 = vmatprep.subr.bf16.mxu0 %v631
    %806 = vmatpush1.bf16.msra.mxu0 %v630
    %807 = vmatprep.subr.bf16.mxu0 %v635
    %808 = vmatpush1.bf16.msra.mxu0 %v634
    %809 = vmatprep.subr.bf16.mxu0 %v639
    %810 = vmatpush1.bf16.msra.mxu0 %v638
    %811 = vmatprep.subr.bf16.mxu0 %v643
    %812 = vmatpush1.bf16.msra.mxu0 %v642
    %813 = vmatprep.subr.bf16.mxu0 %v647
    %814 = vmatpush1.bf16.msra.mxu0 %v646
    %815 = vmatprep.subr.bf16.mxu0 %v651
    %816 = vmatpush1.bf16.msra.mxu0 %v650
    %817 = vmatprep.subr.bf16.mxu0 %v655
    %818 = vmatpush1.bf16.msra.mxu0 %v654
    %819 = vmatprep.subr.bf16.mxu0 %v659
    %820 = vmatpush1.bf16.msra.mxu0 %v658
    %821 = vmatprep.subr.bf16.mxu0 %v663
    %822 = vmatpush1.bf16.msra.mxu0 %v662
    %823 = vmatprep.subr.bf16.mxu0 %v667
    %824 = vmatpush1.bf16.msra.mxu0 %v666
    %825 = vmatprep.subr.bf16.mxu0 %v671
    %826 = vmatpush1.bf16.msra.mxu0 %v670
    %827 = vmatprep.subr.bf16.mxu0 %v675
    %828 = vmatpush1.bf16.msra.mxu0 %v674
    %829 = vmatprep.subr.bf16.mxu0 %v679
    %830 = vmatpush1.bf16.msra.mxu0 %v678
    %831 = vmatprep.subr.bf16.mxu0 %v683
    %832 = vmatpush1.bf16.msra.mxu0 %v682
    %833 = vmatprep.mubr.bf16.mxu0 %v339
    %834 = vmatmul.mubr.bf16.gmra.mrb[0].mxu0 %v338
    %v835 = vpop.f32.mrb[0].mxu0
    %v836 = vadd.f32 %v419, %v835
    %v837 = vpop.f32.mrb[0].mxu0
    %v838 = vadd.f32 %v423, %v837
    %v839 = vpop.f32.mrb[0].mxu0
    %v840 = vadd.f32 %v419, %v839
    %v841 = vpop.f32.mrb[0].mxu0
    %v842 = vadd.f32 %v423, %v841
    %843 = vmatprep.mubr.bf16.mxu0 %v341
    %844 = vmatmul.mubr.bf16.gmra.mrb[0].mxu0 %v340
    %v845 = vpop.f32.mrb[0].mxu0
    %v846 = vadd.f32 %v419, %v845
    %v847 = vpop.f32.mrb[0].mxu0
    %v848 = vadd.f32 %v423, %v847
    %v849 = vpop.f32.mrb[0].mxu0
    %v850 = vadd.f32 %v419, %v849
    %v851 = vpop.f32.mrb[0].mxu0
    %v852 = vadd.f32 %v423, %v851
    %853 = vdwg.mxu0
    %v854 = vmax.f32 %v783, 0.0
    %v855 = vmax.f32 %v785, 0.0
    %v856 = vmax.f32 %v836, 0.0
    %v857 = vmax.f32 %v838, 0.0
    %v858 = vmax.f32 %v787, 0.0
    %v859 = vmax.f32 %v789, 0.0
    %v860 = vmax.f32 %v840, 0.0
    %v861 = vmax.f32 %v842, 0.0
    %v862 = vmax.f32 %v793, 0.0
    %v863 = vmax.f32 %v795, 0.0
    %v864 = vmax.f32 %v846, 0.0
    %v865 = vmax.f32 %v848, 0.0
    %v866 = vmax.f32 %v797, 0.0
    %v867 = vmax.f32 %v799, 0.0
    %v868 = vmax.f32 %v850, 0.0
    %v869 = vmax.f32 %v852, 0.0
    %v870 = vpack.c.bf16 %v858, %v854
    %v871 = vpack.c.bf16 %v859, %v855
    %v872 = vpack.c.bf16 %v860, %v856
    %v873 = vpack.c.bf16 %v861, %v857
    %v874 = vpack.c.bf16 %v866, %v862
    %v875 = vpack.c.bf16 %v867, %v863
    %v876 = vpack.c.bf16 %v868, %v864
    %v877 = vpack.c.bf16 %v869, %v865
    %v878 = vld [vmem:[%s6] sm:$0xff]
    %v879 = vld [vmem:[%s6 + $0x8] sm:$0xff]
    %v880 = vld [vmem:[%s6 + $0x10] sm:$0xff]
    %v881 = vld [vmem:[%s6 + $0x18] sm:$0xff]
    %v882 = vld [vmem:[%s6 + $0x20] sm:$0xff]
    %v883 = vld [vmem:[%s6 + $0x28] sm:$0xff]
    %v884 = vld [vmem:[%s6 + $0x30] sm:$0xff]
    %v885 = vld [vmem:[%s6 + $0x38] sm:$0xff]
    %v886 = vld [vmem:[%s6 + $0x40] sm:$0xff]
    %v887 = vld [vmem:[%s6 + $0x48] sm:$0xff]
    %v888 = vld [vmem:[%s6 + $0x50] sm:$0xff]
    %v889 = vld [vmem:[%s6 + $0x58] sm:$0xff]
    %v890 = vld [vmem:[%s6 + $0x60] sm:$0xff]
    %v891 = vld [vmem:[%s6 + $0x68] sm:$0xff]
    %v892 = vld [vmem:[%s6 + $0x70] sm:$0xff]
    %v893 = vld [vmem:[%s6 + $0x78] sm:$0xff]
    %v894 = vld [vmem:[%s6 + $0x80] sm:$0xff]
    %v895 = vld [vmem:[%s6 + $0x88] sm:$0xff]
    %v896 = vld [vmem:[%s6 + $0x90] sm:$0xff]
    %v897 = vld [vmem:[%s6 + $0x98] sm:$0xff]
    %v898 = vld [vmem:[%s6 + $0xa0] sm:$0xff]
    %v899 = vld [vmem:[%s6 + $0xa8] sm:$0xff]
    %v900 = vld [vmem:[%s6 + $0xb0] sm:$0xff]
    %v901 = vld [vmem:[%s6 + $0xb8] sm:$0xff]
    %v902 = vld [vmem:[%s6 + $0xc0] sm:$0xff]
    %v903 = vld [vmem:[%s6 + $0xc8] sm:$0xff]
    %v904 = vld [vmem:[%s6 + $0xd0] sm:$0xff]
    %v905 = vld [vmem:[%s6 + $0xd8] sm:$0xff]
    %v906 = vld [vmem:[%s6 + $0xe0] sm:$0xff]
    %v907 = vld [vmem:[%s6 + $0xe8] sm:$0xff]
    %v908 = vld [vmem:[%s6 + $0xf0] sm:$0xff]
    %v909 = vld [vmem:[%s6 + $0xf8] sm:$0xff]
    %v910 = vld [vmem:[%s6 + $0x100] sm:$0xff]
    %v911 = vld [vmem:[%s6 + $0x108] sm:$0xff]
    %v912 = vld [vmem:[%s6 + $0x110] sm:$0xff]
    %v913 = vld [vmem:[%s6 + $0x118] sm:$0xff]
    %v914 = vld [vmem:[%s6 + $0x120] sm:$0xff]
    %v915 = vld [vmem:[%s6 + $0x128] sm:$0xff]
    %v916 = vld [vmem:[%s6 + $0x130] sm:$0xff]
    %v917 = vld [vmem:[%s6 + $0x138] sm:$0xff]
    %v918 = vld [vmem:[%s6 + $0x140] sm:$0xff]
    %v919 = vld [vmem:[%s6 + $0x148] sm:$0xff]
    %v920 = vld [vmem:[%s6 + $0x150] sm:$0xff]
    %v921 = vld [vmem:[%s6 + $0x158] sm:$0xff]
    %v922 = vld [vmem:[%s6 + $0x160] sm:$0xff]
    %v923 = vld [vmem:[%s6 + $0x168] sm:$0xff]
    %v924 = vld [vmem:[%s6 + $0x170] sm:$0xff]
    %v925 = vld [vmem:[%s6 + $0x178] sm:$0xff]
    %v926 = vld [vmem:[%s6 + $0x180] sm:$0xff]
    %v927 = vld [vmem:[%s6 + $0x188] sm:$0xff]
    %v928 = vld [vmem:[%s6 + $0x190] sm:$0xff]
    %v929 = vld [vmem:[%s6 + $0x198] sm:$0xff]
    %v930 = vld [vmem:[%s6 + $0x1a0] sm:$0xff]
    %v931 = vld [vmem:[%s6 + $0x1a8] sm:$0xff]
    %v932 = vld [vmem:[%s6 + $0x1b0] sm:$0xff]
    %v933 = vld [vmem:[%s6 + $0x1b8] sm:$0xff]
    %v934 = vld [vmem:[%s6 + $0x1c0] sm:$0xff]
    %v935 = vld [vmem:[%s6 + $0x1c8] sm:$0xff]
    %v936 = vld [vmem:[%s6 + $0x1d0] sm:$0xff]
    %v937 = vld [vmem:[%s6 + $0x1d8] sm:$0xff]
    %v938 = vld [vmem:[%s6 + $0x1e0] sm:$0xff]
    %v939 = vld [vmem:[%s6 + $0x1e8] sm:$0xff]
    %v940 = vld [vmem:[%s6 + $0x1f0] sm:$0xff]
    %v941 = vld [vmem:[%s6 + $0x1f8] sm:$0xff]
    %v1006 = vunpack.c.l.b16 %v878
    %v1007 = vunpack.c.h.b16 %v878
    %v1008 = vunpack.c.l.b16 %v879
    %v1009 = vunpack.c.h.b16 %v879
    %v1010 = vunpack.c.l.b16 %v880
    %v1011 = vunpack.c.h.b16 %v880
    %v1012 = vunpack.c.l.b16 %v881
    %v1013 = vunpack.c.h.b16 %v881
    %v1014 = vunpack.c.l.b16 %v882
    %v1015 = vunpack.c.h.b16 %v882
    %v1016 = vunpack.c.l.b16 %v883
    %v1017 = vunpack.c.h.b16 %v883
    %v1018 = vunpack.c.l.b16 %v884
    %v1019 = vunpack.c.h.b16 %v884
    %v1020 = vunpack.c.l.b16 %v885
    %v1021 = vunpack.c.h.b16 %v885
    %v1022 = vunpack.c.l.b16 %v886
    %v1023 = vunpack.c.h.b16 %v886
    %v1024 = vunpack.c.l.b16 %v887
    %v1025 = vunpack.c.h.b16 %v887
    %v1026 = vunpack.c.l.b16 %v888
    %v1027 = vunpack.c.h.b16 %v888
    %v1028 = vunpack.c.l.b16 %v889
    %v1029 = vunpack.c.h.b16 %v889
    %v1030 = vunpack.c.l.b16 %v890
    %v1031 = vunpack.c.h.b16 %v890
    %v1032 = vunpack.c.l.b16 %v891
    %v1033 = vunpack.c.h.b16 %v891
    %v1034 = vunpack.c.l.b16 %v892
    %v1035 = vunpack.c.h.b16 %v892
    %v1036 = vunpack.c.l.b16 %v893
    %v1037 = vunpack.c.h.b16 %v893
    %v1038 = vunpack.c.l.b16 %v894
    %v1039 = vunpack.c.h.b16 %v894
    %v1040 = vunpack.c.l.b16 %v895
    %v1041 = vunpack.c.h.b16 %v895
    %v1042 = vunpack.c.l.b16 %v896
    %v1043 = vunpack.c.h.b16 %v896
    %v1044 = vunpack.c.l.b16 %v897
    %v1045 = vunpack.c.h.b16 %v897
    %v1046 = vunpack.c.l.b16 %v898
    %v1047 = vunpack.c.h.b16 %v898
    %v1048 = vunpack.c.l.b16 %v899
    %v1049 = vunpack.c.h.b16 %v899
    %v1050 = vunpack.c.l.b16 %v900
    %v1051 = vunpack.c.h.b16 %v900
    %v1052 = vunpack.c.l.b16 %v901
    %v1053 = vunpack.c.h.b16 %v901
    %v1054 = vunpack.c.l.b16 %v902
    %v1055 = vunpack.c.h.b16 %v902
    %v1056 = vunpack.c.l.b16 %v903
    %v1057 = vunpack.c.h.b16 %v903
    %v1058 = vunpack.c.l.b16 %v904
    %v1059 = vunpack.c.h.b16 %v904
    %v1060 = vunpack.c.l.b16 %v905
    %v1061 = vunpack.c.h.b16 %v905
    %v1062 = vunpack.c.l.b16 %v906
    %v1063 = vunpack.c.h.b16 %v906
    %v1064 = vunpack.c.l.b16 %v907
    %v1065 = vunpack.c.h.b16 %v907
    %v1066 = vunpack.c.l.b16 %v908
    %v1067 = vunpack.c.h.b16 %v908
    %v1068 = vunpack.c.l.b16 %v909
    %v1069 = vunpack.c.h.b16 %v909
    %v1070 = vunpack.c.l.b16 %v910
    %v1071 = vunpack.c.h.b16 %v910
    %v1072 = vunpack.c.l.b16 %v911
    %v1073 = vunpack.c.h.b16 %v911
    %v1074 = vunpack.c.l.b16 %v912
    %v1075 = vunpack.c.h.b16 %v912
    %v1076 = vunpack.c.l.b16 %v913
    %v1077 = vunpack.c.h.b16 %v913
    %v1078 = vunpack.c.l.b16 %v914
    %v1079 = vunpack.c.h.b16 %v914
    %v1080 = vunpack.c.l.b16 %v915
    %v1081 = vunpack.c.h.b16 %v915
    %v1082 = vunpack.c.l.b16 %v916
    %v1083 = vunpack.c.h.b16 %v916
    %v1084 = vunpack.c.l.b16 %v917
    %v1085 = vunpack.c.h.b16 %v917
    %v1086 = vunpack.c.l.b16 %v918
    %v1087 = vunpack.c.h.b16 %v918
    %v1088 = vunpack.c.l.b16 %v919
    %v1089 = vunpack.c.h.b16 %v919
    %v1090 = vunpack.c.l.b16 %v920
    %v1091 = vunpack.c.h.b16 %v920
    %v1092 = vunpack.c.l.b16 %v921
    %v1093 = vunpack.c.h.b16 %v921
    %v1094 = vunpack.c.l.b16 %v922
    %v1095 = vunpack.c.h.b16 %v922
    %v1096 = vunpack.c.l.b16 %v923
    %v1097 = vunpack.c.h.b16 %v923
    %v1098 = vunpack.c.l.b16 %v924
    %v1099 = vunpack.c.h.b16 %v924
    %v1100 = vunpack.c.l.b16 %v925
    %v1101 = vunpack.c.h.b16 %v925
    %v1102 = vunpack.c.l.b16 %v926
    %v1103 = vunpack.c.h.b16 %v926
    %v1104 = vunpack.c.l.b16 %v927
    %v1105 = vunpack.c.h.b16 %v927
    %v1106 = vunpack.c.l.b16 %v928
    %v1107 = vunpack.c.h.b16 %v928
    %v1108 = vunpack.c.l.b16 %v929
    %v1109 = vunpack.c.h.b16 %v929
    %v1110 = vunpack.c.l.b16 %v930
    %v1111 = vunpack.c.h.b16 %v930
    %v1112 = vunpack.c.l.b16 %v931
    %v1113 = vunpack.c.h.b16 %v931
    %v1114 = vunpack.c.l.b16 %v932
    %v1115 = vunpack.c.h.b16 %v932
    %v1116 = vunpack.c.l.b16 %v933
    %v1117 = vunpack.c.h.b16 %v933
    %v1118 = vunpack.c.l.b16 %v934
    %v1119 = vunpack.c.h.b16 %v934
    %v1120 = vunpack.c.l.b16 %v935
    %v1121 = vunpack.c.h.b16 %v935
    %v1122 = vunpack.c.l.b16 %v936
    %v1123 = vunpack.c.h.b16 %v936
    %v1124 = vunpack.c.l.b16 %v937
    %v1125 = vunpack.c.h.b16 %v937
    %v1126 = vunpack.c.l.b16 %v938
    %v1127 = vunpack.c.h.b16 %v938
    %v1128 = vunpack.c.l.b16 %v939
    %v1129 = vunpack.c.h.b16 %v939
    %v1130 = vunpack.c.l.b16 %v940
    %v1131 = vunpack.c.h.b16 %v940
    %v1132 = vunpack.c.l.b16 %v941
    %v1133 = vunpack.c.h.b16 %v941
    %v1134 = vpack.c.b16 %v1008, %v1006
    %v1135 = vpack.c.b16 %v1009, %v1007
    %v1136 = vpack.c.b16 %v1012, %v1010
    %v1137 = vpack.c.b16 %v1013, %v1011
    %v1138 = vpack.c.b16 %v1016, %v1014
    %v1139 = vpack.c.b16 %v1017, %v1015
    %v1140 = vpack.c.b16 %v1020, %v1018
    %v1141 = vpack.c.b16 %v1021, %v1019
    %v1142 = vpack.c.b16 %v1024, %v1022
    %v1143 = vpack.c.b16 %v1025, %v1023
    %v1144 = vpack.c.b16 %v1028, %v1026
    %v1145 = vpack.c.b16 %v1029, %v1027
    %v1146 = vpack.c.b16 %v1032, %v1030
    %v1147 = vpack.c.b16 %v1033, %v1031
    %v1148 = vpack.c.b16 %v1036, %v1034
    %v1149 = vpack.c.b16 %v1037, %v1035
    %v1150 = vpack.c.b16 %v1040, %v1038
    %v1151 = vpack.c.b16 %v1041, %v1039
    %v1152 = vpack.c.b16 %v1044, %v1042
    %v1153 = vpack.c.b16 %v1045, %v1043
    %v1154 = vpack.c.b16 %v1048, %v1046
    %v1155 = vpack.c.b16 %v1049, %v1047
    %v1156 = vpack.c.b16 %v1052, %v1050
    %v1157 = vpack.c.b16 %v1053, %v1051
    %v1158 = vpack.c.b16 %v1056, %v1054
    %v1159 = vpack.c.b16 %v1057, %v1055
    %v1160 = vpack.c.b16 %v1060, %v1058
    %v1161 = vpack.c.b16 %v1061, %v1059
    %v1162 = vpack.c.b16 %v1064, %v1062
    %v1163 = vpack.c.b16 %v1065, %v1063
    %v1164 = vpack.c.b16 %v1068, %v1066
    %v1165 = vpack.c.b16 %v1069, %v1067
    %v1166 = vpack.c.b16 %v1072, %v1070
    %v1167 = vpack.c.b16 %v1073, %v1071
    %v1168 = vpack.c.b16 %v1076, %v1074
    %v1169 = vpack.c.b16 %v1077, %v1075
    %v1170 = vpack.c.b16 %v1080, %v1078
    %v1171 = vpack.c.b16 %v1081, %v1079
    %v1172 = vpack.c.b16 %v1084, %v1082
    %v1173 = vpack.c.b16 %v1085, %v1083
    %v1174 = vpack.c.b16 %v1088, %v1086
    %v1175 = vpack.c.b16 %v1089, %v1087
    %v1176 = vpack.c.b16 %v1092, %v1090
    %v1177 = vpack.c.b16 %v1093, %v1091
    %v1178 = vpack.c.b16 %v1096, %v1094
    %v1179 = vpack.c.b16 %v1097, %v1095
    %v1180 = vpack.c.b16 %v1100, %v1098
    %v1181 = vpack.c.b16 %v1101, %v1099
    %v1182 = vpack.c.b16 %v1104, %v1102
    %v1183 = vpack.c.b16 %v1105, %v1103
    %v1184 = vpack.c.b16 %v1108, %v1106
    %v1185 = vpack.c.b16 %v1109, %v1107
    %v1186 = vpack.c.b16 %v1112, %v1110
    %v1187 = vpack.c.b16 %v1113, %v1111
    %v1188 = vpack.c.b16 %v1116, %v1114
    %v1189 = vpack.c.b16 %v1117, %v1115
    %v1190 = vpack.c.b16 %v1120, %v1118
    %v1191 = vpack.c.b16 %v1121, %v1119
    %v1192 = vpack.c.b16 %v1124, %v1122
    %v1193 = vpack.c.b16 %v1125, %v1123
    %v1194 = vpack.c.b16 %v1128, %v1126
    %v1195 = vpack.c.b16 %v1129, %v1127
    %v1196 = vpack.c.b16 %v1132, %v1130
    %v1197 = vpack.c.b16 %v1133, %v1131
    %1262 = vmatprep.subr.bf16.mxu0 %v1135
    %1263 = vmatpush1.bf16.msra.mxu0 %v1134
    %1264 = vmatprep.subr.bf16.mxu0 %v1137
    %1265 = vmatpush1.bf16.msra.mxu0 %v1136
    %1266 = vmatprep.subr.bf16.mxu0 %v1139
    %1267 = vmatpush1.bf16.msra.mxu0 %v1138
    %1268 = vmatprep.subr.bf16.mxu0 %v1141
    %1269 = vmatpush1.bf16.msra.mxu0 %v1140
    %1270 = vmatprep.subr.bf16.mxu0 %v1143
    %1271 = vmatpush1.bf16.msra.mxu0 %v1142
    %1272 = vmatprep.subr.bf16.mxu0 %v1145
    %1273 = vmatpush1.bf16.msra.mxu0 %v1144
    %1274 = vmatprep.subr.bf16.mxu0 %v1147
    %1275 = vmatpush1.bf16.msra.mxu0 %v1146
    %1276 = vmatprep.subr.bf16.mxu0 %v1149
    %1277 = vmatpush1.bf16.msra.mxu0 %v1148
    %1278 = vmatprep.subr.bf16.mxu0 %v1151
    %1279 = vmatpush1.bf16.msra.mxu0 %v1150
    %1280 = vmatprep.subr.bf16.mxu0 %v1153
    %1281 = vmatpush1.bf16.msra.mxu0 %v1152
    %1282 = vmatprep.subr.bf16.mxu0 %v1155
    %1283 = vmatpush1.bf16.msra.mxu0 %v1154
    %1284 = vmatprep.subr.bf16.mxu0 %v1157
    %1285 = vmatpush1.bf16.msra.mxu0 %v1156
    %1286 = vmatprep.subr.bf16.mxu0 %v1159
    %1287 = vmatpush1.bf16.msra.mxu0 %v1158
    %1288 = vmatprep.subr.bf16.mxu0 %v1161
    %1289 = vmatpush1.bf16.msra.mxu0 %v1160
    %1290 = vmatprep.subr.bf16.mxu0 %v1163
    %1291 = vmatpush1.bf16.msra.mxu0 %v1162
    %1292 = vmatprep.subr.bf16.mxu0 %v1165
    %1293 = vmatpush1.bf16.msra.mxu0 %v1164
    %1294 = vmatprep.mubr.bf16.mxu0 %v871
    %1295 = vmatmul.mubr.bf16.gmra.mrb[0].mxu0 %v870
    %v1296 = vpop.f32.mrb[0].mxu0
    %v1297 = vadd.f32 0.0, %v1296
    %v1298 = vpop.f32.mrb[0].mxu0
    %v1299 = vadd.f32 0.0, %v1298
    %v1300 = vpop.f32.mrb[0].mxu0
    %v1301 = vadd.f32 0.0, %v1300
    %v1302 = vpop.f32.mrb[0].mxu0
    %v1303 = vadd.f32 0.0, %v1302
    %1304 = vmatprep.mubr.bf16.mxu0 %v875
    %1305 = vmatmul.mubr.bf16.gmra.mrb[0].mxu0 %v874
    %v1306 = vpop.f32.mrb[0].mxu0
    %v1307 = vadd.f32 0.0, %v1306
    %v1308 = vpop.f32.mrb[0].mxu0
    %v1309 = vadd.f32 0.0, %v1308
    %v1310 = vpop.f32.mrb[0].mxu0
    %v1311 = vadd.f32 0.0, %v1310
    %v1312 = vpop.f32.mrb[0].mxu0
    %v1313 = vadd.f32 0.0, %v1312
    %1314 = vdwg.mxu0
    %1315 = vmatprep.subr.bf16.mxu0 %v1167
    %1316 = vmatpush1.bf16.msra.mxu0 %v1166
    %1317 = vmatprep.subr.bf16.mxu0 %v1169
    %1318 = vmatpush1.bf16.msra.mxu0 %v1168
    %1319 = vmatprep.subr.bf16.mxu0 %v1171
    %1320 = vmatpush1.bf16.msra.mxu0 %v1170
    %1321 = vmatprep.subr.bf16.mxu0 %v1173
    %1322 = vmatpush1.bf16.msra.mxu0 %v1172
    %1323 = vmatprep.subr.bf16.mxu0 %v1175
    %1324 = vmatpush1.bf16.msra.mxu0 %v1174
    %1325 = vmatprep.subr.bf16.mxu0 %v1177
    %1326 = vmatpush1.bf16.msra.mxu0 %v1176
    %1327 = vmatprep.subr.bf16.mxu0 %v1179
    %1328 = vmatpush1.bf16.msra.mxu0 %v1178
    %1329 = vmatprep.subr.bf16.mxu0 %v1181
    %1330 = vmatpush1.bf16.msra.mxu0 %v1180
    %1331 = vmatprep.subr.bf16.mxu0 %v1183
    %1332 = vmatpush1.bf16.msra.mxu0 %v1182
    %1333 = vmatprep.subr.bf16.mxu0 %v1185
    %1334 = vmatpush1.bf16.msra.mxu0 %v1184
    %1335 = vmatprep.subr.bf16.mxu0 %v1187
    %1336 = vmatpush1.bf16.msra.mxu0 %v1186
    %1337 = vmatprep.subr.bf16.mxu0 %v1189
    %1338 = vmatpush1.bf16.msra.mxu0 %v1188
    %1339 = vmatprep.subr.bf16.mxu0 %v1191
    %1340 = vmatpush1.bf16.msra.mxu0 %v1190
    %1341 = vmatprep.subr.bf16.mxu0 %v1193
    %1342 = vmatpush1.bf16.msra.mxu0 %v1192
    %1343 = vmatprep.subr.bf16.mxu0 %v1195
    %1344 = vmatpush1.bf16.msra.mxu0 %v1194
    %1345 = vmatprep.subr.bf16.mxu0 %v1197
    %1346 = vmatpush1.bf16.msra.mxu0 %v1196
    %1347 = vmatprep.mubr.bf16.mxu0 %v873
    %1348 = vmatmul.mubr.bf16.gmra.mrb[0].mxu0 %v872
    %v1349 = vpop.f32.mrb[0].mxu0
    %v1350 = vadd.f32 %v1297, %v1349
    %v1351 = vpop.f32.mrb[0].mxu0
    %v1352 = vadd.f32 %v1299, %v1351
    %v1353 = vpop.f32.mrb[0].mxu0
    %v1354 = vadd.f32 %v1301, %v1353
    %v1355 = vpop.f32.mrb[0].mxu0
    %v1356 = vadd.f32 %v1303, %v1355
    %1357 = vmatprep.mubr.bf16.mxu0 %v877
    %1358 = vmatmul.mubr.bf16.gmra.mrb[0].mxu0 %v876
    %v1359 = vpop.f32.mrb[0].mxu0
    %v1360 = vadd.f32 %v1307, %v1359
    %v1361 = vpop.f32.mrb[0].mxu0
    %v1362 = vadd.f32 %v1309, %v1361
    %v1363 = vpop.f32.mrb[0].mxu0
    %v1364 = vadd.f32 %v1311, %v1363
    %v1365 = vpop.f32.mrb[0].mxu0
    %v1366 = vadd.f32 %v1313, %v1365
    %1367 = vdwg.mxu0
    %v1368 = vadd.f32 %v330, %v1350
    %v1369 = vadd.f32 %v331, %v1352
    %v1370 = vadd.f32 %v332, %v1354
    %v1371 = vadd.f32 %v333, %v1356
    %v1372 = vadd.f32 %v334, %v1360
    %v1373 = vadd.f32 %v335, %v1362
    %v1374 = vadd.f32 %v336, %v1364
    %v1375 = vadd.f32 %v337, %v1366
    %v1376 = vld [vmem:[%s7] sm:$0x3]
    %v1378 = vlaneseq
    %v1379 = vshrl.u32 %v1378, 7
    %v1380 = vsub.s32 0, %v1379
    %v1381 = vrot.slane %v1376, %v1380
    %v1382 = vlaneseq
    %v1383 = vshrl.u32 %v1382, 7
    %v1384 = vsub.s32 1, %v1383
    %v1385 = vrot.slane %v1376, %v1384
    %v1388 = vadd.f32 %v1368, %v1381
    %v1389 = vadd.f32 %v1369, %v1385
    %v1390 = vadd.f32 %v1370, %v1381
    %v1391 = vadd.f32 %v1371, %v1385
    %v1392 = vadd.f32 %v1372, %v1381
    %v1393 = vadd.f32 %v1373, %v1385
    %v1394 = vadd.f32 %v1374, %v1381
    %v1395 = vadd.f32 %v1375, %v1385
    %1396 = vst [vmem:[#allocation2] sm:$0xff] %v1388
    %1397 = vst [vmem:[#allocation2 + $0x8] sm:$0xff] %v1389
    %1398 = vst [vmem:[#allocation2 + $0x10] sm:$0xff] %v1390
    %1399 = vst [vmem:[#allocation2 + $0x18] sm:$0xff] %v1391
    %1400 = vst [vmem:[#allocation2 + $0x20] sm:$0xff] %v1392
    %1401 = vst [vmem:[#allocation2 + $0x28] sm:$0xff] %v1393
    %1402 = vst [vmem:[#allocation2 + $0x30] sm:$0xff] %v1394
    %1403 = vst [vmem:[#allocation2 + $0x38] sm:$0xff] %v1395
    %v1404 = vpack.c.bf16 %v1390, %v1388
    %v1405 = vpack.c.bf16 %v1391, %v1389
    %v1406 = vpack.c.bf16 %v1394, %v1392
    %v1407 = vpack.c.bf16 %v1395, %v1393
    %v1412 = vunpack.c.l.b16 %v1404
    %v1413 = vunpack.c.l.b16 %v1405
    %v1414 = vunpack.c.h.b16 %v1404
    %v1415 = vunpack.c.h.b16 %v1405
    %v1416 = vunpack.c.l.b16 %v1406
    %v1417 = vunpack.c.l.b16 %v1407
    %v1418 = vunpack.c.h.b16 %v1406
    %v1419 = vunpack.c.h.b16 %v1407
    %v1420 = vpack.c.b16 %v1413, %v1412
    %v1421 = vpack.c.b16 %v1415, %v1414
    %v1422 = vpack.c.b16 %v1417, %v1416
    %v1423 = vpack.c.b16 %v1419, %v1418
    %1428 = vst [vmem:[#allocation4] sm:$0xff] %v1420
    %1429 = vst [vmem:[#allocation4 + $0x8] sm:$0xff] %v1421
    %1430 = vst [vmem:[#allocation4 + $0x10] sm:$0xff] %v1422
    %1431 = vst [vmem:[#allocation4 + $0x18] sm:$0xff] %v1423
    // Predicated region
    $region34: #{transformer_encoder.11} parent=1 // pred_check
      _
    $region35: #{transformer_encoder.11} parent=1 // pred_check_branch
      %1433 = sbr.rel (0) target = $region37
    $region36: #{transformer_encoder.11} parent=1 // pred_region
      %s1435 = ssub.s32 1024, 1024
      %1436 = vsyncadd [#allocation3], %s1435
      %s1437 = sshll.u32 [#allocation2], 4
      %s1438 = int_to_ptr.vmem [resolvable:$true] %s1437
      %1443 = dma.vmem_to_hbm [thread:$0]  %s1438, 1024, %s8, [#allocation3], 256, 256, 16
    $region37: #{transformer_encoder.11} parent=1 // pred_fallthru
      _
    // Predicated region
    $region38: #{transformer_encoder.11} parent=1 // pred_check
      _
    $region39: #{transformer_encoder.11} parent=1 // pred_check_branch
      %1445 = sbr.rel (0) target = $region41
    $region40: #{transformer_encoder.11} parent=1 // pred_region
      %s1447 = ssub.s32 512, 512
      %1448 = vsyncadd [#allocation5], %s1447
      %s1449 = sshll.u32 [#allocation4], 4
      %s1450 = int_to_ptr.vmem [resolvable:$true] %s1449
      %1455 = dma.vmem_to_hbm [thread:$0]  %s1450, 512, %s9, [#allocation5], 128, 128, 8
    $region41: #{transformer_encoder.11} parent=1 // pred_fallthru
      _
    // Predicated region
    $region42: #{transformer_encoder.11} parent=1 // pred_check
      _
    $region43: #{transformer_encoder.11} parent=1 // pred_check_branch
      %1457 = sbr.rel (0) target = $region45
    $region44: #{transformer_encoder.11} parent=1 // pred_region
      %1458 = dma.done [#allocation3], 1024
    $region45: #{transformer_encoder.11} parent=1 // pred_fallthru
      _
    // Predicated region
    $region46: #{transformer_encoder.11} parent=1 // pred_check
      _
    $region47: #{transformer_encoder.11} parent=1 // pred_check_branch
      %1460 = sbr.rel (0) target = $region49
    $region48: #{transformer_encoder.11} parent=1 // pred_region
      %1461 = dma.done [#allocation5], 512
    $region49: #{transformer_encoder.11} parent=1 // pred_fallthru
      _
    %1462 = vsyncpa [#allocation3], 1
    %1463 = vsyncpa [#allocation5], 1

</llo_original>
